<compile_context>
chip_gen: v7x
topology: tpu7x:2x2x1
jax: 0.10.0
libtpu: 0.0.40
codegen_flags: <defaults>
</compile_context>

<pallas_src>
import functools

import jax
import jax.numpy as jnp
from jax.experimental import pallas as pl
from jax.experimental.pallas import tpu as pltpu


_VMEM_LIMIT_BYTES = 32 * 1024 * 1024   # safe on v5e/v6e (128 MiB) and v7x (64 MiB)
_NEG_SLOPE = 0.01                      # LeakyReLU default slope
_EPS = 1e-5                            # InstanceNorm eps


def _compiler_params():
    return pltpu.CompilerParams(
        dimension_semantics=("parallel",),      # batch tiles shard across TCs (v7x)
        vmem_limit_bytes=_VMEM_LIMIT_BYTES)


# --------------------------------------------------------------------------
# Pallas kernels (lane-dense GEMM with fused epilogues)
# --------------------------------------------------------------------------

def _conv_bias_kernel(w_ref, col_ref, bias_ref, o_ref):
    # (R, Kp) @ (Kp, S) -> (R, S); spatial S on lanes => dense vst.
    acc = jnp.dot(w_ref[...], col_ref[...], preferred_element_type=jnp.float32)
    o_ref[...] = acc + bias_ref[...]


def _conv_in_lrelu_kernel(w_ref, col_ref, bias_ref, g_ref, b_ref, o_ref):
    # conv -> bias -> InstanceNorm (full spatial extent of one sample resident)
    # -> affine -> LeakyReLU, all before the single store.
    acc = jnp.dot(w_ref[...], col_ref[...], preferred_element_type=jnp.float32)
    acc = acc + bias_ref[...]
    mean = jnp.mean(acc, axis=-1, keepdims=True)
    xc = acc - mean
    var = jnp.mean(xc * xc, axis=-1, keepdims=True)
    y = xc * jax.lax.rsqrt(var + _EPS)
    y = y * g_ref[...] + b_ref[...]
    o_ref[...] = jnp.where(y >= 0.0, y, _NEG_SLOPE * y)


def _conv_in_lrelu_lat_kernel(w_ref, col_ref, bias_ref, g_ref, b_ref,
                              wl_ref, bl_ref, o_ref, lat_ref):
    # Same as above, plus the decoder's 1x1 lateral conv fused on the result.
    acc = jnp.dot(w_ref[...], col_ref[...], preferred_element_type=jnp.float32)
    acc = acc + bias_ref[...]
    mean = jnp.mean(acc, axis=-1, keepdims=True)
    xc = acc - mean
    var = jnp.mean(xc * xc, axis=-1, keepdims=True)
    y = xc * jax.lax.rsqrt(var + _EPS)
    y = y * g_ref[...] + b_ref[...]
    act = jnp.where(y >= 0.0, y, _NEG_SLOPE * y)
    o_ref[...] = act
    lat_ref[...] = (jnp.dot(wl_ref[...], act, preferred_element_type=jnp.float32)
                    + bl_ref[...])


# --------------------------------------------------------------------------
# BlockSpec helpers (all blocks equal the full last-two dims -> layout legal)
# --------------------------------------------------------------------------

def _wspec(rows, cols):
    return pl.BlockSpec((rows, cols), lambda n: (0, 0))


def _vecspec(rows):
    return pl.BlockSpec((rows, 1), lambda n: (0, 0))


def _colspec(kp, s):
    return pl.BlockSpec((None, kp, s), lambda n: (n, 0, 0))


def _outspec(rows, s):
    return pl.BlockSpec((None, rows, s), lambda n: (n, 0, 0))


# --------------------------------------------------------------------------
# im2col / GEMM wrappers (glue in XLA, GEMM + epilogue in Pallas)
# --------------------------------------------------------------------------

def _pad_axis_to_multiple(a, axis, m):
    n = a.shape[axis]
    n_pad = (-(-n // m)) * m
    if n_pad == n:
        return a
    pads = [(0, 0)] * a.ndim
    pads[axis] = (0, n_pad - n)
    return jnp.pad(a, pads)


def _im2col(x, k, stride, padding):
    """NCDHW -> (N, Cin*k^3 padded to mult-of-8, Do*Ho*Wo); K order (c,kd,kh,kw)."""
    N, C, D, H, W = x.shape
    xp = x if padding == 0 else jnp.pad(
        x, ((0, 0), (0, 0), (padding,) * 2, (padding,) * 2, (padding,) * 2))
    Do = (D + 2 * padding - k) // stride + 1
    Ho = (H + 2 * padding - k) // stride + 1
    Wo = (W + 2 * padding - k) // stride + 1
    taps = []
    for kd in range(k):
        for kh in range(k):
            for kw in range(k):
                taps.append(xp[:, :,
                               kd:kd + stride * Do:stride,
                               kh:kh + stride * Ho:stride,
                               kw:kw + stride * Wo:stride])
    col = jnp.stack(taps, axis=2)                       # (N, C, k^3, Do, Ho, Wo)
    col = col.reshape(N, C * k * k * k, Do * Ho * Wo)   # (N, K, S)
    col = _pad_axis_to_multiple(col, 1, 8)
    return col, (Do, Ho, Wo)


def _lane_dense_gemm(wmat, col, bias):
    """wmat: (R, Kp), col: (N, Kp, S), bias: (R,) -> (N, R, S) float32."""
    N, Kp, S = col.shape
    R = wmat.shape[0]
    return pl.pallas_call(
        _conv_bias_kernel,
        out_shape=jax.ShapeDtypeStruct((N, R, S), jnp.float32),
        grid=(N,),
        in_specs=[_wspec(R, Kp), _colspec(Kp, S), _vecspec(R)],
        out_specs=_outspec(R, S),
        compiler_params=_compiler_params(),
    )(wmat.astype(jnp.bfloat16), col.astype(jnp.bfloat16),
      bias.reshape(R, 1).astype(jnp.float32))


def conv3d(x, w, bias, stride=1, padding=0):
    """PyTorch Conv3d semantics. x: (N,Cin,D,H,W); w: (Cout,Cin,k,k,k)."""
    Cout, Cin, k = w.shape[0], w.shape[1], w.shape[2]
    col, (Do, Ho, Wo) = _im2col(x, k, stride, padding)
    w2d = _pad_axis_to_multiple(w.reshape(Cout, Cin * k * k * k), 1, 8)
    y = _lane_dense_gemm(w2d, col, bias)                # (N, Cout, S)
    return y.reshape(col.shape[0], Cout, Do, Ho, Wo)


def conv_transpose3d(x, w, bias, s):
    """ConvTranspose3d with kernel_size == stride == s.
    x: (N,Cin,D,H,W); w: (Cin,Cout,s,s,s)."""
    N, Cin, D, H, W = x.shape
    Cout = w.shape[1]
    Sp = D * H * W
    a = _pad_axis_to_multiple(x.reshape(N, Cin, Sp), 1, 8)
    wt = w.transpose(1, 2, 3, 4, 0).reshape(Cout * s * s * s, Cin)  # rows: (co,kd,kh,kw)
    wt = _pad_axis_to_multiple(wt, 1, 8)
    bias_rows = jnp.repeat(bias, s * s * s)
    y = _lane_dense_gemm(wt, a, bias_rows)              # (N, Cout*s^3, Sp)
    y = y.reshape(N, Cout, s, s, s, D, H, W)
    y = y.transpose(0, 1, 5, 2, 6, 3, 7, 4).reshape(N, Cout, D * s, H * s, W * s)
    return y


def conv_in_lrelu(x, w, bias, gamma, beta, stride, padding, lat_w=None, lat_b=None):
    """Fused Conv3d(pad) -> InstanceNorm3d(affine) -> LeakyReLU, optionally
    also emitting the decoder's fused 1x1 lateral conv output."""
    Cout, Cin, k = w.shape[0], w.shape[1], w.shape[2]
    col, (Do, Ho, Wo) = _im2col(x, k, stride, padding)
    N, Kp, S = col.shape
    w2d = _pad_axis_to_multiple(w.reshape(Cout, Cin * k * k * k), 1, 8)
    w2d = w2d.astype(jnp.bfloat16)
    colb = col.astype(jnp.bfloat16)
    bias2 = bias.reshape(Cout, 1).astype(jnp.float32)
    g2 = gamma.reshape(Cout, 1).astype(jnp.float32)
    b2 = beta.reshape(Cout, 1).astype(jnp.float32)

    if lat_w is None:
        y = pl.pallas_call(
            _conv_in_lrelu_kernel,
            out_shape=jax.ShapeDtypeStruct((N, Cout, S), jnp.float32),
            grid=(N,),
            in_specs=[_wspec(Cout, Kp), _colspec(Kp, S),
                      _vecspec(Cout), _vecspec(Cout), _vecspec(Cout)],
            out_specs=_outspec(Cout, S),
            compiler_params=_compiler_params(),
        )(w2d, colb, bias2, g2, b2)
        return y.reshape(N, Cout, Do, Ho, Wo)

    Clat = lat_w.shape[0]
    wl = lat_w.reshape(Clat, Cout).astype(jnp.float32)
    bl = lat_b.reshape(Clat, 1).astype(jnp.float32)
    y, lat = pl.pallas_call(
        _conv_in_lrelu_lat_kernel,
        out_shape=(jax.ShapeDtypeStruct((N, Cout, S), jnp.float32),
                   jax.ShapeDtypeStruct((N, Clat, S), jnp.float32)),
        grid=(N,),
        in_specs=[_wspec(Cout, Kp), _colspec(Kp, S),
                  _vecspec(Cout), _vecspec(Cout), _vecspec(Cout),
                  _wspec(Clat, Cout), _vecspec(Clat)],
        out_specs=(_outspec(Cout, S), _outspec(Clat, S)),
        compiler_params=_compiler_params(),
    )(w2d, colb, bias2, g2, b2, wl, bl)
    return (y.reshape(N, Cout, Do, Ho, Wo),
            lat.reshape(N, Clat, Do, Ho, Wo))


# --------------------------------------------------------------------------
# Model config, deterministic parameters, forward pass
# --------------------------------------------------------------------------

CONFIG = dict(
    in_channels=1,
    start_channels=4,
    conv_kernels=[3, 3, 3],
    strides=[1, 2, 2],
    fpn_channels=8,
    out_fmaps=['P1', 'P2'],
    feature_levels=[],
    use_encoder_attn=False,
    use_decoder_attn=False,
    use_seg_proxy_loss=False,
)


def _init_conv(key, cout, cin, k):
    kw, kb = jax.random.split(key)
    fan_in = cin * k ** 3
    w = jax.random.normal(kw, (cout, cin, k, k, k), jnp.float32) / jnp.sqrt(fan_in)
    b = jax.random.normal(kb, (cout,), jnp.float32) * 0.01
    return w, b


def _init_convT(key, cin, cout, s):
    kw, kb = jax.random.split(key)
    fan_in = cin * s ** 3
    w = jax.random.normal(kw, (cin, cout, s, s, s), jnp.float32) / jnp.sqrt(fan_in)
    b = jax.random.normal(kb, (cout,), jnp.float32) * 0.01
    return w, b


def init_params(key):
    cfg = CONFIG
    num_stages = len(cfg['conv_kernels'])
    params = {'enc': [], 'lateral': [], 'up': [], 'out': []}

    # ---- Encoder: CNN stage = 2 x (conv3 -> IN -> lrelu), first conv strided.
    cin = cfg['in_channels']
    cout = cfg['start_channels']
    for stage in range(num_stages):
        key, k1, k2 = jax.random.split(key, 3)
        w1, b1 = _init_conv(k1, cout, cin, 3)
        w2, b2 = _init_conv(k2, cout, cout, 3)
        params['enc'].append(dict(
            w1=w1, b1=b1, g1=jnp.ones((cout,)), be1=jnp.zeros((cout,)),
            w2=w2, b2=b2, g2=jnp.ones((cout,)), be2=jnp.zeros((cout,)),
            stride=cfg['strides'][stage]))
        cin = cout
        cout *= 2

    # ---- Decoder bookkeeping (mirrors the PyTorch __init__).
    enc_out_channels = [cfg['start_channels'] * 2 ** s for s in range(num_stages)]
    required_stages = sorted({int(f[-1]) for f in cfg['out_fmaps']})
    earliest = min(required_stages)
    lateral_in = enc_out_channels[earliest:]
    lateral_out = [min(c, cfg['fpn_channels']) for c in lateral_in]

    for ci, co in zip(lateral_in, lateral_out):
        key, k1 = jax.random.split(key)
        w, b = _init_conv(k1, co, ci, 1)
        params['lateral'].append(dict(w=w, b=b))

    out_in = [lateral_out[-num_stages + s] for s in required_stages]
    for ci in out_in:
        key, k1 = jax.random.split(key)
        w, b = _init_conv(k1, cfg['fpn_channels'], ci, 3)
        params['out'].append(dict(w=w, b=b))

    rev_lat = list(reversed(lateral_out))
    rev_strides = list(reversed(cfg['strides']))
    for level in range(len(lateral_out) - 1):
        key, k1 = jax.random.split(key)
        s = rev_strides[level]
        w, b = _init_convT(k1, rev_lat[level], rev_lat[level + 1], s)
        params['up'].append(dict(w=w, b=b, s=s))

    meta = dict(required_stages=required_stages,
                lateral_levels=len(params['lateral']),
                earliest=earliest,
                num_stages=num_stages)
    return params, meta


def attn_fpn_forward(params, meta, src):
    num_stages = meta['num_stages']
    earliest = meta['earliest']
    lateral_levels = meta['lateral_levels']

    # -------- Encoder (with decoder laterals fused into the stage epilogue) ----
    laterals = {}
    x = src
    for i, st in enumerate(params['enc']):
        x = conv_in_lrelu(x, st['w1'], st['b1'], st['g1'], st['be1'],
                          stride=st['stride'], padding=1)
        lat_idx = i - earliest
        if 0 <= lat_idx < lateral_levels:
            lp = params['lateral'][lat_idx]
            x, lat = conv_in_lrelu(x, st['w2'], st['b2'], st['g2'], st['be2'],
                                   stride=1, padding=1,
                                   lat_w=lp['w'], lat_b=lp['b'])
            laterals[i] = lat
        else:
            x = conv_in_lrelu(x, st['w2'], st['b2'], st['g2'], st['be2'],
                              stride=1, padding=1)

    # -------- Decoder (top-down path) --------
    lateral_out = [laterals[s] for s in range(earliest, num_stages)]

    up_out = []
    up = None
    for idx, t in enumerate(reversed(lateral_out)):
        if idx != 0:
            t = t + up
        if idx < lateral_levels - 1:
            pu = params['up'][idx]
            up = conv_transpose3d(t, pu['w'], pu['b'], pu['s'])
        up_out.append(t)

    outputs = {}
    for idx, (fmap, stage) in enumerate(zip(reversed(up_out),
                                            meta['required_stages'])):
        p = params['out'][idx]
        outputs['P' + str(stage)] = conv3d(fmap, p['w'], p['b'],
                                           stride=1, padding=1)
    return outputs


# --------------------------------------------------------------------------

if __name__ == "__main__":
    key = jax.random.PRNGKey(0)
    key, pkey, xkey = jax.random.split(key, 3)
    params, meta = init_params(pkey)

    # input: (batch=2, in_channels=1, D=8, H=8, W=8)  -- NCDHW like PyTorch
    src = jax.random.normal(xkey, (2, 1, 8, 8, 8), jnp.float32)

    fwd = jax.jit(functools.partial(attn_fpn_forward, params, meta))
    outs = fwd(src)
    jax.block_until_ready(outs)

    assert outs['P1'].shape == (2, 8, 4, 4, 4), outs['P1'].shape
    assert outs['P2'].shape == (2, 8, 2, 2, 2), outs['P2'].shape
    assert all(bool(jnp.all(jnp.isfinite(v))) for v in outs.values())
    print("KERNEL_OK")
</pallas_src>

<mosaic_0001>
module attributes {stable_mosaic.version = 11 : i64} {
  func.func @_conv_in_lrelu_kernel(%arg0: i32, %arg1: memref<4x32xbf16, #tpu.memory_space<vmem>>, %arg2: memref<1x32x512xbf16, #tpu.memory_space<vmem>>, %arg3: memref<4x1xf32, #tpu.memory_space<vmem>>, %arg4: memref<4x1xf32, #tpu.memory_space<vmem>>, %arg5: memref<4x1xf32, #tpu.memory_space<vmem>>, %arg6: memref<1x4x512xf32, #tpu.memory_space<vmem>>) attributes {dimension_semantics = [#tpu.dimension_semantics<parallel>], iteration_bounds = array<i64: 2>, scalar_prefetch = 0 : i64, scratch_operands = 0 : i64, tpu.core_type = #tpu.core_type<tc>, window_params = [{pipeline_mode = #tpu.pipeline_mode<synchronous>, transform_indices = @transform_0, window_bounds = array<i64: 4, 32>}, {transform_indices = @transform_1, window_bounds = array<i64: 1, 32, 512>}, {pipeline_mode = #tpu.pipeline_mode<synchronous>, transform_indices = @transform_2, window_bounds = array<i64: 4, 1>}, {pipeline_mode = #tpu.pipeline_mode<synchronous>, transform_indices = @transform_3, window_bounds = array<i64: 4, 1>}, {pipeline_mode = #tpu.pipeline_mode<synchronous>, transform_indices = @transform_4, window_bounds = array<i64: 4, 1>}, {transform_indices = @transform_5, window_bounds = array<i64: 1, 4, 512>}]} {
    %c0 = arith.constant 0 : index
    %c0_0 = arith.constant 0 : index
    %0 = vector.load %arg1[%c0, %c0_0] : memref<4x32xbf16, #tpu.memory_space<vmem>>, vector<4x32xbf16>
    %c0_1 = arith.constant 0 : index
    %c0_2 = arith.constant 0 : index
    %c0_3 = arith.constant 0 : index
    %1 = vector.load %arg2[%c0_1, %c0_2, %c0_3] : memref<1x32x512xbf16, #tpu.memory_space<vmem>>, vector<1x32x512xbf16>
    %2 = vector.shape_cast %1 : vector<1x32x512xbf16> to vector<32x512xbf16>
    %cst = arith.constant dense<0.000000e+00> : vector<4x512xf32>
    %3 = tpu.matmul %0, %2, %cst {dimension_numbers = #tpu.dot_dimension_numbers<[1], [0], [0], [1], [0, 0, 1, 1], [], []>} : vector<4x32xbf16>, vector<32x512xbf16>, vector<4x512xf32> -> vector<4x512xf32>
    %c0_4 = arith.constant 0 : index
    %c0_5 = arith.constant 0 : index
    %4 = vector.load %arg3[%c0_4, %c0_5] : memref<4x1xf32, #tpu.memory_space<vmem>>, vector<4x1xf32>
    %5 = vector.broadcast %4 : vector<4x1xf32> to vector<4x512xf32>
    %6 = arith.addf %3, %5 : vector<4x512xf32>
    %cst_6 = arith.constant dense<0.000000e+00> : vector<4xf32>
    %7 = vector.multi_reduction <add>, %6, %cst_6 [1] : vector<4x512xf32> to vector<4xf32>
    %8 = vector.shape_cast %7 : vector<4xf32> to vector<4x1xf32>
    %cst_7 = arith.constant 5.120000e+02 : f32
    %9 = vector.broadcast %cst_7 : f32 to vector<4x1xf32>
    %10 = arith.divf %8, %9 : vector<4x1xf32>
    %11 = vector.broadcast %10 : vector<4x1xf32> to vector<4x512xf32>
    %12 = arith.subf %6, %11 : vector<4x512xf32>
    %13 = arith.mulf %12, %12 : vector<4x512xf32>
    %cst_8 = arith.constant dense<0.000000e+00> : vector<4xf32>
    %14 = vector.multi_reduction <add>, %13, %cst_8 [1] : vector<4x512xf32> to vector<4xf32>
    %15 = vector.shape_cast %14 : vector<4xf32> to vector<4x1xf32>
    %cst_9 = arith.constant 5.120000e+02 : f32
    %16 = vector.broadcast %cst_9 : f32 to vector<4x1xf32>
    %17 = arith.divf %15, %16 : vector<4x1xf32>
    %cst_10 = arith.constant 9.99999974E-6 : f32
    %18 = vector.broadcast %cst_10 : f32 to vector<4x1xf32>
    %19 = arith.addf %17, %18 : vector<4x1xf32>
    %20 = math.rsqrt %19 : vector<4x1xf32>
    %21 = vector.broadcast %20 : vector<4x1xf32> to vector<4x512xf32>
    %22 = arith.mulf %12, %21 : vector<4x512xf32>
    %c0_11 = arith.constant 0 : index
    %c0_12 = arith.constant 0 : index
    %23 = vector.load %arg4[%c0_11, %c0_12] : memref<4x1xf32, #tpu.memory_space<vmem>>, vector<4x1xf32>
    %24 = vector.broadcast %23 : vector<4x1xf32> to vector<4x512xf32>
    %25 = arith.mulf %22, %24 : vector<4x512xf32>
    %c0_13 = arith.constant 0 : index
    %c0_14 = arith.constant 0 : index
    %26 = vector.load %arg5[%c0_13, %c0_14] : memref<4x1xf32, #tpu.memory_space<vmem>>, vector<4x1xf32>
    %27 = vector.broadcast %26 : vector<4x1xf32> to vector<4x512xf32>
    %28 = arith.addf %25, %27 : vector<4x512xf32>
    %cst_15 = arith.constant 0.000000e+00 : f32
    %29 = vector.broadcast %cst_15 : f32 to vector<4x512xf32>
    %30 = arith.cmpf oge, %28, %29 : vector<4x512xf32>
    %cst_16 = arith.constant 0.00999999977 : f32
    %31 = vector.broadcast %cst_16 : f32 to vector<4x512xf32>
    %32 = arith.mulf %31, %28 : vector<4x512xf32>
    %33 = arith.select %30, %28, %32 : vector<4x512xi1>, vector<4x512xf32>
    %c0_17 = arith.constant 0 : index
    %c0_18 = arith.constant 0 : index
    %c0_19 = arith.constant 0 : index
    %34 = vector.load %arg6[%c0_17, %c0_18, %c0_19] : memref<1x4x512xf32, #tpu.memory_space<vmem>>, vector<1x4x512xf32>
    %35 = vector.shape_cast %34 : vector<1x4x512xf32> to vector<4x512xf32>
    %36 = vector.shape_cast %33 : vector<4x512xf32> to vector<1x4x512xf32>
    tpu.vector_store %arg6[%c0_17, %c0_18, %c0_19], %36 {strides = array<i32>} : memref<1x4x512xf32, #tpu.memory_space<vmem>>, vector<1x4x512xf32>,
    return
  }
  func.func @transform_0(%arg0: i32) -> (i32, i32) {
    %c0_i32 = arith.constant 0 : i32
    %c0_i32_0 = arith.constant 0 : i32
    %c0_i32_1 = arith.constant 0 : i32
    return %c0_i32, %c0_i32_0 : i32, i32
  }
  func.func @transform_1(%arg0: i32) -> (i32, i32, i32) {
    %c0_i32 = arith.constant 0 : i32
    %c0_i32_0 = arith.constant 0 : i32
    %c0_i32_1 = arith.constant 0 : i32
    return %arg0, %c0_i32, %c0_i32_0 : i32, i32, i32
  }
  func.func @transform_2(%arg0: i32) -> (i32, i32) {
    %c0_i32 = arith.constant 0 : i32
    %c0_i32_0 = arith.constant 0 : i32
    %c0_i32_1 = arith.constant 0 : i32
    return %c0_i32, %c0_i32_0 : i32, i32
  }
  func.func @transform_3(%arg0: i32) -> (i32, i32) {
    %c0_i32 = arith.constant 0 : i32
    %c0_i32_0 = arith.constant 0 : i32
    %c0_i32_1 = arith.constant 0 : i32
    return %c0_i32, %c0_i32_0 : i32, i32
  }
  func.func @transform_4(%arg0: i32) -> (i32, i32) {
    %c0_i32 = arith.constant 0 : i32
    %c0_i32_0 = arith.constant 0 : i32
    %c0_i32_1 = arith.constant 0 : i32
    return %c0_i32, %c0_i32_0 : i32, i32
  }
  func.func @transform_5(%arg0: i32) -> (i32, i32, i32) {
    %c0_i32 = arith.constant 0 : i32
    %c0_i32_0 = arith.constant 0 : i32
    %c0_i32_1 = arith.constant 0 : i32
    return %arg0, %c0_i32, %c0_i32_0 : i32, i32, i32
  }
}

module attributes {stable_mosaic.version = 11 : i64} {
  func.func @_conv_in_lrelu_kernel(%arg0: i32, %arg1: memref<4x112xbf16, #tpu.memory_space<vmem>>, %arg2: memref<1x112x512xbf16, #tpu.memory_space<vmem>>, %arg3: memref<4x1xf32, #tpu.memory_space<vmem>>, %arg4: memref<4x1xf32, #tpu.memory_space<vmem>>, %arg5: memref<4x1xf32, #tpu.memory_space<vmem>>, %arg6: memref<1x4x512xf32, #tpu.memory_space<vmem>>) attributes {dimension_semantics = [#tpu.dimension_semantics<parallel>], iteration_bounds = array<i64: 2>, scalar_prefetch = 0 : i64, scratch_operands = 0 : i64, tpu.core_type = #tpu.core_type<tc>, window_params = [{pipeline_mode = #tpu.pipeline_mode<synchronous>, transform_indices = @transform_0, window_bounds = array<i64: 4, 112>}, {transform_indices = @transform_1, window_bounds = array<i64: 1, 112, 512>}, {pipeline_mode = #tpu.pipeline_mode<synchronous>, transform_indices = @transform_2, window_bounds = array<i64: 4, 1>}, {pipeline_mode = #tpu.pipeline_mode<synchronous>, transform_indices = @transform_3, window_bounds = array<i64: 4, 1>}, {pipeline_mode = #tpu.pipeline_mode<synchronous>, transform_indices = @transform_4, window_bounds = array<i64: 4, 1>}, {transform_indices = @transform_5, window_bounds = array<i64: 1, 4, 512>}]} {
    %c0 = arith.constant 0 : index
    %c0_0 = arith.constant 0 : index
    %0 = vector.load %arg1[%c0, %c0_0] : memref<4x112xbf16, #tpu.memory_space<vmem>>, vector<4x112xbf16>
    %c0_1 = arith.constant 0 : index
    %c0_2 = arith.constant 0 : index
    %c0_3 = arith.constant 0 : index
    %1 = vector.load %arg2[%c0_1, %c0_2, %c0_3] : memref<1x112x512xbf16, #tpu.memory_space<vmem>>, vector<1x112x512xbf16>
    %2 = vector.shape_cast %1 : vector<1x112x512xbf16> to vector<112x512xbf16>
    %cst = arith.constant dense<0.000000e+00> : vector<4x512xf32>
    %3 = tpu.matmul %0, %2, %cst {dimension_numbers = #tpu.dot_dimension_numbers<[1], [0], [0], [1], [0, 0, 1, 1], [], []>} : vector<4x112xbf16>, vector<112x512xbf16>, vector<4x512xf32> -> vector<4x512xf32>
    %c0_4 = arith.constant 0 : index
    %c0_5 = arith.constant 0 : index
    %4 = vector.load %arg3[%c0_4, %c0_5] : memref<4x1xf32, #tpu.memory_space<vmem>>, vector<4x1xf32>
    %5 = vector.broadcast %4 : vector<4x1xf32> to vector<4x512xf32>
    %6 = arith.addf %3, %5 : vector<4x512xf32>
    %cst_6 = arith.constant dense<0.000000e+00> : vector<4xf32>
    %7 = vector.multi_reduction <add>, %6, %cst_6 [1] : vector<4x512xf32> to vector<4xf32>
    %8 = vector.shape_cast %7 : vector<4xf32> to vector<4x1xf32>
    %cst_7 = arith.constant 5.120000e+02 : f32
    %9 = vector.broadcast %cst_7 : f32 to vector<4x1xf32>
    %10 = arith.divf %8, %9 : vector<4x1xf32>
    %11 = vector.broadcast %10 : vector<4x1xf32> to vector<4x512xf32>
    %12 = arith.subf %6, %11 : vector<4x512xf32>
    %13 = arith.mulf %12, %12 : vector<4x512xf32>
    %cst_8 = arith.constant dense<0.000000e+00> : vector<4xf32>
    %14 = vector.multi_reduction <add>, %13, %cst_8 [1] : vector<4x512xf32> to vector<4xf32>
    %15 = vector.shape_cast %14 : vector<4xf32> to vector<4x1xf32>
    %cst_9 = arith.constant 5.120000e+02 : f32
    %16 = vector.broadcast %cst_9 : f32 to vector<4x1xf32>
    %17 = arith.divf %15, %16 : vector<4x1xf32>
    %cst_10 = arith.constant 9.99999974E-6 : f32
    %18 = vector.broadcast %cst_10 : f32 to vector<4x1xf32>
    %19 = arith.addf %17, %18 : vector<4x1xf32>
    %20 = math.rsqrt %19 : vector<4x1xf32>
    %21 = vector.broadcast %20 : vector<4x1xf32> to vector<4x512xf32>
    %22 = arith.mulf %12, %21 : vector<4x512xf32>
    %c0_11 = arith.constant 0 : index
    %c0_12 = arith.constant 0 : index
    %23 = vector.load %arg4[%c0_11, %c0_12] : memref<4x1xf32, #tpu.memory_space<vmem>>, vector<4x1xf32>
    %24 = vector.broadcast %23 : vector<4x1xf32> to vector<4x512xf32>
    %25 = arith.mulf %22, %24 : vector<4x512xf32>
    %c0_13 = arith.constant 0 : index
    %c0_14 = arith.constant 0 : index
    %26 = vector.load %arg5[%c0_13, %c0_14] : memref<4x1xf32, #tpu.memory_space<vmem>>, vector<4x1xf32>
    %27 = vector.broadcast %26 : vector<4x1xf32> to vector<4x512xf32>
    %28 = arith.addf %25, %27 : vector<4x512xf32>
    %cst_15 = arith.constant 0.000000e+00 : f32
    %29 = vector.broadcast %cst_15 : f32 to vector<4x512xf32>
    %30 = arith.cmpf oge, %28, %29 : vector<4x512xf32>
    %cst_16 = arith.constant 0.00999999977 : f32
    %31 = vector.broadcast %cst_16 : f32 to vector<4x512xf32>
    %32 = arith.mulf %31, %28 : vector<4x512xf32>
    %33 = arith.select %30, %28, %32 : vector<4x512xi1>, vector<4x512xf32>
    %c0_17 = arith.constant 0 : index
    %c0_18 = arith.constant 0 : index
    %c0_19 = arith.constant 0 : index
    %34 = vector.load %arg6[%c0_17, %c0_18, %c0_19] : memref<1x4x512xf32, #tpu.memory_space<vmem>>, vector<1x4x512xf32>
    %35 = vector.shape_cast %34 : vector<1x4x512xf32> to vector<4x512xf32>
    %36 = vector.shape_cast %33 : vector<4x512xf32> to vector<1x4x512xf32>
    tpu.vector_store %arg6[%c0_17, %c0_18, %c0_19], %36 {strides = array<i32>} : memref<1x4x512xf32, #tpu.memory_space<vmem>>, vector<1x4x512xf32>,
    return
  }
  func.func @transform_0(%arg0: i32) -> (i32, i32) {
    %c0_i32 = arith.constant 0 : i32
    %c0_i32_0 = arith.constant 0 : i32
    %c0_i32_1 = arith.constant 0 : i32
    return %c0_i32, %c0_i32_0 : i32, i32
  }
  func.func @transform_1(%arg0: i32) -> (i32, i32, i32) {
    %c0_i32 = arith.constant 0 : i32
    %c0_i32_0 = arith.constant 0 : i32
    %c0_i32_1 = arith.constant 0 : i32
    return %arg0, %c0_i32, %c0_i32_0 : i32, i32, i32
  }
  func.func @transform_2(%arg0: i32) -> (i32, i32) {
    %c0_i32 = arith.constant 0 : i32
    %c0_i32_0 = arith.constant 0 : i32
    %c0_i32_1 = arith.constant 0 : i32
    return %c0_i32, %c0_i32_0 : i32, i32
  }
  func.func @transform_3(%arg0: i32) -> (i32, i32) {
    %c0_i32 = arith.constant 0 : i32
    %c0_i32_0 = arith.constant 0 : i32
    %c0_i32_1 = arith.constant 0 : i32
    return %c0_i32, %c0_i32_0 : i32, i32
  }
  func.func @transform_4(%arg0: i32) -> (i32, i32) {
    %c0_i32 = arith.constant 0 : i32
    %c0_i32_0 = arith.constant 0 : i32
    %c0_i32_1 = arith.constant 0 : i32
    return %c0_i32, %c0_i32_0 : i32, i32
  }
  func.func @transform_5(%arg0: i32) -> (i32, i32, i32) {
    %c0_i32 = arith.constant 0 : i32
    %c0_i32_0 = arith.constant 0 : i32
    %c0_i32_1 = arith.constant 0 : i32
    return %arg0, %c0_i32, %c0_i32_0 : i32, i32, i32
  }
}

module attributes {stable_mosaic.version = 11 : i64} {
  func.func @_conv_in_lrelu_kernel(%arg0: i32, %arg1: memref<8x112xbf16, #tpu.memory_space<vmem>>, %arg2: memref<1x112x64xbf16, #tpu.memory_space<vmem>>, %arg3: memref<8x1xf32, #tpu.memory_space<vmem>>, %arg4: memref<8x1xf32, #tpu.memory_space<vmem>>, %arg5: memref<8x1xf32, #tpu.memory_space<vmem>>, %arg6: memref<1x8x64xf32, #tpu.memory_space<vmem>>) attributes {dimension_semantics = [#tpu.dimension_semantics<parallel>], iteration_bounds = array<i64: 2>, scalar_prefetch = 0 : i64, scratch_operands = 0 : i64, tpu.core_type = #tpu.core_type<tc>, window_params = [{pipeline_mode = #tpu.pipeline_mode<synchronous>, transform_indices = @transform_0, window_bounds = array<i64: 8, 112>}, {transform_indices = @transform_1, window_bounds = array<i64: 1, 112, 64>}, {pipeline_mode = #tpu.pipeline_mode<synchronous>, transform_indices = @transform_2, window_bounds = array<i64: 8, 1>}, {pipeline_mode = #tpu.pipeline_mode<synchronous>, transform_indices = @transform_3, window_bounds = array<i64: 8, 1>}, {pipeline_mode = #tpu.pipeline_mode<synchronous>, transform_indices = @transform_4, window_bounds = array<i64: 8, 1>}, {transform_indices = @transform_5, window_bounds = array<i64: 1, 8, 64>}]} {
    %c0 = arith.constant 0 : index
    %c0_0 = arith.constant 0 : index
    %0 = vector.load %arg1[%c0, %c0_0] : memref<8x112xbf16, #tpu.memory_space<vmem>>, vector<8x112xbf16>
    %c0_1 = arith.constant 0 : index
    %c0_2 = arith.constant 0 : index
    %c0_3 = arith.constant 0 : index
    %1 = vector.load %arg2[%c0_1, %c0_2, %c0_3] : memref<1x112x64xbf16, #tpu.memory_space<vmem>>, vector<1x112x64xbf16>
    %2 = vector.shape_cast %1 : vector<1x112x64xbf16> to vector<112x64xbf16>
    %cst = arith.constant dense<0.000000e+00> : vector<8x64xf32>
    %3 = tpu.matmul %0, %2, %cst {dimension_numbers = #tpu.dot_dimension_numbers<[1], [0], [0], [1], [0, 0, 1, 1], [], []>} : vector<8x112xbf16>, vector<112x64xbf16>, vector<8x64xf32> -> vector<8x64xf32>
    %c0_4 = arith.constant 0 : index
    %c0_5 = arith.constant 0 : index
    %4 = vector.load %arg3[%c0_4, %c0_5] : memref<8x1xf32, #tpu.memory_space<vmem>>, vector<8x1xf32>
    %5 = vector.broadcast %4 : vector<8x1xf32> to vector<8x64xf32>
    %6 = arith.addf %3, %5 : vector<8x64xf32>
    %cst_6 = arith.constant dense<0.000000e+00> : vector<8xf32>
    %7 = vector.multi_reduction <add>, %6, %cst_6 [1] : vector<8x64xf32> to vector<8xf32>
    %8 = vector.shape_cast %7 : vector<8xf32> to vector<8x1xf32>
    %cst_7 = arith.constant 6.400000e+01 : f32
    %9 = vector.broadcast %cst_7 : f32 to vector<8x1xf32>
    %10 = arith.divf %8, %9 : vector<8x1xf32>
    %11 = vector.broadcast %10 : vector<8x1xf32> to vector<8x64xf32>
    %12 = arith.subf %6, %11 : vector<8x64xf32>
    %13 = arith.mulf %12, %12 : vector<8x64xf32>
    %cst_8 = arith.constant dense<0.000000e+00> : vector<8xf32>
    %14 = vector.multi_reduction <add>, %13, %cst_8 [1] : vector<8x64xf32> to vector<8xf32>
    %15 = vector.shape_cast %14 : vector<8xf32> to vector<8x1xf32>
    %cst_9 = arith.constant 6.400000e+01 : f32
    %16 = vector.broadcast %cst_9 : f32 to vector<8x1xf32>
    %17 = arith.divf %15, %16 : vector<8x1xf32>
    %cst_10 = arith.constant 9.99999974E-6 : f32
    %18 = vector.broadcast %cst_10 : f32 to vector<8x1xf32>
    %19 = arith.addf %17, %18 : vector<8x1xf32>
    %20 = math.rsqrt %19 : vector<8x1xf32>
    %21 = vector.broadcast %20 : vector<8x1xf32> to vector<8x64xf32>
    %22 = arith.mulf %12, %21 : vector<8x64xf32>
    %c0_11 = arith.constant 0 : index
    %c0_12 = arith.constant 0 : index
    %23 = vector.load %arg4[%c0_11, %c0_12] : memref<8x1xf32, #tpu.memory_space<vmem>>, vector<8x1xf32>
    %24 = vector.broadcast %23 : vector<8x1xf32> to vector<8x64xf32>
    %25 = arith.mulf %22, %24 : vector<8x64xf32>
    %c0_13 = arith.constant 0 : index
    %c0_14 = arith.constant 0 : index
    %26 = vector.load %arg5[%c0_13, %c0_14] : memref<8x1xf32, #tpu.memory_space<vmem>>, vector<8x1xf32>
    %27 = vector.broadcast %26 : vector<8x1xf32> to vector<8x64xf32>
    %28 = arith.addf %25, %27 : vector<8x64xf32>
    %cst_15 = arith.constant 0.000000e+00 : f32
    %29 = vector.broadcast %cst_15 : f32 to vector<8x64xf32>
    %30 = arith.cmpf oge, %28, %29 : vector<8x64xf32>
    %cst_16 = arith.constant 0.00999999977 : f32
    %31 = vector.broadcast %cst_16 : f32 to vector<8x64xf32>
    %32 = arith.mulf %31, %28 : vector<8x64xf32>
    %33 = arith.select %30, %28, %32 : vector<8x64xi1>, vector<8x64xf32>
    %c0_17 = arith.constant 0 : index
    %c0_18 = arith.constant 0 : index
    %c0_19 = arith.constant 0 : index
    %34 = vector.load %arg6[%c0_17, %c0_18, %c0_19] : memref<1x8x64xf32, #tpu.memory_space<vmem>>, vector<1x8x64xf32>
    %35 = vector.shape_cast %34 : vector<1x8x64xf32> to vector<8x64xf32>
    %36 = vector.shape_cast %33 : vector<8x64xf32> to vector<1x8x64xf32>
    tpu.vector_store %arg6[%c0_17, %c0_18, %c0_19], %36 {strides = array<i32>} : memref<1x8x64xf32, #tpu.memory_space<vmem>>, vector<1x8x64xf32>,
    return
  }
  func.func @transform_0(%arg0: i32) -> (i32, i32) {
    %c0_i32 = arith.constant 0 : i32
    %c0_i32_0 = arith.constant 0 : i32
    %c0_i32_1 = arith.constant 0 : i32
    return %c0_i32, %c0_i32_0 : i32, i32
  }
  func.func @transform_1(%arg0: i32) -> (i32, i32, i32) {
    %c0_i32 = arith.constant 0 : i32
    %c0_i32_0 = arith.constant 0 : i32
    %c0_i32_1 = arith.constant 0 : i32
    return %arg0, %c0_i32, %c0_i32_0 : i32, i32, i32
  }
  func.func @transform_2(%arg0: i32) -> (i32, i32) {
    %c0_i32 = arith.constant 0 : i32
    %c0_i32_0 = arith.constant 0 : i32
    %c0_i32_1 = arith.constant 0 : i32
    return %c0_i32, %c0_i32_0 : i32, i32
  }
  func.func @transform_3(%arg0: i32) -> (i32, i32) {
    %c0_i32 = arith.constant 0 : i32
    %c0_i32_0 = arith.constant 0 : i32
    %c0_i32_1 = arith.constant 0 : i32
    return %c0_i32, %c0_i32_0 : i32, i32
  }
  func.func @transform_4(%arg0: i32) -> (i32, i32) {
    %c0_i32 = arith.constant 0 : i32
    %c0_i32_0 = arith.constant 0 : i32
    %c0_i32_1 = arith.constant 0 : i32
    return %c0_i32, %c0_i32_0 : i32, i32
  }
  func.func @transform_5(%arg0: i32) -> (i32, i32, i32) {
    %c0_i32 = arith.constant 0 : i32
    %c0_i32_0 = arith.constant 0 : i32
    %c0_i32_1 = arith.constant 0 : i32
    return %arg0, %c0_i32, %c0_i32_0 : i32, i32, i32
  }
}

module attributes {stable_mosaic.version = 11 : i64} {
  func.func @_conv_in_lrelu_lat_kernel(%arg0: i32, %arg1: memref<8x216xbf16, #tpu.memory_space<vmem>>, %arg2: memref<1x216x64xbf16, #tpu.memory_space<vmem>>, %arg3: memref<8x1xf32, #tpu.memory_space<vmem>>, %arg4: memref<8x1xf32, #tpu.memory_space<vmem>>, %arg5: memref<8x1xf32, #tpu.memory_space<vmem>>, %arg6: memref<8x8xf32, #tpu.memory_space<vmem>>, %arg7: memref<8x1xf32, #tpu.memory_space<vmem>>, %arg8: memref<1x8x64xf32, #tpu.memory_space<vmem>>, %arg9: memref<1x8x64xf32, #tpu.memory_space<vmem>>) attributes {dimension_semantics = [#tpu.dimension_semantics<parallel>], iteration_bounds = array<i64: 2>, scalar_prefetch = 0 : i64, scratch_operands = 0 : i64, tpu.core_type = #tpu.core_type<tc>, window_params = [{pipeline_mode = #tpu.pipeline_mode<synchronous>, transform_indices = @transform_0, window_bounds = array<i64: 8, 216>}, {transform_indices = @transform_1, window_bounds = array<i64: 1, 216, 64>}, {pipeline_mode = #tpu.pipeline_mode<synchronous>, transform_indices = @transform_2, window_bounds = array<i64: 8, 1>}, {pipeline_mode = #tpu.pipeline_mode<synchronous>, transform_indices = @transform_3, window_bounds = array<i64: 8, 1>}, {pipeline_mode = #tpu.pipeline_mode<synchronous>, transform_indices = @transform_4, window_bounds = array<i64: 8, 1>}, {pipeline_mode = #tpu.pipeline_mode<synchronous>, transform_indices = @transform_5, window_bounds = array<i64: 8, 8>}, {pipeline_mode = #tpu.pipeline_mode<synchronous>, transform_indices = @transform_6, window_bounds = array<i64: 8, 1>}, {transform_indices = @transform_7, window_bounds = array<i64: 1, 8, 64>}, {transform_indices = @transform_8, window_bounds = array<i64: 1, 8, 64>}]} {
    %c0 = arith.constant 0 : index
    %c0_0 = arith.constant 0 : index
    %0 = vector.load %arg1[%c0, %c0_0] : memref<8x216xbf16, #tpu.memory_space<vmem>>, vector<8x216xbf16>
    %c0_1 = arith.constant 0 : index
    %c0_2 = arith.constant 0 : index
    %c0_3 = arith.constant 0 : index
    %1 = vector.load %arg2[%c0_1, %c0_2, %c0_3] : memref<1x216x64xbf16, #tpu.memory_space<vmem>>, vector<1x216x64xbf16>
    %2 = vector.shape_cast %1 : vector<1x216x64xbf16> to vector<216x64xbf16>
    %cst = arith.constant dense<0.000000e+00> : vector<8x64xf32>
    %3 = tpu.matmul %0, %2, %cst {dimension_numbers = #tpu.dot_dimension_numbers<[1], [0], [0], [1], [0, 0, 1, 1], [], []>} : vector<8x216xbf16>, vector<216x64xbf16>, vector<8x64xf32> -> vector<8x64xf32>
    %c0_4 = arith.constant 0 : index
    %c0_5 = arith.constant 0 : index
    %4 = vector.load %arg3[%c0_4, %c0_5] : memref<8x1xf32, #tpu.memory_space<vmem>>, vector<8x1xf32>
    %5 = vector.broadcast %4 : vector<8x1xf32> to vector<8x64xf32>
    %6 = arith.addf %3, %5 : vector<8x64xf32>
    %cst_6 = arith.constant dense<0.000000e+00> : vector<8xf32>
    %7 = vector.multi_reduction <add>, %6, %cst_6 [1] : vector<8x64xf32> to vector<8xf32>
    %8 = vector.shape_cast %7 : vector<8xf32> to vector<8x1xf32>
    %cst_7 = arith.constant 6.400000e+01 : f32
    %9 = vector.broadcast %cst_7 : f32 to vector<8x1xf32>
    %10 = arith.divf %8, %9 : vector<8x1xf32>
    %11 = vector.broadcast %10 : vector<8x1xf32> to vector<8x64xf32>
    %12 = arith.subf %6, %11 : vector<8x64xf32>
    %13 = arith.mulf %12, %12 : vector<8x64xf32>
    %cst_8 = arith.constant dense<0.000000e+00> : vector<8xf32>
    %14 = vector.multi_reduction <add>, %13, %cst_8 [1] : vector<8x64xf32> to vector<8xf32>
    %15 = vector.shape_cast %14 : vector<8xf32> to vector<8x1xf32>
    %cst_9 = arith.constant 6.400000e+01 : f32
    %16 = vector.broadcast %cst_9 : f32 to vector<8x1xf32>
    %17 = arith.divf %15, %16 : vector<8x1xf32>
    %cst_10 = arith.constant 9.99999974E-6 : f32
    %18 = vector.broadcast %cst_10 : f32 to vector<8x1xf32>
    %19 = arith.addf %17, %18 : vector<8x1xf32>
    %20 = math.rsqrt %19 : vector<8x1xf32>
    %21 = vector.broadcast %20 : vector<8x1xf32> to vector<8x64xf32>
    %22 = arith.mulf %12, %21 : vector<8x64xf32>
    %c0_11 = arith.constant 0 : index
    %c0_12 = arith.constant 0 : index
    %23 = vector.load %arg4[%c0_11, %c0_12] : memref<8x1xf32, #tpu.memory_space<vmem>>, vector<8x1xf32>
    %24 = vector.broadcast %23 : vector<8x1xf32> to vector<8x64xf32>
    %25 = arith.mulf %22, %24 : vector<8x64xf32>
    %c0_13 = arith.constant 0 : index
    %c0_14 = arith.constant 0 : index
    %26 = vector.load %arg5[%c0_13, %c0_14] : memref<8x1xf32, #tpu.memory_space<vmem>>, vector<8x1xf32>
    %27 = vector.broadcast %26 : vector<8x1xf32> to vector<8x64xf32>
    %28 = arith.addf %25, %27 : vector<8x64xf32>
    %cst_15 = arith.constant 0.000000e+00 : f32
    %29 = vector.broadcast %cst_15 : f32 to vector<8x64xf32>
    %30 = arith.cmpf oge, %28, %29 : vector<8x64xf32>
    %cst_16 = arith.constant 0.00999999977 : f32
    %31 = vector.broadcast %cst_16 : f32 to vector<8x64xf32>
    %32 = arith.mulf %31, %28 : vector<8x64xf32>
    %33 = arith.select %30, %28, %32 : vector<8x64xi1>, vector<8x64xf32>
    %c0_17 = arith.constant 0 : index
    %c0_18 = arith.constant 0 : index
    %c0_19 = arith.constant 0 : index
    %34 = vector.load %arg8[%c0_17, %c0_18, %c0_19] : memref<1x8x64xf32, #tpu.memory_space<vmem>>, vector<1x8x64xf32>
    %35 = vector.shape_cast %34 : vector<1x8x64xf32> to vector<8x64xf32>
    %36 = vector.shape_cast %33 : vector<8x64xf32> to vector<1x8x64xf32>
    tpu.vector_store %arg8[%c0_17, %c0_18, %c0_19], %36 {strides = array<i32>} : memref<1x8x64xf32, #tpu.memory_space<vmem>>, vector<1x8x64xf32>,
    %c0_20 = arith.constant 0 : index
    %c0_21 = arith.constant 0 : index
    %37 = vector.load %arg6[%c0_20, %c0_21] : memref<8x8xf32, #tpu.memory_space<vmem>>, vector<8x8xf32>
    %cst_22 = arith.constant dense<0.000000e+00> : vector<8x64xf32>
    %38 = tpu.matmul %37, %33, %cst_22 {dimension_numbers = #tpu.dot_dimension_numbers<[1], [0], [0], [1], [0, 0, 1, 1], [], []>} : vector<8x8xf32>, vector<8x64xf32>, vector<8x64xf32> -> vector<8x64xf32>
    %c0_23 = arith.constant 0 : index
    %c0_24 = arith.constant 0 : index
    %39 = vector.load %arg7[%c0_23, %c0_24] : memref<8x1xf32, #tpu.memory_space<vmem>>, vector<8x1xf32>
    %40 = vector.broadcast %39 : vector<8x1xf32> to vector<8x64xf32>
    %41 = arith.addf %38, %40 : vector<8x64xf32>
    %c0_25 = arith.constant 0 : index
    %c0_26 = arith.constant 0 : index
    %c0_27 = arith.constant 0 : index
    %42 = vector.load %arg9[%c0_25, %c0_26, %c0_27] : memref<1x8x64xf32, #tpu.memory_space<vmem>>, vector<1x8x64xf32>
    %43 = vector.shape_cast %42 : vector<1x8x64xf32> to vector<8x64xf32>
    %44 = vector.shape_cast %41 : vector<8x64xf32> to vector<1x8x64xf32>
    tpu.vector_store %arg9[%c0_25, %c0_26, %c0_27], %44 {strides = array<i32>} : memref<1x8x64xf32, #tpu.memory_space<vmem>>, vector<1x8x64xf32>,
    return
  }
  func.func @transform_0(%arg0: i32) -> (i32, i32) {
    %c0_i32 = arith.constant 0 : i32
    %c0_i32_0 = arith.constant 0 : i32
    %c0_i32_1 = arith.constant 0 : i32
    return %c0_i32, %c0_i32_0 : i32, i32
  }
  func.func @transform_1(%arg0: i32) -> (i32, i32, i32) {
    %c0_i32 = arith.constant 0 : i32
    %c0_i32_0 = arith.constant 0 : i32
    %c0_i32_1 = arith.constant 0 : i32
    return %arg0, %c0_i32, %c0_i32_0 : i32, i32, i32
  }
  func.func @transform_2(%arg0: i32) -> (i32, i32) {
    %c0_i32 = arith.constant 0 : i32
    %c0_i32_0 = arith.constant 0 : i32
    %c0_i32_1 = arith.constant 0 : i32
    return %c0_i32, %c0_i32_0 : i32, i32
  }
  func.func @transform_3(%arg0: i32) -> (i32, i32) {
    %c0_i32 = arith.constant 0 : i32
    %c0_i32_0 = arith.constant 0 : i32
    %c0_i32_1 = arith.constant 0 : i32
    return %c0_i32, %c0_i32_0 : i32, i32
  }
  func.func @transform_4(%arg0: i32) -> (i32, i32) {
    %c0_i32 = arith.constant 0 : i32
    %c0_i32_0 = arith.constant 0 : i32
    %c0_i32_1 = arith.constant 0 : i32
    return %c0_i32, %c0_i32_0 : i32, i32
  }
  func.func @transform_5(%arg0: i32) -> (i32, i32) {
    %c0_i32 = arith.constant 0 : i32
    %c0_i32_0 = arith.constant 0 : i32
    %c0_i32_1 = arith.constant 0 : i32
    return %c0_i32, %c0_i32_0 : i32, i32
  }
  func.func @transform_6(%arg0: i32) -> (i32, i32) {
    %c0_i32 = arith.constant 0 : i32
    %c0_i32_0 = arith.constant 0 : i32
    %c0_i32_1 = arith.constant 0 : i32
    return %c0_i32, %c0_i32_0 : i32, i32
  }
  func.func @transform_7(%arg0: i32) -> (i32, i32, i32) {
    %c0_i32 = arith.constant 0 : i32
    %c0_i32_0 = arith.constant 0 : i32
    %c0_i32_1 = arith.constant 0 : i32
    return %arg0, %c0_i32, %c0_i32_0 : i32, i32, i32
  }
  func.func @transform_8(%arg0: i32) -> (i32, i32, i32) {
    %c0_i32 = arith.constant 0 : i32
    %c0_i32_0 = arith.constant 0 : i32
    %c0_i32_1 = arith.constant 0 : i32
    return %arg0, %c0_i32, %c0_i32_0 : i32, i32, i32
  }
}

module attributes {stable_mosaic.version = 11 : i64} {
  func.func @_conv_in_lrelu_kernel(%arg0: i32, %arg1: memref<16x216xbf16, #tpu.memory_space<vmem>>, %arg2: memref<1x216x8xbf16, #tpu.memory_space<vmem>>, %arg3: memref<16x1xf32, #tpu.memory_space<vmem>>, %arg4: memref<16x1xf32, #tpu.memory_space<vmem>>, %arg5: memref<16x1xf32, #tpu.memory_space<vmem>>, %arg6: memref<1x16x8xf32, #tpu.memory_space<vmem>>) attributes {dimension_semantics = [#tpu.dimension_semantics<parallel>], iteration_bounds = array<i64: 2>, scalar_prefetch = 0 : i64, scratch_operands = 0 : i64, tpu.core_type = #tpu.core_type<tc>, window_params = [{pipeline_mode = #tpu.pipeline_mode<synchronous>, transform_indices = @transform_0, window_bounds = array<i64: 16, 216>}, {transform_indices = @transform_1, window_bounds = array<i64: 1, 216, 8>}, {pipeline_mode = #tpu.pipeline_mode<synchronous>, transform_indices = @transform_2, window_bounds = array<i64: 16, 1>}, {pipeline_mode = #tpu.pipeline_mode<synchronous>, transform_indices = @transform_3, window_bounds = array<i64: 16, 1>}, {pipeline_mode = #tpu.pipeline_mode<synchronous>, transform_indices = @transform_4, window_bounds = array<i64: 16, 1>}, {transform_indices = @transform_5, window_bounds = array<i64: 1, 16, 8>}]} {
    %c0 = arith.constant 0 : index
    %c0_0 = arith.constant 0 : index
    %0 = vector.load %arg1[%c0, %c0_0] : memref<16x216xbf16, #tpu.memory_space<vmem>>, vector<16x216xbf16>
    %c0_1 = arith.constant 0 : index
    %c0_2 = arith.constant 0 : index
    %c0_3 = arith.constant 0 : index
    %1 = vector.load %arg2[%c0_1, %c0_2, %c0_3] : memref<1x216x8xbf16, #tpu.memory_space<vmem>>, vector<1x216x8xbf16>
    %2 = vector.shape_cast %1 : vector<1x216x8xbf16> to vector<216x8xbf16>
    %cst = arith.constant dense<0.000000e+00> : vector<16x8xf32>
    %3 = tpu.matmul %0, %2, %cst {dimension_numbers = #tpu.dot_dimension_numbers<[1], [0], [0], [1], [0, 0, 1, 1], [], []>} : vector<16x216xbf16>, vector<216x8xbf16>, vector<16x8xf32> -> vector<16x8xf32>
    %c0_4 = arith.constant 0 : index
    %c0_5 = arith.constant 0 : index
    %4 = vector.load %arg3[%c0_4, %c0_5] : memref<16x1xf32, #tpu.memory_space<vmem>>, vector<16x1xf32>
    %5 = vector.broadcast %4 : vector<16x1xf32> to vector<16x8xf32>
    %6 = arith.addf %3, %5 : vector<16x8xf32>
    %cst_6 = arith.constant dense<0.000000e+00> : vector<16xf32>
    %7 = vector.multi_reduction <add>, %6, %cst_6 [1] : vector<16x8xf32> to vector<16xf32>
    %8 = vector.shape_cast %7 : vector<16xf32> to vector<16x1xf32>
    %cst_7 = arith.constant 8.000000e+00 : f32
    %9 = vector.broadcast %cst_7 : f32 to vector<16x1xf32>
    %10 = arith.divf %8, %9 : vector<16x1xf32>
    %11 = vector.broadcast %10 : vector<16x1xf32> to vector<16x8xf32>
    %12 = arith.subf %6, %11 : vector<16x8xf32>
    %13 = arith.mulf %12, %12 : vector<16x8xf32>
    %cst_8 = arith.constant dense<0.000000e+00> : vector<16xf32>
    %14 = vector.multi_reduction <add>, %13, %cst_8 [1] : vector<16x8xf32> to vector<16xf32>
    %15 = vector.shape_cast %14 : vector<16xf32> to vector<16x1xf32>
    %cst_9 = arith.constant 8.000000e+00 : f32
    %16 = vector.broadcast %cst_9 : f32 to vector<16x1xf32>
    %17 = arith.divf %15, %16 : vector<16x1xf32>
    %cst_10 = arith.constant 9.99999974E-6 : f32
    %18 = vector.broadcast %cst_10 : f32 to vector<16x1xf32>
    %19 = arith.addf %17, %18 : vector<16x1xf32>
    %20 = math.rsqrt %19 : vector<16x1xf32>
    %21 = vector.broadcast %20 : vector<16x1xf32> to vector<16x8xf32>
    %22 = arith.mulf %12, %21 : vector<16x8xf32>
    %c0_11 = arith.constant 0 : index
    %c0_12 = arith.constant 0 : index
    %23 = vector.load %arg4[%c0_11, %c0_12] : memref<16x1xf32, #tpu.memory_space<vmem>>, vector<16x1xf32>
    %24 = vector.broadcast %23 : vector<16x1xf32> to vector<16x8xf32>
    %25 = arith.mulf %22, %24 : vector<16x8xf32>
    %c0_13 = arith.constant 0 : index
    %c0_14 = arith.constant 0 : index
    %26 = vector.load %arg5[%c0_13, %c0_14] : memref<16x1xf32, #tpu.memory_space<vmem>>, vector<16x1xf32>
    %27 = vector.broadcast %26 : vector<16x1xf32> to vector<16x8xf32>
    %28 = arith.addf %25, %27 : vector<16x8xf32>
    %cst_15 = arith.constant 0.000000e+00 : f32
    %29 = vector.broadcast %cst_15 : f32 to vector<16x8xf32>
    %30 = arith.cmpf oge, %28, %29 : vector<16x8xf32>
    %cst_16 = arith.constant 0.00999999977 : f32
    %31 = vector.broadcast %cst_16 : f32 to vector<16x8xf32>
    %32 = arith.mulf %31, %28 : vector<16x8xf32>
    %33 = arith.select %30, %28, %32 : vector<16x8xi1>, vector<16x8xf32>
    %c0_17 = arith.constant 0 : index
    %c0_18 = arith.constant 0 : index
    %c0_19 = arith.constant 0 : index
    %34 = vector.load %arg6[%c0_17, %c0_18, %c0_19] : memref<1x16x8xf32, #tpu.memory_space<vmem>>, vector<1x16x8xf32>
    %35 = vector.shape_cast %34 : vector<1x16x8xf32> to vector<16x8xf32>
    %36 = vector.shape_cast %33 : vector<16x8xf32> to vector<1x16x8xf32>
    tpu.vector_store %arg6[%c0_17, %c0_18, %c0_19], %36 {strides = array<i32>} : memref<1x16x8xf32, #tpu.memory_space<vmem>>, vector<1x16x8xf32>,
    return
  }
  func.func @transform_0(%arg0: i32) -> (i32, i32) {
    %c0_i32 = arith.constant 0 : i32
    %c0_i32_0 = arith.constant 0 : i32
    %c0_i32_1 = arith.constant 0 : i32
    return %c0_i32, %c0_i32_0 : i32, i32
  }
  func.func @transform_1(%arg0: i32) -> (i32, i32, i32) {
    %c0_i32 = arith.constant 0 : i32
    %c0_i32_0 = arith.constant 0 : i32
    %c0_i32_1 = arith.constant 0 : i32
    return %arg0, %c0_i32, %c0_i32_0 : i32, i32, i32
  }
  func.func @transform_2(%arg0: i32) -> (i32, i32) {
    %c0_i32 = arith.constant 0 : i32
    %c0_i32_0 = arith.constant 0 : i32
    %c0_i32_1 = arith.constant 0 : i32
    return %c0_i32, %c0_i32_0 : i32, i32
  }
  func.func @transform_3(%arg0: i32) -> (i32, i32) {
    %c0_i32 = arith.constant 0 : i32
    %c0_i32_0 = arith.constant 0 : i32
    %c0_i32_1 = arith.constant 0 : i32
    return %c0_i32, %c0_i32_0 : i32, i32
  }
  func.func @transform_4(%arg0: i32) -> (i32, i32) {
    %c0_i32 = arith.constant 0 : i32
    %c0_i32_0 = arith.constant 0 : i32
    %c0_i32_1 = arith.constant 0 : i32
    return %c0_i32, %c0_i32_0 : i32, i32
  }
  func.func @transform_5(%arg0: i32) -> (i32, i32, i32) {
    %c0_i32 = arith.constant 0 : i32
    %c0_i32_0 = arith.constant 0 : i32
    %c0_i32_1 = arith.constant 0 : i32
    return %arg0, %c0_i32, %c0_i32_0 : i32, i32, i32
  }
}

module attributes {stable_mosaic.version = 11 : i64} {
  func.func @_conv_in_lrelu_lat_kernel(%arg0: i32, %arg1: memref<16x432xbf16, #tpu.memory_space<vmem>>, %arg2: memref<1x432x8xbf16, #tpu.memory_space<vmem>>, %arg3: memref<16x1xf32, #tpu.memory_space<vmem>>, %arg4: memref<16x1xf32, #tpu.memory_space<vmem>>, %arg5: memref<16x1xf32, #tpu.memory_space<vmem>>, %arg6: memref<8x16xf32, #tpu.memory_space<vmem>>, %arg7: memref<8x1xf32, #tpu.memory_space<vmem>>, %arg8: memref<1x16x8xf32, #tpu.memory_space<vmem>>, %arg9: memref<1x8x8xf32, #tpu.memory_space<vmem>>) attributes {dimension_semantics = [#tpu.dimension_semantics<parallel>], iteration_bounds = array<i64: 2>, scalar_prefetch = 0 : i64, scratch_operands = 0 : i64, tpu.core_type = #tpu.core_type<tc>, window_params = [{pipeline_mode = #tpu.pipeline_mode<synchronous>, transform_indices = @transform_0, window_bounds = array<i64: 16, 432>}, {transform_indices = @transform_1, window_bounds = array<i64: 1, 432, 8>}, {pipeline_mode = #tpu.pipeline_mode<synchronous>, transform_indices = @transform_2, window_bounds = array<i64: 16, 1>}, {pipeline_mode = #tpu.pipeline_mode<synchronous>, transform_indices = @transform_3, window_bounds = array<i64: 16, 1>}, {pipeline_mode = #tpu.pipeline_mode<synchronous>, transform_indices = @transform_4, window_bounds = array<i64: 16, 1>}, {pipeline_mode = #tpu.pipeline_mode<synchronous>, transform_indices = @transform_5, window_bounds = array<i64: 8, 16>}, {pipeline_mode = #tpu.pipeline_mode<synchronous>, transform_indices = @transform_6, window_bounds = array<i64: 8, 1>}, {transform_indices = @transform_7, window_bounds = array<i64: 1, 16, 8>}, {transform_indices = @transform_8, window_bounds = array<i64: 1, 8, 8>}]} {
    %c0 = arith.constant 0 : index
    %c0_0 = arith.constant 0 : index
    %0 = vector.load %arg1[%c0, %c0_0] : memref<16x432xbf16, #tpu.memory_space<vmem>>, vector<16x432xbf16>
    %c0_1 = arith.constant 0 : index
    %c0_2 = arith.constant 0 : index
    %c0_3 = arith.constant 0 : index
    %1 = vector.load %arg2[%c0_1, %c0_2, %c0_3] : memref<1x432x8xbf16, #tpu.memory_space<vmem>>, vector<1x432x8xbf16>
    %2 = vector.shape_cast %1 : vector<1x432x8xbf16> to vector<432x8xbf16>
    %cst = arith.constant dense<0.000000e+00> : vector<16x8xf32>
    %3 = tpu.matmul %0, %2, %cst {dimension_numbers = #tpu.dot_dimension_numbers<[1], [0], [0], [1], [0, 0, 1, 1], [], []>} : vector<16x432xbf16>, vector<432x8xbf16>, vector<16x8xf32> -> vector<16x8xf32>
    %c0_4 = arith.constant 0 : index
    %c0_5 = arith.constant 0 : index
    %4 = vector.load %arg3[%c0_4, %c0_5] : memref<16x1xf32, #tpu.memory_space<vmem>>, vector<16x1xf32>
    %5 = vector.broadcast %4 : vector<16x1xf32> to vector<16x8xf32>
    %6 = arith.addf %3, %5 : vector<16x8xf32>
    %cst_6 = arith.constant dense<0.000000e+00> : vector<16xf32>
    %7 = vector.multi_reduction <add>, %6, %cst_6 [1] : vector<16x8xf32> to vector<16xf32>
    %8 = vector.shape_cast %7 : vector<16xf32> to vector<16x1xf32>
    %cst_7 = arith.constant 8.000000e+00 : f32
    %9 = vector.broadcast %cst_7 : f32 to vector<16x1xf32>
    %10 = arith.divf %8, %9 : vector<16x1xf32>
    %11 = vector.broadcast %10 : vector<16x1xf32> to vector<16x8xf32>
    %12 = arith.subf %6, %11 : vector<16x8xf32>
    %13 = arith.mulf %12, %12 : vector<16x8xf32>
    %cst_8 = arith.constant dense<0.000000e+00> : vector<16xf32>
    %14 = vector.multi_reduction <add>, %13, %cst_8 [1] : vector<16x8xf32> to vector<16xf32>
    %15 = vector.shape_cast %14 : vector<16xf32> to vector<16x1xf32>
    %cst_9 = arith.constant 8.000000e+00 : f32
    %16 = vector.broadcast %cst_9 : f32 to vector<16x1xf32>
    %17 = arith.divf %15, %16 : vector<16x1xf32>
    %cst_10 = arith.constant 9.99999974E-6 : f32
    %18 = vector.broadcast %cst_10 : f32 to vector<16x1xf32>
    %19 = arith.addf %17, %18 : vector<16x1xf32>
    %20 = math.rsqrt %19 : vector<16x1xf32>
    %21 = vector.broadcast %20 : vector<16x1xf32> to vector<16x8xf32>
    %22 = arith.mulf %12, %21 : vector<16x8xf32>
    %c0_11 = arith.constant 0 : index
    %c0_12 = arith.constant 0 : index
    %23 = vector.load %arg4[%c0_11, %c0_12] : memref<16x1xf32, #tpu.memory_space<vmem>>, vector<16x1xf32>
    %24 = vector.broadcast %23 : vector<16x1xf32> to vector<16x8xf32>
    %25 = arith.mulf %22, %24 : vector<16x8xf32>
    %c0_13 = arith.constant 0 : index
    %c0_14 = arith.constant 0 : index
    %26 = vector.load %arg5[%c0_13, %c0_14] : memref<16x1xf32, #tpu.memory_space<vmem>>, vector<16x1xf32>
    %27 = vector.broadcast %26 : vector<16x1xf32> to vector<16x8xf32>
    %28 = arith.addf %25, %27 : vector<16x8xf32>
    %cst_15 = arith.constant 0.000000e+00 : f32
    %29 = vector.broadcast %cst_15 : f32 to vector<16x8xf32>
    %30 = arith.cmpf oge, %28, %29 : vector<16x8xf32>
    %cst_16 = arith.constant 0.00999999977 : f32
    %31 = vector.broadcast %cst_16 : f32 to vector<16x8xf32>
    %32 = arith.mulf %31, %28 : vector<16x8xf32>
    %33 = arith.select %30, %28, %32 : vector<16x8xi1>, vector<16x8xf32>
    %c0_17 = arith.constant 0 : index
    %c0_18 = arith.constant 0 : index
    %c0_19 = arith.constant 0 : index
    %34 = vector.load %arg8[%c0_17, %c0_18, %c0_19] : memref<1x16x8xf32, #tpu.memory_space<vmem>>, vector<1x16x8xf32>
    %35 = vector.shape_cast %34 : vector<1x16x8xf32> to vector<16x8xf32>
    %36 = vector.shape_cast %33 : vector<16x8xf32> to vector<1x16x8xf32>
    tpu.vector_store %arg8[%c0_17, %c0_18, %c0_19], %36 {strides = array<i32>} : memref<1x16x8xf32, #tpu.memory_space<vmem>>, vector<1x16x8xf32>,
    %c0_20 = arith.constant 0 : index
    %c0_21 = arith.constant 0 : index
    %37 = vector.load %arg6[%c0_20, %c0_21] : memref<8x16xf32, #tpu.memory_space<vmem>>, vector<8x16xf32>
    %cst_22 = arith.constant dense<0.000000e+00> : vector<8x8xf32>
    %38 = tpu.matmul %37, %33, %cst_22 {dimension_numbers = #tpu.dot_dimension_numbers<[1], [0], [0], [1], [0, 0, 1, 1], [], []>} : vector<8x16xf32>, vector<16x8xf32>, vector<8x8xf32> -> vector<8x8xf32>
    %c0_23 = arith.constant 0 : index
    %c0_24 = arith.constant 0 : index
    %39 = vector.load %arg7[%c0_23, %c0_24] : memref<8x1xf32, #tpu.memory_space<vmem>>, vector<8x1xf32>
    %40 = vector.broadcast %39 : vector<8x1xf32> to vector<8x8xf32>
    %41 = arith.addf %38, %40 : vector<8x8xf32>
    %c0_25 = arith.constant 0 : index
    %c0_26 = arith.constant 0 : index
    %c0_27 = arith.constant 0 : index
    %42 = vector.load %arg9[%c0_25, %c0_26, %c0_27] : memref<1x8x8xf32, #tpu.memory_space<vmem>>, vector<1x8x8xf32>
    %43 = vector.shape_cast %42 : vector<1x8x8xf32> to vector<8x8xf32>
    %44 = vector.shape_cast %41 : vector<8x8xf32> to vector<1x8x8xf32>
    tpu.vector_store %arg9[%c0_25, %c0_26, %c0_27], %44 {strides = array<i32>} : memref<1x8x8xf32, #tpu.memory_space<vmem>>, vector<1x8x8xf32>,
    return
  }
  func.func @transform_0(%arg0: i32) -> (i32, i32) {
    %c0_i32 = arith.constant 0 : i32
    %c0_i32_0 = arith.constant 0 : i32
    %c0_i32_1 = arith.constant 0 : i32
    return %c0_i32, %c0_i32_0 : i32, i32
  }
  func.func @transform_1(%arg0: i32) -> (i32, i32, i32) {
    %c0_i32 = arith.constant 0 : i32
    %c0_i32_0 = arith.constant 0 : i32
    %c0_i32_1 = arith.constant 0 : i32
    return %arg0, %c0_i32, %c0_i32_0 : i32, i32, i32
  }
  func.func @transform_2(%arg0: i32) -> (i32, i32) {
    %c0_i32 = arith.constant 0 : i32
    %c0_i32_0 = arith.constant 0 : i32
    %c0_i32_1 = arith.constant 0 : i32
    return %c0_i32, %c0_i32_0 : i32, i32
  }
  func.func @transform_3(%arg0: i32) -> (i32, i32) {
    %c0_i32 = arith.constant 0 : i32
    %c0_i32_0 = arith.constant 0 : i32
    %c0_i32_1 = arith.constant 0 : i32
    return %c0_i32, %c0_i32_0 : i32, i32
  }
  func.func @transform_4(%arg0: i32) -> (i32, i32) {
    %c0_i32 = arith.constant 0 : i32
    %c0_i32_0 = arith.constant 0 : i32
    %c0_i32_1 = arith.constant 0 : i32
    return %c0_i32, %c0_i32_0 : i32, i32
  }
  func.func @transform_5(%arg0: i32) -> (i32, i32) {
    %c0_i32 = arith.constant 0 : i32
    %c0_i32_0 = arith.constant 0 : i32
    %c0_i32_1 = arith.constant 0 : i32
    return %c0_i32, %c0_i32_0 : i32, i32
  }
  func.func @transform_6(%arg0: i32) -> (i32, i32) {
    %c0_i32 = arith.constant 0 : i32
    %c0_i32_0 = arith.constant 0 : i32
    %c0_i32_1 = arith.constant 0 : i32
    return %c0_i32, %c0_i32_0 : i32, i32
  }
  func.func @transform_7(%arg0: i32) -> (i32, i32, i32) {
    %c0_i32 = arith.constant 0 : i32
    %c0_i32_0 = arith.constant 0 : i32
    %c0_i32_1 = arith.constant 0 : i32
    return %arg0, %c0_i32, %c0_i32_0 : i32, i32, i32
  }
  func.func @transform_8(%arg0: i32) -> (i32, i32, i32) {
    %c0_i32 = arith.constant 0 : i32
    %c0_i32_0 = arith.constant 0 : i32
    %c0_i32_1 = arith.constant 0 : i32
    return %arg0, %c0_i32, %c0_i32_0 : i32, i32, i32
  }
}

module attributes {stable_mosaic.version = 11 : i64} {
  func.func @_conv_bias_kernel(%arg0: i32, %arg1: memref<8x216xbf16, #tpu.memory_space<vmem>>, %arg2: memref<1x216x8xbf16, #tpu.memory_space<vmem>>, %arg3: memref<8x1xf32, #tpu.memory_space<vmem>>, %arg4: memref<1x8x8xf32, #tpu.memory_space<vmem>>) attributes {dimension_semantics = [#tpu.dimension_semantics<parallel>], iteration_bounds = array<i64: 2>, scalar_prefetch = 0 : i64, scratch_operands = 0 : i64, tpu.core_type = #tpu.core_type<tc>, window_params = [{pipeline_mode = #tpu.pipeline_mode<synchronous>, transform_indices = @transform_0, window_bounds = array<i64: 8, 216>}, {transform_indices = @transform_1, window_bounds = array<i64: 1, 216, 8>}, {pipeline_mode = #tpu.pipeline_mode<synchronous>, transform_indices = @transform_2, window_bounds = array<i64: 8, 1>}, {transform_indices = @transform_3, window_bounds = array<i64: 1, 8, 8>}]} {
    %c0 = arith.constant 0 : index
    %c0_0 = arith.constant 0 : index
    %0 = vector.load %arg1[%c0, %c0_0] : memref<8x216xbf16, #tpu.memory_space<vmem>>, vector<8x216xbf16>
    %c0_1 = arith.constant 0 : index
    %c0_2 = arith.constant 0 : index
    %c0_3 = arith.constant 0 : index
    %1 = vector.load %arg2[%c0_1, %c0_2, %c0_3] : memref<1x216x8xbf16, #tpu.memory_space<vmem>>, vector<1x216x8xbf16>
    %2 = vector.shape_cast %1 : vector<1x216x8xbf16> to vector<216x8xbf16>
    %cst = arith.constant dense<0.000000e+00> : vector<8x8xf32>
    %3 = tpu.matmul %0, %2, %cst {dimension_numbers = #tpu.dot_dimension_numbers<[1], [0], [0], [1], [0, 0, 1, 1], [], []>} : vector<8x216xbf16>, vector<216x8xbf16>, vector<8x8xf32> -> vector<8x8xf32>
    %c0_4 = arith.constant 0 : index
    %c0_5 = arith.constant 0 : index
    %4 = vector.load %arg3[%c0_4, %c0_5] : memref<8x1xf32, #tpu.memory_space<vmem>>, vector<8x1xf32>
    %5 = vector.broadcast %4 : vector<8x1xf32> to vector<8x8xf32>
    %6 = arith.addf %3, %5 : vector<8x8xf32>
    %c0_6 = arith.constant 0 : index
    %c0_7 = arith.constant 0 : index
    %c0_8 = arith.constant 0 : index
    %7 = vector.load %arg4[%c0_6, %c0_7, %c0_8] : memref<1x8x8xf32, #tpu.memory_space<vmem>>, vector<1x8x8xf32>
    %8 = vector.shape_cast %7 : vector<1x8x8xf32> to vector<8x8xf32>
    %9 = vector.shape_cast %6 : vector<8x8xf32> to vector<1x8x8xf32>
    tpu.vector_store %arg4[%c0_6, %c0_7, %c0_8], %9 {strides = array<i32>} : memref<1x8x8xf32, #tpu.memory_space<vmem>>, vector<1x8x8xf32>,
    return
  }
  func.func @transform_0(%arg0: i32) -> (i32, i32) {
    %c0_i32 = arith.constant 0 : i32
    %c0_i32_0 = arith.constant 0 : i32
    %c0_i32_1 = arith.constant 0 : i32
    return %c0_i32, %c0_i32_0 : i32, i32
  }
  func.func @transform_1(%arg0: i32) -> (i32, i32, i32) {
    %c0_i32 = arith.constant 0 : i32
    %c0_i32_0 = arith.constant 0 : i32
    %c0_i32_1 = arith.constant 0 : i32
    return %arg0, %c0_i32, %c0_i32_0 : i32, i32, i32
  }
  func.func @transform_2(%arg0: i32) -> (i32, i32) {
    %c0_i32 = arith.constant 0 : i32
    %c0_i32_0 = arith.constant 0 : i32
    %c0_i32_1 = arith.constant 0 : i32
    return %c0_i32, %c0_i32_0 : i32, i32
  }
  func.func @transform_3(%arg0: i32) -> (i32, i32, i32) {
    %c0_i32 = arith.constant 0 : i32
    %c0_i32_0 = arith.constant 0 : i32
    %c0_i32_1 = arith.constant 0 : i32
    return %arg0, %c0_i32, %c0_i32_0 : i32, i32, i32
  }
}

module attributes {stable_mosaic.version = 11 : i64} {
  func.func @_conv_bias_kernel(%arg0: i32, %arg1: memref<64x8xbf16, #tpu.memory_space<vmem>>, %arg2: memref<1x8x8xbf16, #tpu.memory_space<vmem>>, %arg3: memref<64x1xf32, #tpu.memory_space<vmem>>, %arg4: memref<1x64x8xf32, #tpu.memory_space<vmem>>) attributes {dimension_semantics = [#tpu.dimension_semantics<parallel>], iteration_bounds = array<i64: 2>, scalar_prefetch = 0 : i64, scratch_operands = 0 : i64, tpu.core_type = #tpu.core_type<tc>, window_params = [{pipeline_mode = #tpu.pipeline_mode<synchronous>, transform_indices = @transform_0, window_bounds = array<i64: 64, 8>}, {transform_indices = @transform_1, window_bounds = array<i64: 1, 8, 8>}, {pipeline_mode = #tpu.pipeline_mode<synchronous>, transform_indices = @transform_2, window_bounds = array<i64: 64, 1>}, {transform_indices = @transform_3, window_bounds = array<i64: 1, 64, 8>}]} {
    %c0 = arith.constant 0 : index
    %c0_0 = arith.constant 0 : index
    %0 = vector.load %arg1[%c0, %c0_0] : memref<64x8xbf16, #tpu.memory_space<vmem>>, vector<64x8xbf16>
    %c0_1 = arith.constant 0 : index
    %c0_2 = arith.constant 0 : index
    %c0_3 = arith.constant 0 : index
    %1 = vector.load %arg2[%c0_1, %c0_2, %c0_3] : memref<1x8x8xbf16, #tpu.memory_space<vmem>>, vector<1x8x8xbf16>
    %2 = vector.shape_cast %1 : vector<1x8x8xbf16> to vector<8x8xbf16>
    %cst = arith.constant dense<0.000000e+00> : vector<64x8xf32>
    %3 = tpu.matmul %0, %2, %cst {dimension_numbers = #tpu.dot_dimension_numbers<[1], [0], [0], [1], [0, 0, 1, 1], [], []>} : vector<64x8xbf16>, vector<8x8xbf16>, vector<64x8xf32> -> vector<64x8xf32>
    %c0_4 = arith.constant 0 : index
    %c0_5 = arith.constant 0 : index
    %4 = vector.load %arg3[%c0_4, %c0_5] : memref<64x1xf32, #tpu.memory_space<vmem>>, vector<64x1xf32>
    %5 = vector.broadcast %4 : vector<64x1xf32> to vector<64x8xf32>
    %6 = arith.addf %3, %5 : vector<64x8xf32>
    %c0_6 = arith.constant 0 : index
    %c0_7 = arith.constant 0 : index
    %c0_8 = arith.constant 0 : index
    %7 = vector.load %arg4[%c0_6, %c0_7, %c0_8] : memref<1x64x8xf32, #tpu.memory_space<vmem>>, vector<1x64x8xf32>
    %8 = vector.shape_cast %7 : vector<1x64x8xf32> to vector<64x8xf32>
    %9 = vector.shape_cast %6 : vector<64x8xf32> to vector<1x64x8xf32>
    tpu.vector_store %arg4[%c0_6, %c0_7, %c0_8], %9 {strides = array<i32>} : memref<1x64x8xf32, #tpu.memory_space<vmem>>, vector<1x64x8xf32>,
    return
  }
  func.func @transform_0(%arg0: i32) -> (i32, i32) {
    %c0_i32 = arith.constant 0 : i32
    %c0_i32_0 = arith.constant 0 : i32
    %c0_i32_1 = arith.constant 0 : i32
    return %c0_i32, %c0_i32_0 : i32, i32
  }
  func.func @transform_1(%arg0: i32) -> (i32, i32, i32) {
    %c0_i32 = arith.constant 0 : i32
    %c0_i32_0 = arith.constant 0 : i32
    %c0_i32_1 = arith.constant 0 : i32
    return %arg0, %c0_i32, %c0_i32_0 : i32, i32, i32
  }
  func.func @transform_2(%arg0: i32) -> (i32, i32) {
    %c0_i32 = arith.constant 0 : i32
    %c0_i32_0 = arith.constant 0 : i32
    %c0_i32_1 = arith.constant 0 : i32
    return %c0_i32, %c0_i32_0 : i32, i32
  }
  func.func @transform_3(%arg0: i32) -> (i32, i32, i32) {
    %c0_i32 = arith.constant 0 : i32
    %c0_i32_0 = arith.constant 0 : i32
    %c0_i32_1 = arith.constant 0 : i32
    return %arg0, %c0_i32, %c0_i32_0 : i32, i32, i32
  }
}

module attributes {stable_mosaic.version = 11 : i64} {
  func.func @_conv_bias_kernel(%arg0: i32, %arg1: memref<8x216xbf16, #tpu.memory_space<vmem>>, %arg2: memref<1x216x64xbf16, #tpu.memory_space<vmem>>, %arg3: memref<8x1xf32, #tpu.memory_space<vmem>>, %arg4: memref<1x8x64xf32, #tpu.memory_space<vmem>>) attributes {dimension_semantics = [#tpu.dimension_semantics<parallel>], iteration_bounds = array<i64: 2>, scalar_prefetch = 0 : i64, scratch_operands = 0 : i64, tpu.core_type = #tpu.core_type<tc>, window_params = [{pipeline_mode = #tpu.pipeline_mode<synchronous>, transform_indices = @transform_0, window_bounds = array<i64: 8, 216>}, {transform_indices = @transform_1, window_bounds = array<i64: 1, 216, 64>}, {pipeline_mode = #tpu.pipeline_mode<synchronous>, transform_indices = @transform_2, window_bounds = array<i64: 8, 1>}, {transform_indices = @transform_3, window_bounds = array<i64: 1, 8, 64>}]} {
    %c0 = arith.constant 0 : index
    %c0_0 = arith.constant 0 : index
    %0 = vector.load %arg1[%c0, %c0_0] : memref<8x216xbf16, #tpu.memory_space<vmem>>, vector<8x216xbf16>
    %c0_1 = arith.constant 0 : index
    %c0_2 = arith.constant 0 : index
    %c0_3 = arith.constant 0 : index
    %1 = vector.load %arg2[%c0_1, %c0_2, %c0_3] : memref<1x216x64xbf16, #tpu.memory_space<vmem>>, vector<1x216x64xbf16>
    %2 = vector.shape_cast %1 : vector<1x216x64xbf16> to vector<216x64xbf16>
    %cst = arith.constant dense<0.000000e+00> : vector<8x64xf32>
    %3 = tpu.matmul %0, %2, %cst {dimension_numbers = #tpu.dot_dimension_numbers<[1], [0], [0], [1], [0, 0, 1, 1], [], []>} : vector<8x216xbf16>, vector<216x64xbf16>, vector<8x64xf32> -> vector<8x64xf32>
    %c0_4 = arith.constant 0 : index
    %c0_5 = arith.constant 0 : index
    %4 = vector.load %arg3[%c0_4, %c0_5] : memref<8x1xf32, #tpu.memory_space<vmem>>, vector<8x1xf32>
    %5 = vector.broadcast %4 : vector<8x1xf32> to vector<8x64xf32>
    %6 = arith.addf %3, %5 : vector<8x64xf32>
    %c0_6 = arith.constant 0 : index
    %c0_7 = arith.constant 0 : index
    %c0_8 = arith.constant 0 : index
    %7 = vector.load %arg4[%c0_6, %c0_7, %c0_8] : memref<1x8x64xf32, #tpu.memory_space<vmem>>, vector<1x8x64xf32>
    %8 = vector.shape_cast %7 : vector<1x8x64xf32> to vector<8x64xf32>
    %9 = vector.shape_cast %6 : vector<8x64xf32> to vector<1x8x64xf32>
    tpu.vector_store %arg4[%c0_6, %c0_7, %c0_8], %9 {strides = array<i32>} : memref<1x8x64xf32, #tpu.memory_space<vmem>>, vector<1x8x64xf32>,
    return
  }
  func.func @transform_0(%arg0: i32) -> (i32, i32) {
    %c0_i32 = arith.constant 0 : i32
    %c0_i32_0 = arith.constant 0 : i32
    %c0_i32_1 = arith.constant 0 : i32
    return %c0_i32, %c0_i32_0 : i32, i32
  }
  func.func @transform_1(%arg0: i32) -> (i32, i32, i32) {
    %c0_i32 = arith.constant 0 : i32
    %c0_i32_0 = arith.constant 0 : i32
    %c0_i32_1 = arith.constant 0 : i32
    return %arg0, %c0_i32, %c0_i32_0 : i32, i32, i32
  }
  func.func @transform_2(%arg0: i32) -> (i32, i32) {
    %c0_i32 = arith.constant 0 : i32
    %c0_i32_0 = arith.constant 0 : i32
    %c0_i32_1 = arith.constant 0 : i32
    return %c0_i32, %c0_i32_0 : i32, i32
  }
  func.func @transform_3(%arg0: i32) -> (i32, i32, i32) {
    %c0_i32 = arith.constant 0 : i32
    %c0_i32_0 = arith.constant 0 : i32
    %c0_i32_1 = arith.constant 0 : i32
    return %arg0, %c0_i32, %c0_i32_0 : i32, i32, i32
  }
}

</mosaic_0001>

<llo_original>
// kernel: attn_fpn_forward.9
$region0: #{attn_fpn_forward.9}
  #allocation0 [shape = 'u32[]', space=smem, size = 0x4, offset = 0x4, fixed_abs, tag = 'smem constant byte address 0x4 - core index']
  #allocation1 [shape = 'u32[144,128]{1,0:T(1,128)}', space=vmem, size = 0x12000, scoped, tag = 'internal scratch']
  %s0 = inlined_call_operand.hbm [shape: bf16[4,32], index: 0, kind: input, shape index: {}]
  %s1 = inlined_call_operand.vmem [shape: bf16[2,32,512], index: 1, kind: input, shape index: {}]
  %s2 = inlined_call_operand.hbm [shape: f32[4,1], index: 2, kind: input, shape index: {}]
  %s3 = inlined_call_operand.vmem [shape: f32[4,1], index: 3, kind: input, shape index: {}]
  %s4 = inlined_call_operand.vmem [shape: f32[4,1], index: 4, kind: input, shape index: {}]
  %s5 = inlined_call_operand.vmem [shape: f32[2,4,512], index: 5, kind: output, shape index: {}]
  %s6 = sld [smem:[#allocation0]]
  $region61: #{attn_fpn_forward.9} parent=0
    _
  %s8 = ssub.s32 1, %s6
  %s9 = scalar_select 0, %s8, %s6
  $region1: #{attn_fpn_forward.9} parent=0
    #allocation2 [shape = 'u8[1024]{0}', space=vmem, size = 0x400, scoped, tag = 'input window, operand 0, single buffered']
    #allocation3 [shape = 's32[2]{0}', space=sflag, size = 0x8, scoped, tag = 'scoped memory for attn_fpn_forward.9']
    #allocation4 [shape = 'u8[2048]{0}', space=vmem, size = 0x800, scoped, tag = 'input window, operand 2, single buffered']
    #allocation5 [shape = 's32[1]{0}', space=sflag, size = 0x4, scoped, tag = 'scoped memory for attn_fpn_forward.9']
    %10 = vsyncpa [#allocation3], 0
    %11 = vsyncpa [#allocation5], 0
    loop: start=0, step=1, limit=4
    $region2: #{attn_fpn_forward.9} parent=1 // loop_pre_header
      _
    $region3: #{attn_fpn_forward.9} parent=1 // loop_header
      %s13 = sphi 0, %s17
      %p14 = scmp.ge.s32.totalorder %s13, 4
      %s21 = sphi 0, %s21
      %s23 = sphi 0, %s21
      %s24 = sphi 0, %s23
      %s38 = sphi 0, %s24
      %s44 = sphi 0, %s46
      %s47 = sphi 0, %s44
      %s48 = sphi 0, %s47
      %s64 = sphi 0, %s48
      %s68 = sphi 0, %s68
      %s70 = sphi 0, %s68
      %s71 = sphi 0, %s70
      %s85 = sphi 0, %s71
      %s89 = sphi 0, %s89
      %s91 = sphi 0, %s89
      %s92 = sphi 0, %s91
      %s106 = sphi 0, %s92
      %s110 = sphi 0, %s110
      %s112 = sphi 0, %s110
      %s113 = sphi 0, %s112
      %s127 = sphi 0, %s113
      %s133 = sphi 0, %s135
      %s136 = sphi 0, %s133
      %s137 = sphi 0, %s136
      %s153 = sphi 0, %s137
    $region4: #{attn_fpn_forward.9} parent=1 // loop_header_branch
      %16 = sbr.rel (%p14) target = $region8
    $region5: #{attn_fpn_forward.9} parent=1 // loop_body
      %s18 = ssub.s32 %s13, 1
      %s19 = ssub.s32 %s13, 2
      %s20 = sadd.s32 %s13, 1
      %s22 = sadd.s32 %s21, 1
      %p25 = scmp.eq.s32.totalorder %s13, 1
      %p26 = scmp.ne.s32.totalorder %s21, %s23
      %p27 = scmp.eq.s32.totalorder %s13, 0
      %p28 = por %p26, %p27
      %p29 = scmp.ne.s32.totalorder %s21, %s23
      %p30 = scmp.eq.s32.totalorder %s18, 1
      %p31 = por %p29, %p30
      %p32 = scmp.ne.s32.totalorder %s23, %s24
      %p33 = scmp.eq.s32.totalorder %s18, 0
      %p34 = por %p32, %p33
      %p35 = scmp.ne.s32.totalorder %s23, %s24
      %p36 = scmp.eq.s32.totalorder %s19, 1
      %p37 = por %p35, %p36
      %p39 = scmp.ne.s32.totalorder %s24, %s38
      %p40 = scmp.eq.s32.totalorder %s19, 0
      %p41 = por %p39, %p40
      %s42 = ssub.s32 %s13, %s20
      %p43 = scmp.eq.s32.totalorder %s42, 0
      %s45 = sadd.s32 %s44, 1
      %s46 = scalar_select %p43, %s44, %s45
      %p49 = pneg %p43
      %p50 = scmp.eq.s32.totalorder %s13, 1
      %p51 = por %p49, %p50
      %p52 = scmp.ne.s32.totalorder %s44, %s47
      %p53 = scmp.eq.s32.totalorder %s13, 0
      %p54 = por %p52, %p53
      %p55 = scmp.ne.s32.totalorder %s44, %s47
      %p56 = scmp.eq.s32.totalorder %s18, 1
      %p57 = por %p55, %p56
      %p58 = scmp.ne.s32.totalorder %s47, %s48
      %p59 = scmp.eq.s32.totalorder %s18, 0
      %p60 = por %p58, %p59
      %p61 = scmp.ne.s32.totalorder %s47, %s48
      %p62 = scmp.eq.s32.totalorder %s19, 1
      %p63 = por %p61, %p62
      %p65 = scmp.ne.s32.totalorder %s48, %s64
      %p66 = scmp.eq.s32.totalorder %s19, 0
      %p67 = por %p65, %p66
      %s69 = sadd.s32 %s68, 1
      %p72 = scmp.eq.s32.totalorder %s13, 1
      %p73 = scmp.ne.s32.totalorder %s68, %s70
      %p74 = scmp.eq.s32.totalorder %s13, 0
      %p75 = por %p73, %p74
      %p76 = scmp.ne.s32.totalorder %s68, %s70
      %p77 = scmp.eq.s32.totalorder %s18, 1
      %p78 = por %p76, %p77
      %p79 = scmp.ne.s32.totalorder %s70, %s71
      %p80 = scmp.eq.s32.totalorder %s18, 0
      %p81 = por %p79, %p80
      %p82 = scmp.ne.s32.totalorder %s70, %s71
      %p83 = scmp.eq.s32.totalorder %s19, 1
      %p84 = por %p82, %p83
      %p86 = scmp.ne.s32.totalorder %s71, %s85
      %p87 = scmp.eq.s32.totalorder %s19, 0
      %p88 = por %p86, %p87
      %s90 = sadd.s32 %s89, 1
      %p93 = scmp.eq.s32.totalorder %s13, 1
      %p94 = scmp.ne.s32.totalorder %s89, %s91
      %p95 = scmp.eq.s32.totalorder %s13, 0
      %p96 = por %p94, %p95
      %p97 = scmp.ne.s32.totalorder %s89, %s91
      %p98 = scmp.eq.s32.totalorder %s18, 1
      %p99 = por %p97, %p98
      %p100 = scmp.ne.s32.totalorder %s91, %s92
      %p101 = scmp.eq.s32.totalorder %s18, 0
      %p102 = por %p100, %p101
      %p103 = scmp.ne.s32.totalorder %s91, %s92
      %p104 = scmp.eq.s32.totalorder %s19, 1
      %p105 = por %p103, %p104
      %p107 = scmp.ne.s32.totalorder %s92, %s106
      %p108 = scmp.eq.s32.totalorder %s19, 0
      %p109 = por %p107, %p108
      %s111 = sadd.s32 %s110, 1
      %p114 = scmp.eq.s32.totalorder %s13, 1
      %p115 = scmp.ne.s32.totalorder %s110, %s112
      %p116 = scmp.eq.s32.totalorder %s13, 0
      %p117 = por %p115, %p116
      %p118 = scmp.ne.s32.totalorder %s110, %s112
      %p119 = scmp.eq.s32.totalorder %s18, 1
      %p120 = por %p118, %p119
      %p121 = scmp.ne.s32.totalorder %s112, %s113
      %p122 = scmp.eq.s32.totalorder %s18, 0
      %p123 = por %p121, %p122
      %p124 = scmp.ne.s32.totalorder %s112, %s113
      %p125 = scmp.eq.s32.totalorder %s19, 1
      %p126 = por %p124, %p125
      %p128 = scmp.ne.s32.totalorder %s113, %s127
      %p129 = scmp.eq.s32.totalorder %s19, 0
      %p130 = por %p128, %p129
      %s131 = ssub.s32 %s13, %s20
      %p132 = scmp.eq.s32.totalorder %s131, 0
      %s134 = sadd.s32 %s133, 1
      %s135 = scalar_select %p132, %s133, %s134
      %p138 = pneg %p132
      %p139 = scmp.eq.s32.totalorder %s13, 1
      %p140 = por %p138, %p139
      %p141 = scmp.ne.s32.totalorder %s133, %s136
      %p142 = scmp.eq.s32.totalorder %s13, 0
      %p143 = por %p141, %p142
      %p144 = scmp.ne.s32.totalorder %s133, %s136
      %p145 = scmp.eq.s32.totalorder %s18, 1
      %p146 = por %p144, %p145
      %p147 = scmp.ne.s32.totalorder %s136, %s137
      %p148 = scmp.eq.s32.totalorder %s18, 0
      %p149 = por %p147, %p148
      %p150 = scmp.ne.s32.totalorder %s136, %s137
      %p151 = scmp.eq.s32.totalorder %s19, 1
      %p152 = por %p150, %p151
      %p154 = scmp.ne.s32.totalorder %s137, %s153
      %p155 = scmp.eq.s32.totalorder %s19, 0
      %p156 = por %p154, %p155
      %p157 = scmp.le.s32.totalorder 1, %s13
      %p158 = scmp.lt.s32.totalorder %s13, 3
      %p159 = pnand %p157, %p158
      %p160 = pneg %p159
      // Predicated region
      $region9: #{attn_fpn_forward.9} parent=5 // pred_check
        _
      $region10: #{attn_fpn_forward.9} parent=5 // pred_check_branch
        %162 = sbr.rel (%p159) target = $region12
      $region11: #{attn_fpn_forward.9} parent=5 // pred_region
        %s163 = ssub.s32 %s13, 1
        // Predicated region
        $region13: #{attn_fpn_forward.9} parent=11 // pred_check
          %p164 = pneg %p34
        $region14: #{attn_fpn_forward.9} parent=11 // pred_check_branch
          %166 = sbr.rel (%p164) target = $region16
        $region15: #{attn_fpn_forward.9} parent=11 // pred_region
          %s168 = ssub.s32 32, 32
          %169 = vsyncadd [#allocation3], %s168
          %s171 = sshll.u32 [#allocation2], 4
          %s172 = int_to_ptr.vmem [resolvable:$true] %s171
          %174 = dma.hbm_to_vmem [thread:$0]  %s0, 32, %s172, [#allocation3]
        $region16: #{attn_fpn_forward.9} parent=11 // pred_fallthru
          _
        // Predicated region
        $region17: #{attn_fpn_forward.9} parent=11 // pred_check
          %p175 = pneg %p81
        $region18: #{attn_fpn_forward.9} parent=11 // pred_check_branch
          %177 = sbr.rel (%p175) target = $region20
        $region19: #{attn_fpn_forward.9} parent=11 // pred_region
          %s179 = ssub.s32 64, 64
          %180 = vsyncadd [#allocation5], %s179
          %s182 = sshll.u32 [#allocation4], 4
          %s183 = int_to_ptr.vmem [resolvable:$true] %s182
          %185 = dma.hbm_to_vmem [thread:$0]  %s2, 64, %s183, [#allocation5]
        $region20: #{attn_fpn_forward.9} parent=11 // pred_fallthru
          _
        // Predicated region
        $region21: #{attn_fpn_forward.9} parent=11 // pred_check
          %p186 = pneg %p102
        $region22: #{attn_fpn_forward.9} parent=11 // pred_check_branch
          %188 = sbr.rel (%p186) target = $region24
        $region23: #{attn_fpn_forward.9} parent=11 // pred_region
          _
        $region24: #{attn_fpn_forward.9} parent=11 // pred_fallthru
          _
        // Predicated region
        $region25: #{attn_fpn_forward.9} parent=11 // pred_check
          %p189 = pneg %p123
        $region26: #{attn_fpn_forward.9} parent=11 // pred_check_branch
          %191 = sbr.rel (%p189) target = $region28
        $region27: #{attn_fpn_forward.9} parent=11 // pred_region
          _
        $region28: #{attn_fpn_forward.9} parent=11 // pred_fallthru
          _
      $region12: #{attn_fpn_forward.9} parent=5 // pred_fallthru
        _
      %p192 = scmp.lt.s32.totalorder %s13, 2
      // Predicated region
      $region29: #{attn_fpn_forward.9} parent=5 // pred_check
        %p193 = pneg %p192
      $region30: #{attn_fpn_forward.9} parent=5 // pred_check_branch
        %195 = sbr.rel (%p193) target = $region32
      $region31: #{attn_fpn_forward.9} parent=5 // pred_region
        // Predicated region
        $region33: #{attn_fpn_forward.9} parent=31 // pred_check
          %p196 = pneg %p54
        $region34: #{attn_fpn_forward.9} parent=31 // pred_check_branch
          %198 = sbr.rel (%p196) target = $region36
        $region35: #{attn_fpn_forward.9} parent=31 // pred_region
          %p199 = scmp.lt.s32.totalorder %s13, 1
          %s200 = scalar_select %p199, %s13, 1
          %s201 = smul.addr %s200, 16
          %s202 = smul.addr %s201, 4
          %s203 = scalar_lea.vmem %s1, %s202
        $region36: #{attn_fpn_forward.9} parent=31 // pred_fallthru
          _
      $region32: #{attn_fpn_forward.9} parent=5 // pred_fallthru
        _
      %p204 = scmp.le.s32.totalorder 1, %s13
      %p205 = scmp.lt.s32.totalorder %s13, 3
      %p206 = pnand %p204, %p205
      %p207 = pneg %p206
      // Predicated region
      $region37: #{attn_fpn_forward.9} parent=5 // pred_check
        _
      $region38: #{attn_fpn_forward.9} parent=5 // pred_check_branch
        %209 = sbr.rel (%p206) target = $region40
      $region39: #{attn_fpn_forward.9} parent=5 // pred_region
        %s210 = ssub.s32 %s13, 1
        // Predicated region
        $region41: #{attn_fpn_forward.9} parent=39 // pred_check
          %p211 = pneg %p34
        $region42: #{attn_fpn_forward.9} parent=39 // pred_check_branch
          %213 = sbr.rel (%p211) target = $region44
        $region43: #{attn_fpn_forward.9} parent=39 // pred_region
          %214 = dma.done [#allocation3], 32
        $region44: #{attn_fpn_forward.9} parent=39 // pred_fallthru
          _
        // Predicated region
        $region45: #{attn_fpn_forward.9} parent=39 // pred_check
          %p215 = pneg %p81
        $region46: #{attn_fpn_forward.9} parent=39 // pred_check_branch
          %217 = sbr.rel (%p215) target = $region48
        $region47: #{attn_fpn_forward.9} parent=39 // pred_region
          %218 = dma.done [#allocation5], 64
        $region48: #{attn_fpn_forward.9} parent=39 // pred_fallthru
          _
        %p219 = pneg %p34
        %p220 = pneg %p31
        %p221 = scmp.lt.s32.totalorder %s18, 1
        %s222 = scalar_select %p221, %s18, 1
        %s223 = smul.addr %s222, 16
        %s224 = smul.addr %s223, 4
        %s225 = scalar_lea.vmem %s1, %s224
        %p226 = pneg %p60
        %p227 = pneg %p57
        %p228 = pneg %p81
        %p229 = pneg %p78
        %p230 = pneg %p102
        %p231 = pneg %p99
        %p232 = pneg %p123
        %p233 = pneg %p120
        %p234 = pneg %p149
        %p235 = pneg %p146
        %p236 = scmp.lt.s32.totalorder %s18, 1
        %s237 = scalar_select %p236, %s18, 1
        %s238 = smul.addr %s237, 4
        %s239 = smul.addr %s238, 4
        %s240 = scalar_lea.vmem %s5, %s239
        %p241 = scmp.lt.s32.totalorder %s18, 1
        %s242 = scalar_select %p241, %s18, 1
        %s243 = smul.addr %s242, 16
        %s244 = smul.addr %s243, 4
        %s245 = scalar_lea.vmem %s1, %s244
        %p246 = scmp.lt.s32.totalorder %s18, 1
        %s247 = scalar_select %p246, %s18, 1
        %s248 = smul.addr %s247, 4
        %s249 = smul.addr %s248, 4
        %s250 = scalar_lea.vmem %s5, %s249
        %v252 = vld [vmem:[#allocation2] sm:$0x3]
        %v253 = vld [vmem:[%s245] sm:$0xff]
        %v254 = vld [vmem:[%s245 + $0x8] sm:$0xff]
        %v255 = vld [vmem:[%s245 + $0x10] sm:$0xff]
        %v256 = vld [vmem:[%s245 + $0x18] sm:$0xff]
        %v257 = vld [vmem:[%s245 + $0x20] sm:$0xff]
        %v258 = vld [vmem:[%s245 + $0x28] sm:$0xff]
        %v259 = vld [vmem:[%s245 + $0x30] sm:$0xff]
        %v260 = vld [vmem:[%s245 + $0x38] sm:$0xff]
        %v261 = vld [vmem:[#allocation4] sm:$0xf]
        %263 = vset.pattern.permute.xlu0 0
        %264 = vperm.xlu0 %263, %v261
        %v265 = vpop.permute.xlu0 %264
        %v275 = vunpack.c.l.b16 %v253
        %v276 = vunpack.c.h.b16 %v253
        %v277 = vunpack.c.l.b16 %v254
        %v278 = vunpack.c.h.b16 %v254
        %v279 = vunpack.c.l.b16 %v255
        %v280 = vunpack.c.h.b16 %v255
        %v281 = vunpack.c.l.b16 %v256
        %v282 = vunpack.c.h.b16 %v256
        %v283 = vunpack.c.l.b16 %v257
        %v284 = vunpack.c.h.b16 %v257
        %v285 = vunpack.c.l.b16 %v258
        %v286 = vunpack.c.h.b16 %v258
        %v287 = vunpack.c.l.b16 %v259
        %v288 = vunpack.c.h.b16 %v259
        %v289 = vunpack.c.l.b16 %v260
        %v290 = vunpack.c.h.b16 %v260
        %v291 = vpack.c.b16 %v279, %v275
        %v292 = vpack.c.b16 %v280, %v276
        %v293 = vpack.c.b16 %v281, %v277
        %v294 = vpack.c.b16 %v282, %v278
        %v295 = vpack.c.b16 %v287, %v283
        %v296 = vpack.c.b16 %v288, %v284
        %v297 = vpack.c.b16 %v289, %v285
        %v298 = vpack.c.b16 %v290, %v286
        %vm307 = vcmask 261120
        %v309 = vsel %vm307, %v252, 0
        %311 = vmatprep.subr.bf16.mxu0 %v292
        %312 = vmatpush1.bf16.msra.mxu0 %v291
        %313 = vmatprep.subr.bf16.mxu0 %v296
        %314 = vmatpush1.bf16.msra.mxu0 %v295
        %315 = vmatprep.subr.bf16.mxu0 0
        %316 = vmatpush1.bf16.msra.mxu0 0
        %317 = vmatprep.subr.bf16.mxu0 0
        %318 = vmatpush1.bf16.msra.mxu0 0
        %319 = vmatprep.subr.bf16.mxu0 0
        %320 = vmatpush1.bf16.msra.mxu0 0
        %321 = vmatprep.subr.bf16.mxu0 0
        %322 = vmatpush1.bf16.msra.mxu0 0
        %323 = vmatprep.subr.bf16.mxu0 0
        %324 = vmatpush1.bf16.msra.mxu0 0
        %325 = vmatprep.subr.bf16.mxu0 0
        %326 = vmatpush1.bf16.msra.mxu0 0
        %327 = vmatprep.subr.bf16.mxu0 0
        %328 = vmatpush1.bf16.msra.mxu0 0
        %329 = vmatprep.subr.bf16.mxu0 0
        %330 = vmatpush1.bf16.msra.mxu0 0
        %331 = vmatprep.subr.bf16.mxu0 0
        %332 = vmatpush1.bf16.msra.mxu0 0
        %333 = vmatprep.subr.bf16.mxu0 0
        %334 = vmatpush1.bf16.msra.mxu0 0
        %335 = vmatprep.subr.bf16.mxu0 0
        %336 = vmatpush1.bf16.msra.mxu0 0
        %337 = vmatprep.subr.bf16.mxu0 0
        %338 = vmatpush1.bf16.msra.mxu0 0
        %339 = vmatprep.subr.bf16.mxu0 0
        %340 = vmatpush1.bf16.msra.mxu0 0
        %341 = vmatprep.subr.bf16.mxu0 0
        %342 = vmatpush1.bf16.msra.mxu0 0
        %343 = vmatprep.mubr.bf16.mxu0 0
        %344 = vmatmul.mubr.bf16.gmra.mrb[0].mxu0 %v309
        %v345 = vpop.f32.mrb[0].mxu0
        %v346 = vadd.f32 %v265, %v345
        %v347 = vpop.f32.mrb[0].mxu0
        %v348 = vadd.f32 %v265, %v347
        %v349 = vpop.f32.mrb[0].mxu0
        %v350 = vpop.f32.mrb[0].mxu0
        %351 = vdwg.mxu0
        %352 = vmatprep.subr.bf16.mxu0 %v294
        %353 = vmatpush1.bf16.msra.mxu0 %v293
        %354 = vmatprep.subr.bf16.mxu0 %v298
        %355 = vmatpush1.bf16.msra.mxu0 %v297
        %356 = vmatprep.subr.bf16.mxu0 0
        %357 = vmatpush1.bf16.msra.mxu0 0
        %358 = vmatprep.subr.bf16.mxu0 0
        %359 = vmatpush1.bf16.msra.mxu0 0
        %360 = vmatprep.subr.bf16.mxu0 0
        %361 = vmatpush1.bf16.msra.mxu0 0
        %362 = vmatprep.subr.bf16.mxu0 0
        %363 = vmatpush1.bf16.msra.mxu0 0
        %364 = vmatprep.subr.bf16.mxu0 0
        %365 = vmatpush1.bf16.msra.mxu0 0
        %366 = vmatprep.subr.bf16.mxu0 0
        %367 = vmatpush1.bf16.msra.mxu0 0
        %368 = vmatprep.subr.bf16.mxu0 0
        %369 = vmatpush1.bf16.msra.mxu0 0
        %370 = vmatprep.subr.bf16.mxu0 0
        %371 = vmatpush1.bf16.msra.mxu0 0
        %372 = vmatprep.subr.bf16.mxu0 0
        %373 = vmatpush1.bf16.msra.mxu0 0
        %374 = vmatprep.subr.bf16.mxu0 0
        %375 = vmatpush1.bf16.msra.mxu0 0
        %376 = vmatprep.subr.bf16.mxu0 0
        %377 = vmatpush1.bf16.msra.mxu0 0
        %378 = vmatprep.subr.bf16.mxu0 0
        %379 = vmatpush1.bf16.msra.mxu0 0
        %380 = vmatprep.subr.bf16.mxu0 0
        %381 = vmatpush1.bf16.msra.mxu0 0
        %382 = vmatprep.subr.bf16.mxu0 0
        %383 = vmatpush1.bf16.msra.mxu0 0
        %384 = vmatprep.mubr.bf16.mxu0 0
        %385 = vmatmul.mubr.bf16.gmra.mrb[0].mxu0 %v309
        %v386 = vpop.f32.mrb[0].mxu0
        %v387 = vadd.f32 %v265, %v386
        %v388 = vpop.f32.mrb[0].mxu0
        %v389 = vadd.f32 %v265, %v388
        %v390 = vpop.f32.mrb[0].mxu0
        %v391 = vpop.f32.mrb[0].mxu0
        %392 = vdwg.mxu0
        %vm393 = vcmask 1043456
        %v394 = vsel %vm393, %v346, 0.0
        %v395 = vsel %vm393, %v348, 0.0
        %v396 = vadd.f32 %v394, %v395
        %v397 = vsel %vm393, %v387, 0.0
        %v398 = vadd.f32 %v396, %v397
        %v399 = vsel %vm393, %v389, 0.0
        %v400 = vadd.f32 %v398, %v399
        %401 = vadd.xlane.f32.xlu0 %v400
        %v402 = vpop.xlane.xlu0 %401
        %v403 = vrcp.pop 512.0
        %v404 = vmul.f32 %v402, %v403
        %v405 = vsub.f32 %v346, %v404
        %v406 = vsub.f32 %v348, %v404
        %v407 = vsub.f32 %v387, %v404
        %v408 = vsub.f32 %v389, %v404
        %v409 = vmul.f32 %v405, %v405
        %v410 = vmul.f32 %v406, %v406
        %v411 = vmul.f32 %v407, %v407
        %v412 = vmul.f32 %v408, %v408
        %v413 = vsel %vm393, %v409, 0.0
        %v414 = vsel %vm393, %v410, 0.0
        %v415 = vadd.f32 %v413, %v414
        %v416 = vsel %vm393, %v411, 0.0
        %v417 = vadd.f32 %v415, %v416
        %v418 = vsel %vm393, %v412, 0.0
        %v419 = vadd.f32 %v417, %v418
        %420 = vadd.xlane.f32.xlu0 %v419
        %v421 = vpop.xlane.xlu0 %420
        %v422 = vmul.f32 %v421, %v403
        %v423 = vadd.f32 %v422, 1e-05
        %v424 = vrsqrt.pop %v423
        %v425 = vmul.f32 %v405, %v424
        %v426 = vmul.f32 %v406, %v424
        %v427 = vmul.f32 %v407, %v424
        %v428 = vmul.f32 %v408, %v424
        %v429 = vld [vmem:[%s3] sm:$0xf]
        %431 = vset.pattern.permute.xlu0 0
        %432 = vperm.xlu0 %431, %v429
        %v433 = vpop.permute.xlu0 %432
        %v435 = vmul.f32 %v425, %v433
        %v436 = vmul.f32 %v426, %v433
        %v437 = vmul.f32 %v427, %v433
        %v438 = vmul.f32 %v428, %v433
        %v439 = vld [vmem:[%s4] sm:$0xf]
        %441 = vset.pattern.permute.xlu0 0
        %442 = vperm.xlu0 %441, %v439
        %v443 = vpop.permute.xlu0 %442
        %v445 = vadd.f32 %v435, %v443
        %v446 = vadd.f32 %v436, %v443
        %v447 = vadd.f32 %v437, %v443
        %v448 = vadd.f32 %v438, %v443
        %vm449 = vcmp.ge.f32.partialorder %v445, 0.0
        %vm450 = vcmp.ge.f32.partialorder %v446, 0.0
        %vm451 = vcmp.ge.f32.partialorder %v447, 0.0
        %vm452 = vcmp.ge.f32.partialorder %v448, 0.0
        %v453 = vmul.f32 %v445, 0.01
        %v454 = vmul.f32 %v446, 0.01
        %v455 = vmul.f32 %v447, 0.01
        %v456 = vmul.f32 %v448, 0.01
        %v457 = vsel %vm449, %v445, %v453
        %v458 = vsel %vm450, %v446, %v454
        %v459 = vsel %vm451, %v447, %v455
        %v460 = vsel %vm452, %v448, %v456
        %v465 = vcombine.low %v457, %v458
        %v466 = vcombine.low %v459, %v460
        %469 = vst [vmem:[%s250] sm:$0xff] %v465
        %470 = vst [vmem:[%s250 + $0x8] sm:$0xff] %v466
        %p471 = scmp.lt.s32.totalorder %s18, 1
        %s472 = scalar_select %p471, %s18, 1
        %s473 = smul.addr %s472, 4
        %s474 = smul.addr %s473, 4
        %s475 = scalar_lea.vmem %s5, %s474
        // Predicated region
        $region49: #{attn_fpn_forward.9} parent=39 // pred_check
          %p476 = pneg %p146
        $region50: #{attn_fpn_forward.9} parent=39 // pred_check_branch
          %478 = sbr.rel (%p476) target = $region52
        $region51: #{attn_fpn_forward.9} parent=39 // pred_region
          _
        $region52: #{attn_fpn_forward.9} parent=39 // pred_fallthru
          _
      $region40: #{attn_fpn_forward.9} parent=5 // pred_fallthru
        _
      %p479 = scmp.le.s32.totalorder 2, %s13
      // Predicated region
      $region53: #{attn_fpn_forward.9} parent=5 // pred_check
        %p480 = pneg %p479
      $region54: #{attn_fpn_forward.9} parent=5 // pred_check_branch
        %482 = sbr.rel (%p480) target = $region56
      $region55: #{attn_fpn_forward.9} parent=5 // pred_region
        %s483 = ssub.s32 %s13, 2
        // Predicated region
        $region57: #{attn_fpn_forward.9} parent=55 // pred_check
          %p484 = pneg %p152
        $region58: #{attn_fpn_forward.9} parent=55 // pred_check_branch
          %486 = sbr.rel (%p484) target = $region60
        $region59: #{attn_fpn_forward.9} parent=55 // pred_region
          %p487 = scmp.lt.s32.totalorder %s19, 1
          %s488 = scalar_select %p487, %s19, 1
          %s489 = smul.addr %s488, 4
          %s490 = smul.addr %s489, 4
          %s491 = scalar_lea.vmem %s5, %s490
        $region60: #{attn_fpn_forward.9} parent=55 // pred_fallthru
          _
      $region56: #{attn_fpn_forward.9} parent=5 // pred_fallthru
        _
    $region6: #{attn_fpn_forward.9} parent=1 // loop_footer
      %s17 = sadd.s32 1, %s13
    $region7: #{attn_fpn_forward.9} parent=1 // loop_footer_branch
      %12 = sbr.rel target = $region3
    $region8: #{attn_fpn_forward.9} parent=1 // loop_exit
      _
    %492 = vsyncpa [#allocation3], 1
    %s493 = scalar_lea.sflag [#allocation3], 1
    %494 = vsyncpa %s493, 1
    %495 = vsyncpa [#allocation5], 1

// kernel: attn_fpn_forward.10
$region0: #{attn_fpn_forward.10}
  #allocation0 [shape = 'u32[]', space=smem, size = 0x4, offset = 0x4, fixed_abs, tag = 'smem constant byte address 0x4 - core index']
  #allocation1 [shape = 'u32[144,128]{1,0:T(1,128)}', space=vmem, size = 0x12000, scoped, tag = 'internal scratch']
  %s0 = inlined_call_operand.vmem [shape: bf16[4,112], index: 0, kind: input, shape index: {}]
  %s1 = inlined_call_operand.vmem [shape: bf16[2,112,512], index: 1, kind: input, shape index: {}]
  %s2 = inlined_call_operand.vmem [shape: f32[4,1], index: 2, kind: input, shape index: {}]
  %s3 = inlined_call_operand.vmem [shape: f32[4,1], index: 3, kind: input, shape index: {}]
  %s4 = inlined_call_operand.vmem [shape: f32[4,1], index: 4, kind: input, shape index: {}]
  %s5 = inlined_call_operand.vmem [shape: f32[2,4,512], index: 5, kind: output, shape index: {}]
  %s6 = sld [smem:[#allocation0]]
  $region53: #{attn_fpn_forward.10} parent=0
    _
  %s8 = ssub.s32 1, %s6
  %s9 = scalar_select 0, %s8, %s6
  loop: start=0, step=1, limit=4
  $region2: #{attn_fpn_forward.10} parent=0 // loop_pre_header
    _
  $region3: #{attn_fpn_forward.10} parent=0 // loop_header
    %s11 = sphi 0, %s15
    %p12 = scmp.ge.s32.totalorder %s11, 4
    %s19 = sphi 0, %s19
    %s21 = sphi 0, %s19
    %s22 = sphi 0, %s21
    %s36 = sphi 0, %s22
    %s42 = sphi 0, %s44
    %s45 = sphi 0, %s42
    %s46 = sphi 0, %s45
    %s62 = sphi 0, %s46
    %s66 = sphi 0, %s66
    %s68 = sphi 0, %s66
    %s69 = sphi 0, %s68
    %s83 = sphi 0, %s69
    %s87 = sphi 0, %s87
    %s89 = sphi 0, %s87
    %s90 = sphi 0, %s89
    %s104 = sphi 0, %s90
    %s108 = sphi 0, %s108
    %s110 = sphi 0, %s108
    %s111 = sphi 0, %s110
    %s125 = sphi 0, %s111
    %s131 = sphi 0, %s133
    %s134 = sphi 0, %s131
    %s135 = sphi 0, %s134
    %s151 = sphi 0, %s135
  $region4: #{attn_fpn_forward.10} parent=0 // loop_header_branch
    %14 = sbr.rel (%p12) target = $region8
  $region5: #{attn_fpn_forward.10} parent=0 // loop_body
    %s16 = ssub.s32 %s11, 1
    %s17 = ssub.s32 %s11, 2
    %s18 = sadd.s32 %s11, 1
    %s20 = sadd.s32 %s19, 1
    %p23 = scmp.eq.s32.totalorder %s11, 1
    %p24 = scmp.ne.s32.totalorder %s19, %s21
    %p25 = scmp.eq.s32.totalorder %s11, 0
    %p26 = por %p24, %p25
    %p27 = scmp.ne.s32.totalorder %s19, %s21
    %p28 = scmp.eq.s32.totalorder %s16, 1
    %p29 = por %p27, %p28
    %p30 = scmp.ne.s32.totalorder %s21, %s22
    %p31 = scmp.eq.s32.totalorder %s16, 0
    %p32 = por %p30, %p31
    %p33 = scmp.ne.s32.totalorder %s21, %s22
    %p34 = scmp.eq.s32.totalorder %s17, 1
    %p35 = por %p33, %p34
    %p37 = scmp.ne.s32.totalorder %s22, %s36
    %p38 = scmp.eq.s32.totalorder %s17, 0
    %p39 = por %p37, %p38
    %s40 = ssub.s32 %s11, %s18
    %p41 = scmp.eq.s32.totalorder %s40, 0
    %s43 = sadd.s32 %s42, 1
    %s44 = scalar_select %p41, %s42, %s43
    %p47 = pneg %p41
    %p48 = scmp.eq.s32.totalorder %s11, 1
    %p49 = por %p47, %p48
    %p50 = scmp.ne.s32.totalorder %s42, %s45
    %p51 = scmp.eq.s32.totalorder %s11, 0
    %p52 = por %p50, %p51
    %p53 = scmp.ne.s32.totalorder %s42, %s45
    %p54 = scmp.eq.s32.totalorder %s16, 1
    %p55 = por %p53, %p54
    %p56 = scmp.ne.s32.totalorder %s45, %s46
    %p57 = scmp.eq.s32.totalorder %s16, 0
    %p58 = por %p56, %p57
    %p59 = scmp.ne.s32.totalorder %s45, %s46
    %p60 = scmp.eq.s32.totalorder %s17, 1
    %p61 = por %p59, %p60
    %p63 = scmp.ne.s32.totalorder %s46, %s62
    %p64 = scmp.eq.s32.totalorder %s17, 0
    %p65 = por %p63, %p64
    %s67 = sadd.s32 %s66, 1
    %p70 = scmp.eq.s32.totalorder %s11, 1
    %p71 = scmp.ne.s32.totalorder %s66, %s68
    %p72 = scmp.eq.s32.totalorder %s11, 0
    %p73 = por %p71, %p72
    %p74 = scmp.ne.s32.totalorder %s66, %s68
    %p75 = scmp.eq.s32.totalorder %s16, 1
    %p76 = por %p74, %p75
    %p77 = scmp.ne.s32.totalorder %s68, %s69
    %p78 = scmp.eq.s32.totalorder %s16, 0
    %p79 = por %p77, %p78
    %p80 = scmp.ne.s32.totalorder %s68, %s69
    %p81 = scmp.eq.s32.totalorder %s17, 1
    %p82 = por %p80, %p81
    %p84 = scmp.ne.s32.totalorder %s69, %s83
    %p85 = scmp.eq.s32.totalorder %s17, 0
    %p86 = por %p84, %p85
    %s88 = sadd.s32 %s87, 1
    %p91 = scmp.eq.s32.totalorder %s11, 1
    %p92 = scmp.ne.s32.totalorder %s87, %s89
    %p93 = scmp.eq.s32.totalorder %s11, 0
    %p94 = por %p92, %p93
    %p95 = scmp.ne.s32.totalorder %s87, %s89
    %p96 = scmp.eq.s32.totalorder %s16, 1
    %p97 = por %p95, %p96
    %p98 = scmp.ne.s32.totalorder %s89, %s90
    %p99 = scmp.eq.s32.totalorder %s16, 0
    %p100 = por %p98, %p99
    %p101 = scmp.ne.s32.totalorder %s89, %s90
    %p102 = scmp.eq.s32.totalorder %s17, 1
    %p103 = por %p101, %p102
    %p105 = scmp.ne.s32.totalorder %s90, %s104
    %p106 = scmp.eq.s32.totalorder %s17, 0
    %p107 = por %p105, %p106
    %s109 = sadd.s32 %s108, 1
    %p112 = scmp.eq.s32.totalorder %s11, 1
    %p113 = scmp.ne.s32.totalorder %s108, %s110
    %p114 = scmp.eq.s32.totalorder %s11, 0
    %p115 = por %p113, %p114
    %p116 = scmp.ne.s32.totalorder %s108, %s110
    %p117 = scmp.eq.s32.totalorder %s16, 1
    %p118 = por %p116, %p117
    %p119 = scmp.ne.s32.totalorder %s110, %s111
    %p120 = scmp.eq.s32.totalorder %s16, 0
    %p121 = por %p119, %p120
    %p122 = scmp.ne.s32.totalorder %s110, %s111
    %p123 = scmp.eq.s32.totalorder %s17, 1
    %p124 = por %p122, %p123
    %p126 = scmp.ne.s32.totalorder %s111, %s125
    %p127 = scmp.eq.s32.totalorder %s17, 0
    %p128 = por %p126, %p127
    %s129 = ssub.s32 %s11, %s18
    %p130 = scmp.eq.s32.totalorder %s129, 0
    %s132 = sadd.s32 %s131, 1
    %s133 = scalar_select %p130, %s131, %s132
    %p136 = pneg %p130
    %p137 = scmp.eq.s32.totalorder %s11, 1
    %p138 = por %p136, %p137
    %p139 = scmp.ne.s32.totalorder %s131, %s134
    %p140 = scmp.eq.s32.totalorder %s11, 0
    %p141 = por %p139, %p140
    %p142 = scmp.ne.s32.totalorder %s131, %s134
    %p143 = scmp.eq.s32.totalorder %s16, 1
    %p144 = por %p142, %p143
    %p145 = scmp.ne.s32.totalorder %s134, %s135
    %p146 = scmp.eq.s32.totalorder %s16, 0
    %p147 = por %p145, %p146
    %p148 = scmp.ne.s32.totalorder %s134, %s135
    %p149 = scmp.eq.s32.totalorder %s17, 1
    %p150 = por %p148, %p149
    %p152 = scmp.ne.s32.totalorder %s135, %s151
    %p153 = scmp.eq.s32.totalorder %s17, 0
    %p154 = por %p152, %p153
    %p155 = scmp.le.s32.totalorder 1, %s11
    %p156 = scmp.lt.s32.totalorder %s11, 3
    %p157 = pnand %p155, %p156
    %p158 = pneg %p157
    // Predicated region
    $region9: #{attn_fpn_forward.10} parent=5 // pred_check
      _
    $region10: #{attn_fpn_forward.10} parent=5 // pred_check_branch
      %160 = sbr.rel (%p157) target = $region12
    $region11: #{attn_fpn_forward.10} parent=5 // pred_region
      %s161 = ssub.s32 %s11, 1
      // Predicated region
      $region13: #{attn_fpn_forward.10} parent=11 // pred_check
        %p162 = pneg %p32
      $region14: #{attn_fpn_forward.10} parent=11 // pred_check_branch
        %164 = sbr.rel (%p162) target = $region16
      $region15: #{attn_fpn_forward.10} parent=11 // pred_region
        _
      $region16: #{attn_fpn_forward.10} parent=11 // pred_fallthru
        _
      // Predicated region
      $region17: #{attn_fpn_forward.10} parent=11 // pred_check
        %p165 = pneg %p79
      $region18: #{attn_fpn_forward.10} parent=11 // pred_check_branch
        %167 = sbr.rel (%p165) target = $region20
      $region19: #{attn_fpn_forward.10} parent=11 // pred_region
        _
      $region20: #{attn_fpn_forward.10} parent=11 // pred_fallthru
        _
      // Predicated region
      $region21: #{attn_fpn_forward.10} parent=11 // pred_check
        %p168 = pneg %p100
      $region22: #{attn_fpn_forward.10} parent=11 // pred_check_branch
        %170 = sbr.rel (%p168) target = $region24
      $region23: #{attn_fpn_forward.10} parent=11 // pred_region
        _
      $region24: #{attn_fpn_forward.10} parent=11 // pred_fallthru
        _
      // Predicated region
      $region25: #{attn_fpn_forward.10} parent=11 // pred_check
        %p171 = pneg %p121
      $region26: #{attn_fpn_forward.10} parent=11 // pred_check_branch
        %173 = sbr.rel (%p171) target = $region28
      $region27: #{attn_fpn_forward.10} parent=11 // pred_region
        _
      $region28: #{attn_fpn_forward.10} parent=11 // pred_fallthru
        _
    $region12: #{attn_fpn_forward.10} parent=5 // pred_fallthru
      _
    %p174 = scmp.lt.s32.totalorder %s11, 2
    // Predicated region
    $region29: #{attn_fpn_forward.10} parent=5 // pred_check
      %p175 = pneg %p174
    $region30: #{attn_fpn_forward.10} parent=5 // pred_check_branch
      %177 = sbr.rel (%p175) target = $region32
    $region31: #{attn_fpn_forward.10} parent=5 // pred_region
      // Predicated region
      $region33: #{attn_fpn_forward.10} parent=31 // pred_check
        %p178 = pneg %p52
      $region34: #{attn_fpn_forward.10} parent=31 // pred_check_branch
        %180 = sbr.rel (%p178) target = $region36
      $region35: #{attn_fpn_forward.10} parent=31 // pred_region
        %p181 = scmp.lt.s32.totalorder %s11, 1
        %s182 = scalar_select %p181, %s11, 1
        %s183 = smul.addr %s182, 56
        %s184 = smul.addr %s183, 4
        %s185 = scalar_lea.vmem %s1, %s184
      $region36: #{attn_fpn_forward.10} parent=31 // pred_fallthru
        _
    $region32: #{attn_fpn_forward.10} parent=5 // pred_fallthru
      _
    %p186 = scmp.le.s32.totalorder 1, %s11
    %p187 = scmp.lt.s32.totalorder %s11, 3
    %p188 = pnand %p186, %p187
    %p189 = pneg %p188
    // Predicated region
    $region37: #{attn_fpn_forward.10} parent=5 // pred_check
      _
    $region38: #{attn_fpn_forward.10} parent=5 // pred_check_branch
      %191 = sbr.rel (%p188) target = $region40
    $region39: #{attn_fpn_forward.10} parent=5 // pred_region
      %s192 = ssub.s32 %s11, 1
      %p193 = pneg %p32
      %p194 = pneg %p29
      %p195 = scmp.lt.s32.totalorder %s16, 1
      %s196 = scalar_select %p195, %s16, 1
      %s197 = smul.addr %s196, 56
      %s198 = smul.addr %s197, 4
      %s199 = scalar_lea.vmem %s1, %s198
      %p200 = pneg %p58
      %p201 = pneg %p55
      %p202 = pneg %p79
      %p203 = pneg %p76
      %p204 = pneg %p100
      %p205 = pneg %p97
      %p206 = pneg %p121
      %p207 = pneg %p118
      %p208 = pneg %p147
      %p209 = pneg %p144
      %p210 = scmp.lt.s32.totalorder %s16, 1
      %s211 = scalar_select %p210, %s16, 1
      %s212 = smul.addr %s211, 4
      %s213 = smul.addr %s212, 4
      %s214 = scalar_lea.vmem %s5, %s213
      %p215 = scmp.lt.s32.totalorder %s16, 1
      %s216 = scalar_select %p215, %s16, 1
      %s217 = smul.addr %s216, 56
      %s218 = smul.addr %s217, 4
      %s219 = scalar_lea.vmem %s1, %s218
      %p220 = scmp.lt.s32.totalorder %s16, 1
      %s221 = scalar_select %p220, %s16, 1
      %s222 = smul.addr %s221, 4
      %s223 = smul.addr %s222, 4
      %s224 = scalar_lea.vmem %s5, %s223
      %v226 = vld [vmem:[%s0] sm:$0x3]
      %v227 = vld [vmem:[%s219] sm:$0xff]
      %v228 = vld [vmem:[%s219 + $0x8] sm:$0xff]
      %v229 = vld [vmem:[%s219 + $0x10] sm:$0xff]
      %v230 = vld [vmem:[%s219 + $0x18] sm:$0xff]
      %v231 = vld [vmem:[%s219 + $0x20] sm:$0xff]
      %v232 = vld [vmem:[%s219 + $0x28] sm:$0xff]
      %v233 = vld [vmem:[%s219 + $0x30] sm:$0xff]
      %v234 = vld [vmem:[%s219 + $0x38] sm:$0xff]
      %v235 = vld [vmem:[%s219 + $0x40] sm:$0xff]
      %v236 = vld [vmem:[%s219 + $0x48] sm:$0xff]
      %v237 = vld [vmem:[%s219 + $0x50] sm:$0xff]
      %v238 = vld [vmem:[%s219 + $0x58] sm:$0xff]
      %v239 = vld [vmem:[%s219 + $0x60] sm:$0xff]
      %v240 = vld [vmem:[%s219 + $0x68] sm:$0xff]
      %v241 = vld [vmem:[%s219 + $0x70] sm:$0xff]
      %v242 = vld [vmem:[%s219 + $0x78] sm:$0xff]
      %v243 = vld [vmem:[%s219 + $0x80] sm:$0xff]
      %v244 = vld [vmem:[%s219 + $0x88] sm:$0xff]
      %v245 = vld [vmem:[%s219 + $0x90] sm:$0xff]
      %v246 = vld [vmem:[%s219 + $0x98] sm:$0xff]
      %v247 = vld [vmem:[%s219 + $0xa0] sm:$0xff]
      %v248 = vld [vmem:[%s219 + $0xa8] sm:$0xff]
      %v249 = vld [vmem:[%s219 + $0xb0] sm:$0xff]
      %v250 = vld [vmem:[%s219 + $0xb8] sm:$0xff]
      %v251 = vld [vmem:[%s219 + $0xc0] sm:$0xff]
      %v252 = vld [vmem:[%s219 + $0xc8] sm:$0xff]
      %v253 = vld [vmem:[%s219 + $0xd0] sm:$0xff]
      %v254 = vld [vmem:[%s219 + $0xd8] sm:$0xff]
      %v255 = vld [vmem:[%s2] sm:$0xf]
      %257 = vset.pattern.permute.xlu0 0
      %258 = vperm.xlu0 %257, %v255
      %v259 = vpop.permute.xlu0 %258
      %v289 = vunpack.c.l.b16 %v227
      %v290 = vunpack.c.h.b16 %v227
      %v291 = vunpack.c.l.b16 %v228
      %v292 = vunpack.c.h.b16 %v228
      %v293 = vunpack.c.l.b16 %v229
      %v294 = vunpack.c.h.b16 %v229
      %v295 = vunpack.c.l.b16 %v230
      %v296 = vunpack.c.h.b16 %v230
      %v297 = vunpack.c.l.b16 %v231
      %v298 = vunpack.c.h.b16 %v231
      %v299 = vunpack.c.l.b16 %v232
      %v300 = vunpack.c.h.b16 %v232
      %v301 = vunpack.c.l.b16 %v233
      %v302 = vunpack.c.h.b16 %v233
      %v303 = vunpack.c.l.b16 %v234
      %v304 = vunpack.c.h.b16 %v234
      %v305 = vunpack.c.l.b16 %v235
      %v306 = vunpack.c.h.b16 %v235
      %v307 = vunpack.c.l.b16 %v236
      %v308 = vunpack.c.h.b16 %v236
      %v309 = vunpack.c.l.b16 %v237
      %v310 = vunpack.c.h.b16 %v237
      %v311 = vunpack.c.l.b16 %v238
      %v312 = vunpack.c.h.b16 %v238
      %v313 = vunpack.c.l.b16 %v239
      %v314 = vunpack.c.h.b16 %v239
      %v315 = vunpack.c.l.b16 %v240
      %v316 = vunpack.c.h.b16 %v240
      %v317 = vunpack.c.l.b16 %v241
      %v318 = vunpack.c.h.b16 %v241
      %v319 = vunpack.c.l.b16 %v242
      %v320 = vunpack.c.h.b16 %v242
      %v321 = vunpack.c.l.b16 %v243
      %v322 = vunpack.c.h.b16 %v243
      %v323 = vunpack.c.l.b16 %v244
      %v324 = vunpack.c.h.b16 %v244
      %v325 = vunpack.c.l.b16 %v245
      %v326 = vunpack.c.h.b16 %v245
      %v327 = vunpack.c.l.b16 %v246
      %v328 = vunpack.c.h.b16 %v246
      %v329 = vunpack.c.l.b16 %v247
      %v330 = vunpack.c.h.b16 %v247
      %v331 = vunpack.c.l.b16 %v248
      %v332 = vunpack.c.h.b16 %v248
      %v333 = vunpack.c.l.b16 %v249
      %v334 = vunpack.c.h.b16 %v249
      %v335 = vunpack.c.l.b16 %v250
      %v336 = vunpack.c.h.b16 %v250
      %v337 = vunpack.c.l.b16 %v251
      %v338 = vunpack.c.h.b16 %v251
      %v339 = vunpack.c.l.b16 %v252
      %v340 = vunpack.c.h.b16 %v252
      %v341 = vunpack.c.l.b16 %v253
      %v342 = vunpack.c.h.b16 %v253
      %v343 = vunpack.c.l.b16 %v254
      %v344 = vunpack.c.h.b16 %v254
      %v345 = vpack.c.b16 %v293, %v289
      %v346 = vpack.c.b16 %v294, %v290
      %v347 = vpack.c.b16 %v295, %v291
      %v348 = vpack.c.b16 %v296, %v292
      %v349 = vpack.c.b16 %v301, %v297
      %v350 = vpack.c.b16 %v302, %v298
      %v351 = vpack.c.b16 %v303, %v299
      %v352 = vpack.c.b16 %v304, %v300
      %v353 = vpack.c.b16 %v309, %v305
      %v354 = vpack.c.b16 %v310, %v306
      %v355 = vpack.c.b16 %v311, %v307
      %v356 = vpack.c.b16 %v312, %v308
      %v357 = vpack.c.b16 %v317, %v313
      %v358 = vpack.c.b16 %v318, %v314
      %v359 = vpack.c.b16 %v319, %v315
      %v360 = vpack.c.b16 %v320, %v316
      %v361 = vpack.c.b16 %v325, %v321
      %v362 = vpack.c.b16 %v326, %v322
      %v363 = vpack.c.b16 %v327, %v323
      %v364 = vpack.c.b16 %v328, %v324
      %v365 = vpack.c.b16 %v333, %v329
      %v366 = vpack.c.b16 %v334, %v330
      %v367 = vpack.c.b16 %v335, %v331
      %v368 = vpack.c.b16 %v336, %v332
      %v369 = vpack.c.b16 %v341, %v337
      %v370 = vpack.c.b16 %v342, %v338
      %v371 = vpack.c.b16 %v343, %v339
      %v372 = vpack.c.b16 %v344, %v340
      %vm401 = vcmask 916480
      %v403 = vsel %vm401, %v226, 0
      %405 = vmatprep.subr.bf16.mxu0 %v346
      %406 = vmatpush1.bf16.msra.mxu0 %v345
      %407 = vmatprep.subr.bf16.mxu0 %v350
      %408 = vmatpush1.bf16.msra.mxu0 %v349
      %409 = vmatprep.subr.bf16.mxu0 %v354
      %410 = vmatpush1.bf16.msra.mxu0 %v353
      %411 = vmatprep.subr.bf16.mxu0 %v358
      %412 = vmatpush1.bf16.msra.mxu0 %v357
      %413 = vmatprep.subr.bf16.mxu0 %v362
      %414 = vmatpush1.bf16.msra.mxu0 %v361
      %415 = vmatprep.subr.bf16.mxu0 %v366
      %416 = vmatpush1.bf16.msra.mxu0 %v365
      %417 = vmatprep.subr.bf16.mxu0 %v370
      %418 = vmatpush1.bf16.msra.mxu0 %v369
      %419 = vmatprep.subr.bf16.mxu0 0
      %420 = vmatpush1.bf16.msra.mxu0 0
      %421 = vmatprep.subr.bf16.mxu0 0
      %422 = vmatpush1.bf16.msra.mxu0 0
      %423 = vmatprep.subr.bf16.mxu0 0
      %424 = vmatpush1.bf16.msra.mxu0 0
      %425 = vmatprep.subr.bf16.mxu0 0
      %426 = vmatpush1.bf16.msra.mxu0 0
      %427 = vmatprep.subr.bf16.mxu0 0
      %428 = vmatpush1.bf16.msra.mxu0 0
      %429 = vmatprep.subr.bf16.mxu0 0
      %430 = vmatpush1.bf16.msra.mxu0 0
      %431 = vmatprep.subr.bf16.mxu0 0
      %432 = vmatpush1.bf16.msra.mxu0 0
      %433 = vmatprep.subr.bf16.mxu0 0
      %434 = vmatpush1.bf16.msra.mxu0 0
      %435 = vmatprep.subr.bf16.mxu0 0
      %436 = vmatpush1.bf16.msra.mxu0 0
      %437 = vmatprep.mubr.bf16.mxu0 0
      %438 = vmatmul.mubr.bf16.gmra.mrb[0].mxu0 %v403
      %v439 = vpop.f32.mrb[0].mxu0
      %v440 = vadd.f32 %v259, %v439
      %v441 = vpop.f32.mrb[0].mxu0
      %v442 = vadd.f32 %v259, %v441
      %v443 = vpop.f32.mrb[0].mxu0
      %v444 = vpop.f32.mrb[0].mxu0
      %445 = vdwg.mxu0
      %446 = vmatprep.subr.bf16.mxu0 %v348
      %447 = vmatpush1.bf16.msra.mxu0 %v347
      %448 = vmatprep.subr.bf16.mxu0 %v352
      %449 = vmatpush1.bf16.msra.mxu0 %v351
      %450 = vmatprep.subr.bf16.mxu0 %v356
      %451 = vmatpush1.bf16.msra.mxu0 %v355
      %452 = vmatprep.subr.bf16.mxu0 %v360
      %453 = vmatpush1.bf16.msra.mxu0 %v359
      %454 = vmatprep.subr.bf16.mxu0 %v364
      %455 = vmatpush1.bf16.msra.mxu0 %v363
      %456 = vmatprep.subr.bf16.mxu0 %v368
      %457 = vmatpush1.bf16.msra.mxu0 %v367
      %458 = vmatprep.subr.bf16.mxu0 %v372
      %459 = vmatpush1.bf16.msra.mxu0 %v371
      %460 = vmatprep.subr.bf16.mxu0 0
      %461 = vmatpush1.bf16.msra.mxu0 0
      %462 = vmatprep.subr.bf16.mxu0 0
      %463 = vmatpush1.bf16.msra.mxu0 0
      %464 = vmatprep.subr.bf16.mxu0 0
      %465 = vmatpush1.bf16.msra.mxu0 0
      %466 = vmatprep.subr.bf16.mxu0 0
      %467 = vmatpush1.bf16.msra.mxu0 0
      %468 = vmatprep.subr.bf16.mxu0 0
      %469 = vmatpush1.bf16.msra.mxu0 0
      %470 = vmatprep.subr.bf16.mxu0 0
      %471 = vmatpush1.bf16.msra.mxu0 0
      %472 = vmatprep.subr.bf16.mxu0 0
      %473 = vmatpush1.bf16.msra.mxu0 0
      %474 = vmatprep.subr.bf16.mxu0 0
      %475 = vmatpush1.bf16.msra.mxu0 0
      %476 = vmatprep.subr.bf16.mxu0 0
      %477 = vmatpush1.bf16.msra.mxu0 0
      %478 = vmatprep.mubr.bf16.mxu0 0
      %479 = vmatmul.mubr.bf16.gmra.mrb[0].mxu0 %v403
      %v480 = vpop.f32.mrb[0].mxu0
      %v481 = vadd.f32 %v259, %v480
      %v482 = vpop.f32.mrb[0].mxu0
      %v483 = vadd.f32 %v259, %v482
      %v484 = vpop.f32.mrb[0].mxu0
      %v485 = vpop.f32.mrb[0].mxu0
      %486 = vdwg.mxu0
      %vm487 = vcmask 1043456
      %v488 = vsel %vm487, %v440, 0.0
      %v489 = vsel %vm487, %v442, 0.0
      %v490 = vadd.f32 %v488, %v489
      %v491 = vsel %vm487, %v481, 0.0
      %v492 = vadd.f32 %v490, %v491
      %v493 = vsel %vm487, %v483, 0.0
      %v494 = vadd.f32 %v492, %v493
      %495 = vadd.xlane.f32.xlu0 %v494
      %v496 = vpop.xlane.xlu0 %495
      %v497 = vrcp.pop 512.0
      %v498 = vmul.f32 %v496, %v497
      %v499 = vsub.f32 %v440, %v498
      %v500 = vsub.f32 %v442, %v498
      %v501 = vsub.f32 %v481, %v498
      %v502 = vsub.f32 %v483, %v498
      %v503 = vmul.f32 %v499, %v499
      %v504 = vmul.f32 %v500, %v500
      %v505 = vmul.f32 %v501, %v501
      %v506 = vmul.f32 %v502, %v502
      %v507 = vsel %vm487, %v503, 0.0
      %v508 = vsel %vm487, %v504, 0.0
      %v509 = vadd.f32 %v507, %v508
      %v510 = vsel %vm487, %v505, 0.0
      %v511 = vadd.f32 %v509, %v510
      %v512 = vsel %vm487, %v506, 0.0
      %v513 = vadd.f32 %v511, %v512
      %514 = vadd.xlane.f32.xlu0 %v513
      %v515 = vpop.xlane.xlu0 %514
      %v516 = vmul.f32 %v515, %v497
      %v517 = vadd.f32 %v516, 1e-05
      %v518 = vrsqrt.pop %v517
      %v519 = vmul.f32 %v499, %v518
      %v520 = vmul.f32 %v500, %v518
      %v521 = vmul.f32 %v501, %v518
      %v522 = vmul.f32 %v502, %v518
      %v523 = vld [vmem:[%s3] sm:$0xf]
      %525 = vset.pattern.permute.xlu0 0
      %526 = vperm.xlu0 %525, %v523
      %v527 = vpop.permute.xlu0 %526
      %v529 = vmul.f32 %v519, %v527
      %v530 = vmul.f32 %v520, %v527
      %v531 = vmul.f32 %v521, %v527
      %v532 = vmul.f32 %v522, %v527
      %v533 = vld [vmem:[%s4] sm:$0xf]
      %535 = vset.pattern.permute.xlu0 0
      %536 = vperm.xlu0 %535, %v533
      %v537 = vpop.permute.xlu0 %536
      %v539 = vadd.f32 %v529, %v537
      %v540 = vadd.f32 %v530, %v537
      %v541 = vadd.f32 %v531, %v537
      %v542 = vadd.f32 %v532, %v537
      %vm543 = vcmp.ge.f32.partialorder %v539, 0.0
      %vm544 = vcmp.ge.f32.partialorder %v540, 0.0
      %vm545 = vcmp.ge.f32.partialorder %v541, 0.0
      %vm546 = vcmp.ge.f32.partialorder %v542, 0.0
      %v547 = vmul.f32 %v539, 0.01
      %v548 = vmul.f32 %v540, 0.01
      %v549 = vmul.f32 %v541, 0.01
      %v550 = vmul.f32 %v542, 0.01
      %v551 = vsel %vm543, %v539, %v547
      %v552 = vsel %vm544, %v540, %v548
      %v553 = vsel %vm545, %v541, %v549
      %v554 = vsel %vm546, %v542, %v550
      %v559 = vcombine.low %v551, %v552
      %v560 = vcombine.low %v553, %v554
      %563 = vst [vmem:[%s224] sm:$0xff] %v559
      %564 = vst [vmem:[%s224 + $0x8] sm:$0xff] %v560
      %p565 = scmp.lt.s32.totalorder %s16, 1
      %s566 = scalar_select %p565, %s16, 1
      %s567 = smul.addr %s566, 4
      %s568 = smul.addr %s567, 4
      %s569 = scalar_lea.vmem %s5, %s568
      // Predicated region
      $region41: #{attn_fpn_forward.10} parent=39 // pred_check
        %p570 = pneg %p144
      $region42: #{attn_fpn_forward.10} parent=39 // pred_check_branch
        %572 = sbr.rel (%p570) target = $region44
      $region43: #{attn_fpn_forward.10} parent=39 // pred_region
        _
      $region44: #{attn_fpn_forward.10} parent=39 // pred_fallthru
        _
    $region40: #{attn_fpn_forward.10} parent=5 // pred_fallthru
      _
    %p573 = scmp.le.s32.totalorder 2, %s11
    // Predicated region
    $region45: #{attn_fpn_forward.10} parent=5 // pred_check
      %p574 = pneg %p573
    $region46: #{attn_fpn_forward.10} parent=5 // pred_check_branch
      %576 = sbr.rel (%p574) target = $region48
    $region47: #{attn_fpn_forward.10} parent=5 // pred_region
      %s577 = ssub.s32 %s11, 2
      // Predicated region
      $region49: #{attn_fpn_forward.10} parent=47 // pred_check
        %p578 = pneg %p150
      $region50: #{attn_fpn_forward.10} parent=47 // pred_check_branch
        %580 = sbr.rel (%p578) target = $region52
      $region51: #{attn_fpn_forward.10} parent=47 // pred_region
        %p581 = scmp.lt.s32.totalorder %s17, 1
        %s582 = scalar_select %p581, %s17, 1
        %s583 = smul.addr %s582, 4
        %s584 = smul.addr %s583, 4
        %s585 = scalar_lea.vmem %s5, %s584
      $region52: #{attn_fpn_forward.10} parent=47 // pred_fallthru
        _
    $region48: #{attn_fpn_forward.10} parent=5 // pred_fallthru
      _
  $region6: #{attn_fpn_forward.10} parent=0 // loop_footer
    %s15 = sadd.s32 1, %s11
  $region7: #{attn_fpn_forward.10} parent=0 // loop_footer_branch
    %10 = sbr.rel target = $region3
  $region8: #{attn_fpn_forward.10} parent=0 // loop_exit
    _

// kernel: attn_fpn_forward.11
$region0: #{attn_fpn_forward.11}
  #allocation0 [shape = 'u32[]', space=smem, size = 0x4, offset = 0x4, fixed_abs, tag = 'smem constant byte address 0x4 - core index']
  #allocation1 [shape = 'u32[144,128]{1,0:T(1,128)}', space=vmem, size = 0x12000, scoped, tag = 'internal scratch']
  %s0 = inlined_call_operand.vmem [shape: bf16[8,112], index: 0, kind: input, shape index: {}]
  %s1 = inlined_call_operand.vmem [shape: bf16[2,112,64], index: 1, kind: input, shape index: {}]
  %s2 = inlined_call_operand.vmem [shape: f32[8,1], index: 2, kind: input, shape index: {}]
  %s3 = inlined_call_operand.vmem [shape: f32[8,1], index: 3, kind: input, shape index: {}]
  %s4 = inlined_call_operand.vmem [shape: f32[8,1], index: 4, kind: input, shape index: {}]
  %s5 = inlined_call_operand.vmem [shape: f32[2,8,64], index: 5, kind: output, shape index: {}]
  %s6 = sld [smem:[#allocation0]]
  $region53: #{attn_fpn_forward.11} parent=0
    _
  %s8 = ssub.s32 1, %s6
  %s9 = scalar_select 0, %s8, %s6
  loop: start=0, step=1, limit=4
  $region2: #{attn_fpn_forward.11} parent=0 // loop_pre_header
    _
  $region3: #{attn_fpn_forward.11} parent=0 // loop_header
    %s11 = sphi 0, %s15
    %p12 = scmp.ge.s32.totalorder %s11, 4
    %s19 = sphi 0, %s19
    %s21 = sphi 0, %s19
    %s22 = sphi 0, %s21
    %s36 = sphi 0, %s22
    %s42 = sphi 0, %s44
    %s45 = sphi 0, %s42
    %s46 = sphi 0, %s45
    %s62 = sphi 0, %s46
    %s66 = sphi 0, %s66
    %s68 = sphi 0, %s66
    %s69 = sphi 0, %s68
    %s83 = sphi 0, %s69
    %s87 = sphi 0, %s87
    %s89 = sphi 0, %s87
    %s90 = sphi 0, %s89
    %s104 = sphi 0, %s90
    %s108 = sphi 0, %s108
    %s110 = sphi 0, %s108
    %s111 = sphi 0, %s110
    %s125 = sphi 0, %s111
    %s131 = sphi 0, %s133
    %s134 = sphi 0, %s131
    %s135 = sphi 0, %s134
    %s151 = sphi 0, %s135
  $region4: #{attn_fpn_forward.11} parent=0 // loop_header_branch
    %14 = sbr.rel (%p12) target = $region8
  $region5: #{attn_fpn_forward.11} parent=0 // loop_body
    %s16 = ssub.s32 %s11, 1
    %s17 = ssub.s32 %s11, 2
    %s18 = sadd.s32 %s11, 1
    %s20 = sadd.s32 %s19, 1
    %p23 = scmp.eq.s32.totalorder %s11, 1
    %p24 = scmp.ne.s32.totalorder %s19, %s21
    %p25 = scmp.eq.s32.totalorder %s11, 0
    %p26 = por %p24, %p25
    %p27 = scmp.ne.s32.totalorder %s19, %s21
    %p28 = scmp.eq.s32.totalorder %s16, 1
    %p29 = por %p27, %p28
    %p30 = scmp.ne.s32.totalorder %s21, %s22
    %p31 = scmp.eq.s32.totalorder %s16, 0
    %p32 = por %p30, %p31
    %p33 = scmp.ne.s32.totalorder %s21, %s22
    %p34 = scmp.eq.s32.totalorder %s17, 1
    %p35 = por %p33, %p34
    %p37 = scmp.ne.s32.totalorder %s22, %s36
    %p38 = scmp.eq.s32.totalorder %s17, 0
    %p39 = por %p37, %p38
    %s40 = ssub.s32 %s11, %s18
    %p41 = scmp.eq.s32.totalorder %s40, 0
    %s43 = sadd.s32 %s42, 1
    %s44 = scalar_select %p41, %s42, %s43
    %p47 = pneg %p41
    %p48 = scmp.eq.s32.totalorder %s11, 1
    %p49 = por %p47, %p48
    %p50 = scmp.ne.s32.totalorder %s42, %s45
    %p51 = scmp.eq.s32.totalorder %s11, 0
    %p52 = por %p50, %p51
    %p53 = scmp.ne.s32.totalorder %s42, %s45
    %p54 = scmp.eq.s32.totalorder %s16, 1
    %p55 = por %p53, %p54
    %p56 = scmp.ne.s32.totalorder %s45, %s46
    %p57 = scmp.eq.s32.totalorder %s16, 0
    %p58 = por %p56, %p57
    %p59 = scmp.ne.s32.totalorder %s45, %s46
    %p60 = scmp.eq.s32.totalorder %s17, 1
    %p61 = por %p59, %p60
    %p63 = scmp.ne.s32.totalorder %s46, %s62
    %p64 = scmp.eq.s32.totalorder %s17, 0
    %p65 = por %p63, %p64
    %s67 = sadd.s32 %s66, 1
    %p70 = scmp.eq.s32.totalorder %s11, 1
    %p71 = scmp.ne.s32.totalorder %s66, %s68
    %p72 = scmp.eq.s32.totalorder %s11, 0
    %p73 = por %p71, %p72
    %p74 = scmp.ne.s32.totalorder %s66, %s68
    %p75 = scmp.eq.s32.totalorder %s16, 1
    %p76 = por %p74, %p75
    %p77 = scmp.ne.s32.totalorder %s68, %s69
    %p78 = scmp.eq.s32.totalorder %s16, 0
    %p79 = por %p77, %p78
    %p80 = scmp.ne.s32.totalorder %s68, %s69
    %p81 = scmp.eq.s32.totalorder %s17, 1
    %p82 = por %p80, %p81
    %p84 = scmp.ne.s32.totalorder %s69, %s83
    %p85 = scmp.eq.s32.totalorder %s17, 0
    %p86 = por %p84, %p85
    %s88 = sadd.s32 %s87, 1
    %p91 = scmp.eq.s32.totalorder %s11, 1
    %p92 = scmp.ne.s32.totalorder %s87, %s89
    %p93 = scmp.eq.s32.totalorder %s11, 0
    %p94 = por %p92, %p93
    %p95 = scmp.ne.s32.totalorder %s87, %s89
    %p96 = scmp.eq.s32.totalorder %s16, 1
    %p97 = por %p95, %p96
    %p98 = scmp.ne.s32.totalorder %s89, %s90
    %p99 = scmp.eq.s32.totalorder %s16, 0
    %p100 = por %p98, %p99
    %p101 = scmp.ne.s32.totalorder %s89, %s90
    %p102 = scmp.eq.s32.totalorder %s17, 1
    %p103 = por %p101, %p102
    %p105 = scmp.ne.s32.totalorder %s90, %s104
    %p106 = scmp.eq.s32.totalorder %s17, 0
    %p107 = por %p105, %p106
    %s109 = sadd.s32 %s108, 1
    %p112 = scmp.eq.s32.totalorder %s11, 1
    %p113 = scmp.ne.s32.totalorder %s108, %s110
    %p114 = scmp.eq.s32.totalorder %s11, 0
    %p115 = por %p113, %p114
    %p116 = scmp.ne.s32.totalorder %s108, %s110
    %p117 = scmp.eq.s32.totalorder %s16, 1
    %p118 = por %p116, %p117
    %p119 = scmp.ne.s32.totalorder %s110, %s111
    %p120 = scmp.eq.s32.totalorder %s16, 0
    %p121 = por %p119, %p120
    %p122 = scmp.ne.s32.totalorder %s110, %s111
    %p123 = scmp.eq.s32.totalorder %s17, 1
    %p124 = por %p122, %p123
    %p126 = scmp.ne.s32.totalorder %s111, %s125
    %p127 = scmp.eq.s32.totalorder %s17, 0
    %p128 = por %p126, %p127
    %s129 = ssub.s32 %s11, %s18
    %p130 = scmp.eq.s32.totalorder %s129, 0
    %s132 = sadd.s32 %s131, 1
    %s133 = scalar_select %p130, %s131, %s132
    %p136 = pneg %p130
    %p137 = scmp.eq.s32.totalorder %s11, 1
    %p138 = por %p136, %p137
    %p139 = scmp.ne.s32.totalorder %s131, %s134
    %p140 = scmp.eq.s32.totalorder %s11, 0
    %p141 = por %p139, %p140
    %p142 = scmp.ne.s32.totalorder %s131, %s134
    %p143 = scmp.eq.s32.totalorder %s16, 1
    %p144 = por %p142, %p143
    %p145 = scmp.ne.s32.totalorder %s134, %s135
    %p146 = scmp.eq.s32.totalorder %s16, 0
    %p147 = por %p145, %p146
    %p148 = scmp.ne.s32.totalorder %s134, %s135
    %p149 = scmp.eq.s32.totalorder %s17, 1
    %p150 = por %p148, %p149
    %p152 = scmp.ne.s32.totalorder %s135, %s151
    %p153 = scmp.eq.s32.totalorder %s17, 0
    %p154 = por %p152, %p153
    %p155 = scmp.le.s32.totalorder 1, %s11
    %p156 = scmp.lt.s32.totalorder %s11, 3
    %p157 = pnand %p155, %p156
    %p158 = pneg %p157
    // Predicated region
    $region9: #{attn_fpn_forward.11} parent=5 // pred_check
      _
    $region10: #{attn_fpn_forward.11} parent=5 // pred_check_branch
      %160 = sbr.rel (%p157) target = $region12
    $region11: #{attn_fpn_forward.11} parent=5 // pred_region
      %s161 = ssub.s32 %s11, 1
      // Predicated region
      $region13: #{attn_fpn_forward.11} parent=11 // pred_check
        %p162 = pneg %p32
      $region14: #{attn_fpn_forward.11} parent=11 // pred_check_branch
        %164 = sbr.rel (%p162) target = $region16
      $region15: #{attn_fpn_forward.11} parent=11 // pred_region
        _
      $region16: #{attn_fpn_forward.11} parent=11 // pred_fallthru
        _
      // Predicated region
      $region17: #{attn_fpn_forward.11} parent=11 // pred_check
        %p165 = pneg %p79
      $region18: #{attn_fpn_forward.11} parent=11 // pred_check_branch
        %167 = sbr.rel (%p165) target = $region20
      $region19: #{attn_fpn_forward.11} parent=11 // pred_region
        _
      $region20: #{attn_fpn_forward.11} parent=11 // pred_fallthru
        _
      // Predicated region
      $region21: #{attn_fpn_forward.11} parent=11 // pred_check
        %p168 = pneg %p100
      $region22: #{attn_fpn_forward.11} parent=11 // pred_check_branch
        %170 = sbr.rel (%p168) target = $region24
      $region23: #{attn_fpn_forward.11} parent=11 // pred_region
        _
      $region24: #{attn_fpn_forward.11} parent=11 // pred_fallthru
        _
      // Predicated region
      $region25: #{attn_fpn_forward.11} parent=11 // pred_check
        %p171 = pneg %p121
      $region26: #{attn_fpn_forward.11} parent=11 // pred_check_branch
        %173 = sbr.rel (%p171) target = $region28
      $region27: #{attn_fpn_forward.11} parent=11 // pred_region
        _
      $region28: #{attn_fpn_forward.11} parent=11 // pred_fallthru
        _
    $region12: #{attn_fpn_forward.11} parent=5 // pred_fallthru
      _
    %p174 = scmp.lt.s32.totalorder %s11, 2
    // Predicated region
    $region29: #{attn_fpn_forward.11} parent=5 // pred_check
      %p175 = pneg %p174
    $region30: #{attn_fpn_forward.11} parent=5 // pred_check_branch
      %177 = sbr.rel (%p175) target = $region32
    $region31: #{attn_fpn_forward.11} parent=5 // pred_region
      // Predicated region
      $region33: #{attn_fpn_forward.11} parent=31 // pred_check
        %p178 = pneg %p52
      $region34: #{attn_fpn_forward.11} parent=31 // pred_check_branch
        %180 = sbr.rel (%p178) target = $region36
      $region35: #{attn_fpn_forward.11} parent=31 // pred_region
        %p181 = scmp.lt.s32.totalorder %s11, 1
        %s182 = scalar_select %p181, %s11, 1
        %s183 = smul.addr %s182, 14
        %s184 = smul.addr %s183, 4
        %s185 = scalar_lea.vmem %s1, %s184
      $region36: #{attn_fpn_forward.11} parent=31 // pred_fallthru
        _
    $region32: #{attn_fpn_forward.11} parent=5 // pred_fallthru
      _
    %p186 = scmp.le.s32.totalorder 1, %s11
    %p187 = scmp.lt.s32.totalorder %s11, 3
    %p188 = pnand %p186, %p187
    %p189 = pneg %p188
    // Predicated region
    $region37: #{attn_fpn_forward.11} parent=5 // pred_check
      _
    $region38: #{attn_fpn_forward.11} parent=5 // pred_check_branch
      %191 = sbr.rel (%p188) target = $region40
    $region39: #{attn_fpn_forward.11} parent=5 // pred_region
      %s192 = ssub.s32 %s11, 1
      %p193 = pneg %p32
      %p194 = pneg %p29
      %p195 = scmp.lt.s32.totalorder %s16, 1
      %s196 = scalar_select %p195, %s16, 1
      %s197 = smul.addr %s196, 14
      %s198 = smul.addr %s197, 4
      %s199 = scalar_lea.vmem %s1, %s198
      %p200 = pneg %p58
      %p201 = pneg %p55
      %p202 = pneg %p79
      %p203 = pneg %p76
      %p204 = pneg %p100
      %p205 = pneg %p97
      %p206 = pneg %p121
      %p207 = pneg %p118
      %p208 = pneg %p147
      %p209 = pneg %p144
      %p210 = scmp.lt.s32.totalorder %s16, 1
      %s211 = scalar_select %p210, %s16, 1
      %s212 = smul.addr %s211, 8
      %s213 = scalar_lea.vmem %s5, %s212
      %p214 = scmp.lt.s32.totalorder %s16, 1
      %s215 = scalar_select %p214, %s16, 1
      %s216 = smul.addr %s215, 14
      %s217 = smul.addr %s216, 4
      %s218 = scalar_lea.vmem %s1, %s217
      %p219 = scmp.lt.s32.totalorder %s16, 1
      %s220 = scalar_select %p219, %s16, 1
      %s221 = smul.addr %s220, 8
      %s222 = scalar_lea.vmem %s5, %s221
      %v224 = vld [vmem:[%s0] sm:$0xf]
      %v225 = vld [vmem:[%s218] sm:$0xf]
      %v226 = vld [vmem:[%s218 + $0x4] sm:$0xf]
      %v227 = vld [vmem:[%s218 + $0x8] sm:$0xf]
      %v228 = vld [vmem:[%s218 + $0xc] sm:$0xf]
      %v229 = vld [vmem:[%s218 + $0x10] sm:$0xf]
      %v230 = vld [vmem:[%s218 + $0x14] sm:$0xf]
      %v231 = vld [vmem:[%s218 + $0x18] sm:$0xf]
      %v232 = vld [vmem:[%s218 + $0x1c] sm:$0xf]
      %v233 = vld [vmem:[%s218 + $0x20] sm:$0xf]
      %v234 = vld [vmem:[%s218 + $0x24] sm:$0xf]
      %v235 = vld [vmem:[%s218 + $0x28] sm:$0xf]
      %v236 = vld [vmem:[%s218 + $0x2c] sm:$0xf]
      %v237 = vld [vmem:[%s218 + $0x30] sm:$0xf]
      %v238 = vld [vmem:[%s218 + $0x34] sm:$0xf]
      %v239 = vld [vmem:[%s2] sm:$0xff]
      %241 = vset.pattern.permute.xlu0 0
      %242 = vperm.xlu0 %241, %v239
      %v243 = vpop.permute.xlu0 %242
      %v259 = vunpack.c.l.b16 %v225
      %v260 = vunpack.c.l.b16 %v226
      %v261 = vunpack.c.l.b16 %v227
      %v262 = vunpack.c.l.b16 %v228
      %v263 = vunpack.c.l.b16 %v229
      %v264 = vunpack.c.l.b16 %v230
      %v265 = vunpack.c.l.b16 %v231
      %v266 = vunpack.c.l.b16 %v232
      %v267 = vunpack.c.l.b16 %v233
      %v268 = vunpack.c.l.b16 %v234
      %v269 = vunpack.c.l.b16 %v235
      %v270 = vunpack.c.l.b16 %v236
      %v271 = vunpack.c.l.b16 %v237
      %v272 = vunpack.c.l.b16 %v238
      %v273 = vpack.c.b16 %v260, %v259
      %v274 = vpack.c.b16 %v262, %v261
      %v275 = vpack.c.b16 %v264, %v263
      %v276 = vpack.c.b16 %v266, %v265
      %v277 = vpack.c.b16 %v268, %v267
      %v278 = vpack.c.b16 %v270, %v269
      %v279 = vpack.c.b16 %v272, %v271
      %vm287 = vcmask 916480
      %v289 = vsel %vm287, %v224, 0
      %291 = vmatprep.subr.bf16.mxu0 0
      %292 = vmatpush1.bf16.msra.mxu0 %v273
      %293 = vmatprep.subr.bf16.mxu0 0
      %294 = vmatpush1.bf16.msra.mxu0 %v274
      %295 = vmatprep.subr.bf16.mxu0 0
      %296 = vmatpush1.bf16.msra.mxu0 %v275
      %297 = vmatprep.subr.bf16.mxu0 0
      %298 = vmatpush1.bf16.msra.mxu0 %v276
      %299 = vmatprep.subr.bf16.mxu0 0
      %300 = vmatpush1.bf16.msra.mxu0 %v277
      %301 = vmatprep.subr.bf16.mxu0 0
      %302 = vmatpush1.bf16.msra.mxu0 %v278
      %303 = vmatprep.subr.bf16.mxu0 0
      %304 = vmatpush1.bf16.msra.mxu0 %v279
      %305 = vmatprep.subr.bf16.mxu0 0
      %306 = vmatpush1.bf16.msra.mxu0 0
      %307 = vmatprep.subr.bf16.mxu0 0
      %308 = vmatpush1.bf16.msra.mxu0 0
      %309 = vmatprep.subr.bf16.mxu0 0
      %310 = vmatpush1.bf16.msra.mxu0 0
      %311 = vmatprep.subr.bf16.mxu0 0
      %312 = vmatpush1.bf16.msra.mxu0 0
      %313 = vmatprep.subr.bf16.mxu0 0
      %314 = vmatpush1.bf16.msra.mxu0 0
      %315 = vmatprep.subr.bf16.mxu0 0
      %316 = vmatpush1.bf16.msra.mxu0 0
      %317 = vmatprep.subr.bf16.mxu0 0
      %318 = vmatpush1.bf16.msra.mxu0 0
      %319 = vmatprep.subr.bf16.mxu0 0
      %320 = vmatpush1.bf16.msra.mxu0 0
      %321 = vmatprep.subr.bf16.mxu0 0
      %322 = vmatpush1.bf16.msra.mxu0 0
      %323 = vmatprep.mubr.bf16.mxu0 0
      %324 = vmatmul.mubr.bf16.gmra.mrb[0].mxu0 %v289
      %v325 = vpop.f32.mrb[0].mxu0
      %v326 = vadd.f32 %v243, %v325
      %v327 = vpop.f32.mrb[0].mxu0
      %v328 = vpop.f32.mrb[0].mxu0
      %v329 = vpop.f32.mrb[0].mxu0
      %330 = vdwg.mxu0
      %vm331 = vcmask 523264
      %v332 = vsel %vm331, %v326, 0.0
      %333 = vadd.xlane.f32.xlu0 %v332
      %v334 = vpop.xlane.xlu0 %333
      %v335 = vrcp.pop 64.0
      %v336 = vmul.f32 %v334, %v335
      %v337 = vsub.f32 %v326, %v336
      %v338 = vmul.f32 %v337, %v337
      %v339 = vsel %vm331, %v338, 0.0
      %340 = vadd.xlane.f32.xlu0 %v339
      %v341 = vpop.xlane.xlu0 %340
      %v342 = vmul.f32 %v341, %v335
      %v343 = vadd.f32 %v342, 1e-05
      %v344 = vrsqrt.pop %v343
      %v345 = vmul.f32 %v337, %v344
      %v346 = vld [vmem:[%s3] sm:$0xff]
      %348 = vset.pattern.permute.xlu0 0
      %349 = vperm.xlu0 %348, %v346
      %v350 = vpop.permute.xlu0 %349
      %v352 = vmul.f32 %v345, %v350
      %v353 = vld [vmem:[%s4] sm:$0xff]
      %355 = vset.pattern.permute.xlu0 0
      %356 = vperm.xlu0 %355, %v353
      %v357 = vpop.permute.xlu0 %356
      %v359 = vadd.f32 %v352, %v357
      %vm360 = vcmp.ge.f32.partialorder %v359, 0.0
      %v361 = vmul.f32 %v359, 0.01
      %v362 = vsel %vm360, %v359, %v361
      %363 = vst.msk [vmem:[%s222] sm:$0xff] %vm331, %v362
      %p364 = scmp.lt.s32.totalorder %s16, 1
      %s365 = scalar_select %p364, %s16, 1
      %s366 = smul.addr %s365, 8
      %s367 = scalar_lea.vmem %s5, %s366
      // Predicated region
      $region41: #{attn_fpn_forward.11} parent=39 // pred_check
        %p368 = pneg %p144
      $region42: #{attn_fpn_forward.11} parent=39 // pred_check_branch
        %370 = sbr.rel (%p368) target = $region44
      $region43: #{attn_fpn_forward.11} parent=39 // pred_region
        _
      $region44: #{attn_fpn_forward.11} parent=39 // pred_fallthru
        _
    $region40: #{attn_fpn_forward.11} parent=5 // pred_fallthru
      _
    %p371 = scmp.le.s32.totalorder 2, %s11
    // Predicated region
    $region45: #{attn_fpn_forward.11} parent=5 // pred_check
      %p372 = pneg %p371
    $region46: #{attn_fpn_forward.11} parent=5 // pred_check_branch
      %374 = sbr.rel (%p372) target = $region48
    $region47: #{attn_fpn_forward.11} parent=5 // pred_region
      %s375 = ssub.s32 %s11, 2
      // Predicated region
      $region49: #{attn_fpn_forward.11} parent=47 // pred_check
        %p376 = pneg %p150
      $region50: #{attn_fpn_forward.11} parent=47 // pred_check_branch
        %378 = sbr.rel (%p376) target = $region52
      $region51: #{attn_fpn_forward.11} parent=47 // pred_region
        %p379 = scmp.lt.s32.totalorder %s17, 1
        %s380 = scalar_select %p379, %s17, 1
        %s381 = smul.addr %s380, 8
        %s382 = scalar_lea.vmem %s5, %s381
      $region52: #{attn_fpn_forward.11} parent=47 // pred_fallthru
        _
    $region48: #{attn_fpn_forward.11} parent=5 // pred_fallthru
      _
  $region6: #{attn_fpn_forward.11} parent=0 // loop_footer
    %s15 = sadd.s32 1, %s11
  $region7: #{attn_fpn_forward.11} parent=0 // loop_footer_branch
    %10 = sbr.rel target = $region3
  $region8: #{attn_fpn_forward.11} parent=0 // loop_exit
    _

// kernel: attn_fpn_forward.12
$region0: #{attn_fpn_forward.12}
  #allocation0 [shape = 'u32[]', space=smem, size = 0x4, offset = 0x4, fixed_abs, tag = 'smem constant byte address 0x4 - core index']
  #allocation1 [shape = 'u32[144,128]{1,0:T(1,128)}', space=vmem, size = 0x12000, scoped, tag = 'internal scratch']
  %s0 = inlined_call_operand.vmem [shape: bf16[8,216], index: 0, kind: input, shape index: {}]
  %s1 = inlined_call_operand.vmem [shape: bf16[2,216,64], index: 1, kind: input, shape index: {}]
  %s2 = inlined_call_operand.vmem [shape: f32[8,1], index: 2, kind: input, shape index: {}]
  %s3 = inlined_call_operand.vmem [shape: f32[8,1], index: 3, kind: input, shape index: {}]
  %s4 = inlined_call_operand.vmem [shape: f32[8,1], index: 4, kind: input, shape index: {}]
  %s5 = inlined_call_operand.vmem [shape: f32[8,8], index: 5, kind: input, shape index: {}]
  %s6 = inlined_call_operand.vmem [shape: f32[8,1], index: 6, kind: input, shape index: {}]
  %s7 = inlined_call_operand.vmem [shape: f32[2,8,64], index: 7, kind: output, shape index: {0}]
  %s8 = inlined_call_operand.vmem [shape: f32[2,8,64], index: 8, kind: output, shape index: {1}]
  %9 = xla_tuple %s7, %s8
  %s10 = sld [smem:[#allocation0]]
  $region69: #{attn_fpn_forward.12} parent=0
    _
  %s12 = ssub.s32 1, %s10
  %s13 = scalar_select 0, %s12, %s10
  loop: start=0, step=1, limit=4
  $region2: #{attn_fpn_forward.12} parent=0 // loop_pre_header
    _
  $region3: #{attn_fpn_forward.12} parent=0 // loop_header
    %s15 = sphi 0, %s19
    %p16 = scmp.ge.s32.totalorder %s15, 4
    %s23 = sphi 0, %s23
    %s25 = sphi 0, %s23
    %s26 = sphi 0, %s25
    %s40 = sphi 0, %s26
    %s46 = sphi 0, %s48
    %s49 = sphi 0, %s46
    %s50 = sphi 0, %s49
    %s66 = sphi 0, %s50
    %s70 = sphi 0, %s70
    %s72 = sphi 0, %s70
    %s73 = sphi 0, %s72
    %s87 = sphi 0, %s73
    %s91 = sphi 0, %s91
    %s93 = sphi 0, %s91
    %s94 = sphi 0, %s93
    %s108 = sphi 0, %s94
    %s112 = sphi 0, %s112
    %s114 = sphi 0, %s112
    %s115 = sphi 0, %s114
    %s129 = sphi 0, %s115
    %s133 = sphi 0, %s133
    %s135 = sphi 0, %s133
    %s136 = sphi 0, %s135
    %s150 = sphi 0, %s136
    %s154 = sphi 0, %s154
    %s156 = sphi 0, %s154
    %s157 = sphi 0, %s156
    %s171 = sphi 0, %s157
    %s177 = sphi 0, %s179
    %s180 = sphi 0, %s177
    %s181 = sphi 0, %s180
    %s197 = sphi 0, %s181
    %s203 = sphi 0, %s205
    %s206 = sphi 0, %s203
    %s207 = sphi 0, %s206
    %s223 = sphi 0, %s207
  $region4: #{attn_fpn_forward.12} parent=0 // loop_header_branch
    %18 = sbr.rel (%p16) target = $region8
  $region5: #{attn_fpn_forward.12} parent=0 // loop_body
    %s20 = ssub.s32 %s15, 1
    %s21 = ssub.s32 %s15, 2
    %s22 = sadd.s32 %s15, 1
    %s24 = sadd.s32 %s23, 1
    %p27 = scmp.eq.s32.totalorder %s15, 1
    %p28 = scmp.ne.s32.totalorder %s23, %s25
    %p29 = scmp.eq.s32.totalorder %s15, 0
    %p30 = por %p28, %p29
    %p31 = scmp.ne.s32.totalorder %s23, %s25
    %p32 = scmp.eq.s32.totalorder %s20, 1
    %p33 = por %p31, %p32
    %p34 = scmp.ne.s32.totalorder %s25, %s26
    %p35 = scmp.eq.s32.totalorder %s20, 0
    %p36 = por %p34, %p35
    %p37 = scmp.ne.s32.totalorder %s25, %s26
    %p38 = scmp.eq.s32.totalorder %s21, 1
    %p39 = por %p37, %p38
    %p41 = scmp.ne.s32.totalorder %s26, %s40
    %p42 = scmp.eq.s32.totalorder %s21, 0
    %p43 = por %p41, %p42
    %s44 = ssub.s32 %s15, %s22
    %p45 = scmp.eq.s32.totalorder %s44, 0
    %s47 = sadd.s32 %s46, 1
    %s48 = scalar_select %p45, %s46, %s47
    %p51 = pneg %p45
    %p52 = scmp.eq.s32.totalorder %s15, 1
    %p53 = por %p51, %p52
    %p54 = scmp.ne.s32.totalorder %s46, %s49
    %p55 = scmp.eq.s32.totalorder %s15, 0
    %p56 = por %p54, %p55
    %p57 = scmp.ne.s32.totalorder %s46, %s49
    %p58 = scmp.eq.s32.totalorder %s20, 1
    %p59 = por %p57, %p58
    %p60 = scmp.ne.s32.totalorder %s49, %s50
    %p61 = scmp.eq.s32.totalorder %s20, 0
    %p62 = por %p60, %p61
    %p63 = scmp.ne.s32.totalorder %s49, %s50
    %p64 = scmp.eq.s32.totalorder %s21, 1
    %p65 = por %p63, %p64
    %p67 = scmp.ne.s32.totalorder %s50, %s66
    %p68 = scmp.eq.s32.totalorder %s21, 0
    %p69 = por %p67, %p68
    %s71 = sadd.s32 %s70, 1
    %p74 = scmp.eq.s32.totalorder %s15, 1
    %p75 = scmp.ne.s32.totalorder %s70, %s72
    %p76 = scmp.eq.s32.totalorder %s15, 0
    %p77 = por %p75, %p76
    %p78 = scmp.ne.s32.totalorder %s70, %s72
    %p79 = scmp.eq.s32.totalorder %s20, 1
    %p80 = por %p78, %p79
    %p81 = scmp.ne.s32.totalorder %s72, %s73
    %p82 = scmp.eq.s32.totalorder %s20, 0
    %p83 = por %p81, %p82
    %p84 = scmp.ne.s32.totalorder %s72, %s73
    %p85 = scmp.eq.s32.totalorder %s21, 1
    %p86 = por %p84, %p85
    %p88 = scmp.ne.s32.totalorder %s73, %s87
    %p89 = scmp.eq.s32.totalorder %s21, 0
    %p90 = por %p88, %p89
    %s92 = sadd.s32 %s91, 1
    %p95 = scmp.eq.s32.totalorder %s15, 1
    %p96 = scmp.ne.s32.totalorder %s91, %s93
    %p97 = scmp.eq.s32.totalorder %s15, 0
    %p98 = por %p96, %p97
    %p99 = scmp.ne.s32.totalorder %s91, %s93
    %p100 = scmp.eq.s32.totalorder %s20, 1
    %p101 = por %p99, %p100
    %p102 = scmp.ne.s32.totalorder %s93, %s94
    %p103 = scmp.eq.s32.totalorder %s20, 0
    %p104 = por %p102, %p103
    %p105 = scmp.ne.s32.totalorder %s93, %s94
    %p106 = scmp.eq.s32.totalorder %s21, 1
    %p107 = por %p105, %p106
    %p109 = scmp.ne.s32.totalorder %s94, %s108
    %p110 = scmp.eq.s32.totalorder %s21, 0
    %p111 = por %p109, %p110
    %s113 = sadd.s32 %s112, 1
    %p116 = scmp.eq.s32.totalorder %s15, 1
    %p117 = scmp.ne.s32.totalorder %s112, %s114
    %p118 = scmp.eq.s32.totalorder %s15, 0
    %p119 = por %p117, %p118
    %p120 = scmp.ne.s32.totalorder %s112, %s114
    %p121 = scmp.eq.s32.totalorder %s20, 1
    %p122 = por %p120, %p121
    %p123 = scmp.ne.s32.totalorder %s114, %s115
    %p124 = scmp.eq.s32.totalorder %s20, 0
    %p125 = por %p123, %p124
    %p126 = scmp.ne.s32.totalorder %s114, %s115
    %p127 = scmp.eq.s32.totalorder %s21, 1
    %p128 = por %p126, %p127
    %p130 = scmp.ne.s32.totalorder %s115, %s129
    %p131 = scmp.eq.s32.totalorder %s21, 0
    %p132 = por %p130, %p131
    %s134 = sadd.s32 %s133, 1
    %p137 = scmp.eq.s32.totalorder %s15, 1
    %p138 = scmp.ne.s32.totalorder %s133, %s135
    %p139 = scmp.eq.s32.totalorder %s15, 0
    %p140 = por %p138, %p139
    %p141 = scmp.ne.s32.totalorder %s133, %s135
    %p142 = scmp.eq.s32.totalorder %s20, 1
    %p143 = por %p141, %p142
    %p144 = scmp.ne.s32.totalorder %s135, %s136
    %p145 = scmp.eq.s32.totalorder %s20, 0
    %p146 = por %p144, %p145
    %p147 = scmp.ne.s32.totalorder %s135, %s136
    %p148 = scmp.eq.s32.totalorder %s21, 1
    %p149 = por %p147, %p148
    %p151 = scmp.ne.s32.totalorder %s136, %s150
    %p152 = scmp.eq.s32.totalorder %s21, 0
    %p153 = por %p151, %p152
    %s155 = sadd.s32 %s154, 1
    %p158 = scmp.eq.s32.totalorder %s15, 1
    %p159 = scmp.ne.s32.totalorder %s154, %s156
    %p160 = scmp.eq.s32.totalorder %s15, 0
    %p161 = por %p159, %p160
    %p162 = scmp.ne.s32.totalorder %s154, %s156
    %p163 = scmp.eq.s32.totalorder %s20, 1
    %p164 = por %p162, %p163
    %p165 = scmp.ne.s32.totalorder %s156, %s157
    %p166 = scmp.eq.s32.totalorder %s20, 0
    %p167 = por %p165, %p166
    %p168 = scmp.ne.s32.totalorder %s156, %s157
    %p169 = scmp.eq.s32.totalorder %s21, 1
    %p170 = por %p168, %p169
    %p172 = scmp.ne.s32.totalorder %s157, %s171
    %p173 = scmp.eq.s32.totalorder %s21, 0
    %p174 = por %p172, %p173
    %s175 = ssub.s32 %s15, %s22
    %p176 = scmp.eq.s32.totalorder %s175, 0
    %s178 = sadd.s32 %s177, 1
    %s179 = scalar_select %p176, %s177, %s178
    %p182 = pneg %p176
    %p183 = scmp.eq.s32.totalorder %s15, 1
    %p184 = por %p182, %p183
    %p185 = scmp.ne.s32.totalorder %s177, %s180
    %p186 = scmp.eq.s32.totalorder %s15, 0
    %p187 = por %p185, %p186
    %p188 = scmp.ne.s32.totalorder %s177, %s180
    %p189 = scmp.eq.s32.totalorder %s20, 1
    %p190 = por %p188, %p189
    %p191 = scmp.ne.s32.totalorder %s180, %s181
    %p192 = scmp.eq.s32.totalorder %s20, 0
    %p193 = por %p191, %p192
    %p194 = scmp.ne.s32.totalorder %s180, %s181
    %p195 = scmp.eq.s32.totalorder %s21, 1
    %p196 = por %p194, %p195
    %p198 = scmp.ne.s32.totalorder %s181, %s197
    %p199 = scmp.eq.s32.totalorder %s21, 0
    %p200 = por %p198, %p199
    %s201 = ssub.s32 %s15, %s22
    %p202 = scmp.eq.s32.totalorder %s201, 0
    %s204 = sadd.s32 %s203, 1
    %s205 = scalar_select %p202, %s203, %s204
    %p208 = pneg %p202
    %p209 = scmp.eq.s32.totalorder %s15, 1
    %p210 = por %p208, %p209
    %p211 = scmp.ne.s32.totalorder %s203, %s206
    %p212 = scmp.eq.s32.totalorder %s15, 0
    %p213 = por %p211, %p212
    %p214 = scmp.ne.s32.totalorder %s203, %s206
    %p215 = scmp.eq.s32.totalorder %s20, 1
    %p216 = por %p214, %p215
    %p217 = scmp.ne.s32.totalorder %s206, %s207
    %p218 = scmp.eq.s32.totalorder %s20, 0
    %p219 = por %p217, %p218
    %p220 = scmp.ne.s32.totalorder %s206, %s207
    %p221 = scmp.eq.s32.totalorder %s21, 1
    %p222 = por %p220, %p221
    %p224 = scmp.ne.s32.totalorder %s207, %s223
    %p225 = scmp.eq.s32.totalorder %s21, 0
    %p226 = por %p224, %p225
    %p227 = scmp.le.s32.totalorder 1, %s15
    %p228 = scmp.lt.s32.totalorder %s15, 3
    %p229 = pnand %p227, %p228
    %p230 = pneg %p229
    // Predicated region
    $region9: #{attn_fpn_forward.12} parent=5 // pred_check
      _
    $region10: #{attn_fpn_forward.12} parent=5 // pred_check_branch
      %232 = sbr.rel (%p229) target = $region12
    $region11: #{attn_fpn_forward.12} parent=5 // pred_region
      %s233 = ssub.s32 %s15, 1
      // Predicated region
      $region13: #{attn_fpn_forward.12} parent=11 // pred_check
        %p234 = pneg %p36
      $region14: #{attn_fpn_forward.12} parent=11 // pred_check_branch
        %236 = sbr.rel (%p234) target = $region16
      $region15: #{attn_fpn_forward.12} parent=11 // pred_region
        _
      $region16: #{attn_fpn_forward.12} parent=11 // pred_fallthru
        _
      // Predicated region
      $region17: #{attn_fpn_forward.12} parent=11 // pred_check
        %p237 = pneg %p83
      $region18: #{attn_fpn_forward.12} parent=11 // pred_check_branch
        %239 = sbr.rel (%p237) target = $region20
      $region19: #{attn_fpn_forward.12} parent=11 // pred_region
        _
      $region20: #{attn_fpn_forward.12} parent=11 // pred_fallthru
        _
      // Predicated region
      $region21: #{attn_fpn_forward.12} parent=11 // pred_check
        %p240 = pneg %p104
      $region22: #{attn_fpn_forward.12} parent=11 // pred_check_branch
        %242 = sbr.rel (%p240) target = $region24
      $region23: #{attn_fpn_forward.12} parent=11 // pred_region
        _
      $region24: #{attn_fpn_forward.12} parent=11 // pred_fallthru
        _
      // Predicated region
      $region25: #{attn_fpn_forward.12} parent=11 // pred_check
        %p243 = pneg %p125
      $region26: #{attn_fpn_forward.12} parent=11 // pred_check_branch
        %245 = sbr.rel (%p243) target = $region28
      $region27: #{attn_fpn_forward.12} parent=11 // pred_region
        _
      $region28: #{attn_fpn_forward.12} parent=11 // pred_fallthru
        _
      // Predicated region
      $region29: #{attn_fpn_forward.12} parent=11 // pred_check
        %p246 = pneg %p146
      $region30: #{attn_fpn_forward.12} parent=11 // pred_check_branch
        %248 = sbr.rel (%p246) target = $region32
      $region31: #{attn_fpn_forward.12} parent=11 // pred_region
        _
      $region32: #{attn_fpn_forward.12} parent=11 // pred_fallthru
        _
      // Predicated region
      $region33: #{attn_fpn_forward.12} parent=11 // pred_check
        %p249 = pneg %p167
      $region34: #{attn_fpn_forward.12} parent=11 // pred_check_branch
        %251 = sbr.rel (%p249) target = $region36
      $region35: #{attn_fpn_forward.12} parent=11 // pred_region
        _
      $region36: #{attn_fpn_forward.12} parent=11 // pred_fallthru
        _
    $region12: #{attn_fpn_forward.12} parent=5 // pred_fallthru
      _
    %p252 = scmp.lt.s32.totalorder %s15, 2
    // Predicated region
    $region37: #{attn_fpn_forward.12} parent=5 // pred_check
      %p253 = pneg %p252
    $region38: #{attn_fpn_forward.12} parent=5 // pred_check_branch
      %255 = sbr.rel (%p253) target = $region40
    $region39: #{attn_fpn_forward.12} parent=5 // pred_region
      // Predicated region
      $region41: #{attn_fpn_forward.12} parent=39 // pred_check
        %p256 = pneg %p56
      $region42: #{attn_fpn_forward.12} parent=39 // pred_check_branch
        %258 = sbr.rel (%p256) target = $region44
      $region43: #{attn_fpn_forward.12} parent=39 // pred_region
        %p259 = scmp.lt.s32.totalorder %s15, 1
        %s260 = scalar_select %p259, %s15, 1
        %s261 = smul.addr %s260, 27
        %s262 = smul.addr %s261, 4
        %s263 = scalar_lea.vmem %s1, %s262
      $region44: #{attn_fpn_forward.12} parent=39 // pred_fallthru
        _
    $region40: #{attn_fpn_forward.12} parent=5 // pred_fallthru
      _
    %p264 = scmp.le.s32.totalorder 1, %s15
    %p265 = scmp.lt.s32.totalorder %s15, 3
    %p266 = pnand %p264, %p265
    %p267 = pneg %p266
    // Predicated region
    $region45: #{attn_fpn_forward.12} parent=5 // pred_check
      _
    $region46: #{attn_fpn_forward.12} parent=5 // pred_check_branch
      %269 = sbr.rel (%p266) target = $region48
    $region47: #{attn_fpn_forward.12} parent=5 // pred_region
      %s270 = ssub.s32 %s15, 1
      %p271 = pneg %p36
      %p272 = pneg %p33
      %p273 = scmp.lt.s32.totalorder %s20, 1
      %s274 = scalar_select %p273, %s20, 1
      %s275 = smul.addr %s274, 27
      %s276 = smul.addr %s275, 4
      %s277 = scalar_lea.vmem %s1, %s276
      %p278 = pneg %p62
      %p279 = pneg %p59
      %p280 = pneg %p83
      %p281 = pneg %p80
      %p282 = pneg %p104
      %p283 = pneg %p101
      %p284 = pneg %p125
      %p285 = pneg %p122
      %p286 = pneg %p146
      %p287 = pneg %p143
      %p288 = pneg %p167
      %p289 = pneg %p164
      %p290 = pneg %p193
      %p291 = pneg %p190
      %p292 = scmp.lt.s32.totalorder %s20, 1
      %s293 = scalar_select %p292, %s20, 1
      %s294 = smul.addr %s293, 8
      %s295 = scalar_lea.vmem %s7, %s294
      %p296 = pneg %p219
      %p297 = pneg %p216
      %p298 = scmp.lt.s32.totalorder %s20, 1
      %s299 = scalar_select %p298, %s20, 1
      %s300 = smul.addr %s299, 8
      %s301 = scalar_lea.vmem %s8, %s300
      %p302 = scmp.lt.s32.totalorder %s20, 1
      %s303 = scalar_select %p302, %s20, 1
      %s304 = smul.addr %s303, 27
      %s305 = smul.addr %s304, 4
      %s306 = scalar_lea.vmem %s1, %s305
      %p307 = scmp.lt.s32.totalorder %s20, 1
      %s308 = scalar_select %p307, %s20, 1
      %s309 = smul.addr %s308, 8
      %s310 = scalar_lea.vmem %s7, %s309
      %p311 = scmp.lt.s32.totalorder %s20, 1
      %s312 = scalar_select %p311, %s20, 1
      %s313 = smul.addr %s312, 8
      %s314 = scalar_lea.vmem %s8, %s313
      %v316 = vld [vmem:[%s0] sm:$0xff]
      %v317 = vld [vmem:[%s306] sm:$0xf]
      %v318 = vld [vmem:[%s306 + $0x4] sm:$0xf]
      %v319 = vld [vmem:[%s306 + $0x8] sm:$0xf]
      %v320 = vld [vmem:[%s306 + $0xc] sm:$0xf]
      %v321 = vld [vmem:[%s306 + $0x10] sm:$0xf]
      %v322 = vld [vmem:[%s306 + $0x14] sm:$0xf]
      %v323 = vld [vmem:[%s306 + $0x18] sm:$0xf]
      %v324 = vld [vmem:[%s306 + $0x1c] sm:$0xf]
      %v325 = vld [vmem:[%s306 + $0x20] sm:$0xf]
      %v326 = vld [vmem:[%s306 + $0x24] sm:$0xf]
      %v327 = vld [vmem:[%s306 + $0x28] sm:$0xf]
      %v328 = vld [vmem:[%s306 + $0x2c] sm:$0xf]
      %v329 = vld [vmem:[%s306 + $0x30] sm:$0xf]
      %v330 = vld [vmem:[%s306 + $0x34] sm:$0xf]
      %v331 = vld [vmem:[%s306 + $0x38] sm:$0xf]
      %v332 = vld [vmem:[%s306 + $0x3c] sm:$0xf]
      %v333 = vld [vmem:[%s306 + $0x40] sm:$0xf]
      %v334 = vld [vmem:[%s306 + $0x44] sm:$0xf]
      %v335 = vld [vmem:[%s306 + $0x48] sm:$0xf]
      %v336 = vld [vmem:[%s306 + $0x4c] sm:$0xf]
      %v337 = vld [vmem:[%s306 + $0x50] sm:$0xf]
      %v338 = vld [vmem:[%s306 + $0x54] sm:$0xf]
      %v339 = vld [vmem:[%s306 + $0x58] sm:$0xf]
      %v340 = vld [vmem:[%s306 + $0x5c] sm:$0xf]
      %v341 = vld [vmem:[%s306 + $0x60] sm:$0xf]
      %v342 = vld [vmem:[%s306 + $0x64] sm:$0xf]
      %v343 = vld [vmem:[%s306 + $0x68] sm:$0xf]
      %v344 = vld [vmem:[%s2] sm:$0xff]
      %346 = vset.pattern.permute.xlu0 0
      %347 = vperm.xlu0 %346, %v344
      %v348 = vpop.permute.xlu0 %347
      %v351 = vunpack.c.l.b16 %v316
      %v352 = vunpack.c.h.b16 %v316
      %v353 = vpack.c.b16 %v351, %v351
      %v354 = vpack.c.b16 %v352, %v352
      %v383 = vunpack.c.l.b16 %v317
      %v384 = vunpack.c.l.b16 %v318
      %v385 = vunpack.c.l.b16 %v319
      %v386 = vunpack.c.l.b16 %v320
      %v387 = vunpack.c.l.b16 %v321
      %v388 = vunpack.c.l.b16 %v322
      %v389 = vunpack.c.l.b16 %v323
      %v390 = vunpack.c.l.b16 %v324
      %v391 = vunpack.c.l.b16 %v325
      %v392 = vunpack.c.l.b16 %v326
      %v393 = vunpack.c.l.b16 %v327
      %v394 = vunpack.c.l.b16 %v328
      %v395 = vunpack.c.l.b16 %v329
      %v396 = vunpack.c.l.b16 %v330
      %v397 = vunpack.c.l.b16 %v331
      %v398 = vunpack.c.l.b16 %v332
      %v399 = vunpack.c.l.b16 %v333
      %v400 = vunpack.c.l.b16 %v334
      %v401 = vunpack.c.l.b16 %v335
      %v402 = vunpack.c.l.b16 %v336
      %v403 = vunpack.c.l.b16 %v337
      %v404 = vunpack.c.l.b16 %v338
      %v405 = vunpack.c.l.b16 %v339
      %v406 = vunpack.c.l.b16 %v340
      %v407 = vunpack.c.l.b16 %v341
      %v408 = vunpack.c.l.b16 %v342
      %v409 = vunpack.c.l.b16 %v343
      %v410 = vpack.c.b16 %v384, %v383
      %v411 = vpack.c.b16 %v386, %v385
      %v412 = vpack.c.b16 %v388, %v387
      %v413 = vpack.c.b16 %v390, %v389
      %v414 = vpack.c.b16 %v392, %v391
      %v415 = vpack.c.b16 %v394, %v393
      %v416 = vpack.c.b16 %v396, %v395
      %v417 = vpack.c.b16 %v398, %v397
      %v418 = vpack.c.b16 %v400, %v399
      %v419 = vpack.c.b16 %v402, %v401
      %v420 = vpack.c.b16 %v404, %v403
      %v421 = vpack.c.b16 %v406, %v405
      %v422 = vpack.c.b16 %v408, %v407
      %v423 = vpack.c.b16 %v409, %v409
      %vm437 = vcmask 719872
      %v439 = vsel %vm437, %v354, 0
      %vm441 = vcmask 1043456
      %v443 = vsel %vm441, %v423, 0
      %445 = vmatprep.subr.bf16.mxu0 0
      %446 = vmatpush1.bf16.msra.mxu0 %v410
      %447 = vmatprep.subr.bf16.mxu0 0
      %448 = vmatpush1.bf16.msra.mxu0 %v411
      %449 = vmatprep.subr.bf16.mxu0 0
      %450 = vmatpush1.bf16.msra.mxu0 %v412
      %451 = vmatprep.subr.bf16.mxu0 0
      %452 = vmatpush1.bf16.msra.mxu0 %v413
      %453 = vmatprep.subr.bf16.mxu0 0
      %454 = vmatpush1.bf16.msra.mxu0 %v414
      %455 = vmatprep.subr.bf16.mxu0 0
      %456 = vmatpush1.bf16.msra.mxu0 %v415
      %457 = vmatprep.subr.bf16.mxu0 0
      %458 = vmatpush1.bf16.msra.mxu0 %v416
      %459 = vmatprep.subr.bf16.mxu0 0
      %460 = vmatpush1.bf16.msra.mxu0 %v417
      %461 = vmatprep.subr.bf16.mxu0 0
      %462 = vmatpush1.bf16.msra.mxu0 %v418
      %463 = vmatprep.subr.bf16.mxu0 0
      %464 = vmatpush1.bf16.msra.mxu0 %v419
      %465 = vmatprep.subr.bf16.mxu0 0
      %466 = vmatpush1.bf16.msra.mxu0 %v420
      %467 = vmatprep.subr.bf16.mxu0 0
      %468 = vmatpush1.bf16.msra.mxu0 %v421
      %469 = vmatprep.subr.bf16.mxu0 0
      %470 = vmatpush1.bf16.msra.mxu0 %v422
      %471 = vmatprep.subr.bf16.mxu0 0
      %472 = vmatpush1.bf16.msra.mxu0 %v443
      %473 = vmatprep.subr.bf16.mxu0 0
      %474 = vmatpush1.bf16.msra.mxu0 0
      %475 = vmatprep.subr.bf16.mxu0 0
      %476 = vmatpush1.bf16.msra.mxu0 0
      %477 = vmatprep.mubr.bf16.mxu0 %v439
      %478 = vmatmul.mubr.bf16.gmra.mrb[0].mxu0 %v353
      %v479 = vpop.f32.mrb[0].mxu0
      %v480 = vadd.f32 %v348, %v479
      %v481 = vpop.f32.mrb[0].mxu0
      %v482 = vpop.f32.mrb[0].mxu0
      %v483 = vpop.f32.mrb[0].mxu0
      %484 = vdwg.mxu0
      %vm485 = vcmask 523264
      %v486 = vsel %vm485, %v480, 0.0
      %487 = vadd.xlane.f32.xlu0 %v486
      %v488 = vpop.xlane.xlu0 %487
      %v489 = vrcp.pop 64.0
      %v490 = vmul.f32 %v488, %v489
      %v491 = vsub.f32 %v480, %v490
      %v492 = vmul.f32 %v491, %v491
      %v493 = vsel %vm485, %v492, 0.0
      %494 = vadd.xlane.f32.xlu0 %v493
      %v495 = vpop.xlane.xlu0 %494
      %v496 = vmul.f32 %v495, %v489
      %v497 = vadd.f32 %v496, 1e-05
      %v498 = vrsqrt.pop %v497
      %v499 = vmul.f32 %v491, %v498
      %v500 = vld [vmem:[%s3] sm:$0xff]
      %502 = vset.pattern.permute.xlu0 0
      %503 = vperm.xlu0 %502, %v500
      %v504 = vpop.permute.xlu0 %503
      %v506 = vmul.f32 %v499, %v504
      %v507 = vld [vmem:[%s4] sm:$0xff]
      %509 = vset.pattern.permute.xlu0 0
      %510 = vperm.xlu0 %509, %v507
      %v511 = vpop.permute.xlu0 %510
      %v513 = vadd.f32 %v506, %v511
      %vm514 = vcmp.ge.f32.partialorder %v513, 0.0
      %v515 = vmul.f32 %v513, 0.01
      %v516 = vsel %vm514, %v513, %v515
      %517 = vst.msk [vmem:[%s310] sm:$0xff] %vm485, %v516
      %v518 = vld [vmem:[%s5] sm:$0xff]
      %v519 = vld [vmem:[%s6] sm:$0xff]
      %521 = vset.pattern.permute.xlu0 0
      %522 = vperm.xlu0 %521, %v519
      %v523 = vpop.permute.xlu0 %522
      %vm525 = vcmask 64512
      %v527 = vsel %vm525, %v518, 0
      %529 = vmatprep.subr.mxu0 0.0
      %530 = vmatpush1.msra.mxu0 %v516
      %531 = vmatprep.subr.mxu0 0.0
      %532 = vmatpush1.msra.mxu0 0.0
      %533 = vmatprep.subr.mxu0 0.0
      %534 = vmatpush1.msra.mxu0 0.0
      %535 = vmatprep.subr.mxu0 0.0
      %536 = vmatpush1.msra.mxu0 0.0
      %537 = vmatprep.subr.mxu0 0.0
      %538 = vmatpush1.msra.mxu0 0.0
      %539 = vmatprep.subr.mxu0 0.0
      %540 = vmatpush1.msra.mxu0 0.0
      %541 = vmatprep.subr.mxu0 0.0
      %542 = vmatpush1.msra.mxu0 0.0
      %543 = vmatprep.subr.mxu0 0.0
      %544 = vmatpush1.msra.mxu0 0.0
      %545 = vmatprep.subr.mxu0 0.0
      %546 = vmatpush1.msra.mxu0 0.0
      %547 = vmatprep.subr.mxu0 0.0
      %548 = vmatpush1.msra.mxu0 0.0
      %549 = vmatprep.subr.mxu0 0.0
      %550 = vmatpush1.msra.mxu0 0.0
      %551 = vmatprep.subr.mxu0 0.0
      %552 = vmatpush1.msra.mxu0 0.0
      %553 = vmatprep.subr.mxu0 0.0
      %554 = vmatpush1.msra.mxu0 0.0
      %555 = vmatprep.subr.mxu0 0.0
      %556 = vmatpush1.msra.mxu0 0.0
      %557 = vmatprep.subr.mxu0 0.0
      %558 = vmatpush1.msra.mxu0 0.0
      %559 = vmatprep.subr.mxu0 0.0
      %560 = vmatpush1.msra.mxu0 0.0
      %561 = vmatprep.subr.mxu0 0.0
      %562 = vmatpush1.msra.mxu0 0.0
      %563 = vmatprep.subr.mxu0 0.0
      %564 = vmatpush1.msra.mxu0 0.0
      %565 = vmatprep.subr.mxu0 0.0
      %566 = vmatpush1.msra.mxu0 0.0
      %567 = vmatprep.subr.mxu0 0.0
      %568 = vmatpush1.msra.mxu0 0.0
      %569 = vmatprep.subr.mxu0 0.0
      %570 = vmatpush1.msra.mxu0 0.0
      %571 = vmatprep.subr.mxu0 0.0
      %572 = vmatpush1.msra.mxu0 0.0
      %573 = vmatprep.subr.mxu0 0.0
      %574 = vmatpush1.msra.mxu0 0.0
      %575 = vmatprep.subr.mxu0 0.0
      %576 = vmatpush1.msra.mxu0 0.0
      %577 = vmatprep.subr.mxu0 0.0
      %578 = vmatpush1.msra.mxu0 0.0
      %579 = vmatprep.subr.mxu0 0.0
      %580 = vmatpush1.msra.mxu0 0.0
      %581 = vmatprep.subr.mxu0 0.0
      %582 = vmatpush1.msra.mxu0 0.0
      %583 = vmatprep.subr.mxu0 0.0
      %584 = vmatpush1.msra.mxu0 0.0
      %585 = vmatprep.subr.mxu0 0.0
      %586 = vmatpush1.msra.mxu0 0.0
      %587 = vmatprep.subr.mxu0 0.0
      %588 = vmatpush1.msra.mxu0 0.0
      %589 = vmatprep.subr.mxu0 0.0
      %590 = vmatpush1.msra.mxu0 0.0
      %591 = vmatprep.subr.mxu0 0.0
      %592 = vmatpush1.msra.mxu0 0.0
      %593 = vmatprep.mubr.f32.mxu0 0.0
      %594 = vmatmul.mubr.f32.gmra.mrb[0].mxu0 %v527
      %v595 = vpop.f32.mrb[0].mxu0
      %v596 = vadd.f32 %v523, %v595
      %v597 = vpop.f32.mrb[0].mxu0
      %598 = vdwg.mxu0
      %599 = vst.msk [vmem:[%s314] sm:$0xff] %vm485, %v596
      %p600 = scmp.lt.s32.totalorder %s20, 1
      %s601 = scalar_select %p600, %s20, 1
      %s602 = smul.addr %s601, 8
      %s603 = scalar_lea.vmem %s7, %s602
      %p604 = scmp.lt.s32.totalorder %s20, 1
      %s605 = scalar_select %p604, %s20, 1
      %s606 = smul.addr %s605, 8
      %s607 = scalar_lea.vmem %s8, %s606
      // Predicated region
      $region49: #{attn_fpn_forward.12} parent=47 // pred_check
        %p608 = pneg %p190
      $region50: #{attn_fpn_forward.12} parent=47 // pred_check_branch
        %610 = sbr.rel (%p608) target = $region52
      $region51: #{attn_fpn_forward.12} parent=47 // pred_region
        _
      $region52: #{attn_fpn_forward.12} parent=47 // pred_fallthru
        _
      // Predicated region
      $region53: #{attn_fpn_forward.12} parent=47 // pred_check
        %p611 = pneg %p216
      $region54: #{attn_fpn_forward.12} parent=47 // pred_check_branch
        %613 = sbr.rel (%p611) target = $region56
      $region55: #{attn_fpn_forward.12} parent=47 // pred_region
        _
      $region56: #{attn_fpn_forward.12} parent=47 // pred_fallthru
        _
    $region48: #{attn_fpn_forward.12} parent=5 // pred_fallthru
      _
    %p614 = scmp.le.s32.totalorder 2, %s15
    // Predicated region
    $region57: #{attn_fpn_forward.12} parent=5 // pred_check
      %p615 = pneg %p614
    $region58: #{attn_fpn_forward.12} parent=5 // pred_check_branch
      %617 = sbr.rel (%p615) target = $region60
    $region59: #{attn_fpn_forward.12} parent=5 // pred_region
      %s618 = ssub.s32 %s15, 2
      // Predicated region
      $region61: #{attn_fpn_forward.12} parent=59 // pred_check
        %p619 = pneg %p196
      $region62: #{attn_fpn_forward.12} parent=59 // pred_check_branch
        %621 = sbr.rel (%p619) target = $region64
      $region63: #{attn_fpn_forward.12} parent=59 // pred_region
        %p622 = scmp.lt.s32.totalorder %s21, 1
        %s623 = scalar_select %p622, %s21, 1
        %s624 = smul.addr %s623, 8
        %s625 = scalar_lea.vmem %s7, %s624
      $region64: #{attn_fpn_forward.12} parent=59 // pred_fallthru
        _
      // Predicated region
      $region65: #{attn_fpn_forward.12} parent=59 // pred_check
        %p626 = pneg %p222
      $region66: #{attn_fpn_forward.12} parent=59 // pred_check_branch
        %628 = sbr.rel (%p626) target = $region68
      $region67: #{attn_fpn_forward.12} parent=59 // pred_region
        %p629 = scmp.lt.s32.totalorder %s21, 1
        %s630 = scalar_select %p629, %s21, 1
        %s631 = smul.addr %s630, 8
        %s632 = scalar_lea.vmem %s8, %s631
      $region68: #{attn_fpn_forward.12} parent=59 // pred_fallthru
        _
    $region60: #{attn_fpn_forward.12} parent=5 // pred_fallthru
      _
  $region6: #{attn_fpn_forward.12} parent=0 // loop_footer
    %s19 = sadd.s32 1, %s15
  $region7: #{attn_fpn_forward.12} parent=0 // loop_footer_branch
    %14 = sbr.rel target = $region3
  $region8: #{attn_fpn_forward.12} parent=0 // loop_exit
    _

// kernel: attn_fpn_forward.13
$region0: #{attn_fpn_forward.13}
  #allocation0 [shape = 'u32[]', space=smem, size = 0x4, offset = 0x4, fixed_abs, tag = 'smem constant byte address 0x4 - core index']
  #allocation1 [shape = 'u32[144,128]{1,0:T(1,128)}', space=vmem, size = 0x12000, scoped, tag = 'internal scratch']
  %s0 = inlined_call_operand.vmem [shape: bf16[16,216], index: 0, kind: input, shape index: {}]
  %s1 = inlined_call_operand.vmem [shape: bf16[2,216,8], index: 1, kind: input, shape index: {}]
  %s2 = inlined_call_operand.vmem [shape: f32[16,1], index: 2, kind: input, shape index: {}]
  %s3 = inlined_call_operand.vmem [shape: f32[16,1], index: 3, kind: input, shape index: {}]
  %s4 = inlined_call_operand.vmem [shape: f32[16,1], index: 4, kind: input, shape index: {}]
  %s5 = inlined_call_operand.vmem [shape: f32[2,16,8], index: 5, kind: output, shape index: {}]
  %s6 = sld [smem:[#allocation0]]
  $region53: #{attn_fpn_forward.13} parent=0
    _
  %s8 = ssub.s32 1, %s6
  %s9 = scalar_select 0, %s8, %s6
  loop: start=0, step=1, limit=4
  $region2: #{attn_fpn_forward.13} parent=0 // loop_pre_header
    _
  $region3: #{attn_fpn_forward.13} parent=0 // loop_header
    %s11 = sphi 0, %s15
    %p12 = scmp.ge.s32.totalorder %s11, 4
    %s19 = sphi 0, %s19
    %s21 = sphi 0, %s19
    %s22 = sphi 0, %s21
    %s36 = sphi 0, %s22
    %s42 = sphi 0, %s44
    %s45 = sphi 0, %s42
    %s46 = sphi 0, %s45
    %s62 = sphi 0, %s46
    %s66 = sphi 0, %s66
    %s68 = sphi 0, %s66
    %s69 = sphi 0, %s68
    %s83 = sphi 0, %s69
    %s87 = sphi 0, %s87
    %s89 = sphi 0, %s87
    %s90 = sphi 0, %s89
    %s104 = sphi 0, %s90
    %s108 = sphi 0, %s108
    %s110 = sphi 0, %s108
    %s111 = sphi 0, %s110
    %s125 = sphi 0, %s111
    %s131 = sphi 0, %s133
    %s134 = sphi 0, %s131
    %s135 = sphi 0, %s134
    %s151 = sphi 0, %s135
  $region4: #{attn_fpn_forward.13} parent=0 // loop_header_branch
    %14 = sbr.rel (%p12) target = $region8
  $region5: #{attn_fpn_forward.13} parent=0 // loop_body
    %s16 = ssub.s32 %s11, 1
    %s17 = ssub.s32 %s11, 2
    %s18 = sadd.s32 %s11, 1
    %s20 = sadd.s32 %s19, 1
    %p23 = scmp.eq.s32.totalorder %s11, 1
    %p24 = scmp.ne.s32.totalorder %s19, %s21
    %p25 = scmp.eq.s32.totalorder %s11, 0
    %p26 = por %p24, %p25
    %p27 = scmp.ne.s32.totalorder %s19, %s21
    %p28 = scmp.eq.s32.totalorder %s16, 1
    %p29 = por %p27, %p28
    %p30 = scmp.ne.s32.totalorder %s21, %s22
    %p31 = scmp.eq.s32.totalorder %s16, 0
    %p32 = por %p30, %p31
    %p33 = scmp.ne.s32.totalorder %s21, %s22
    %p34 = scmp.eq.s32.totalorder %s17, 1
    %p35 = por %p33, %p34
    %p37 = scmp.ne.s32.totalorder %s22, %s36
    %p38 = scmp.eq.s32.totalorder %s17, 0
    %p39 = por %p37, %p38
    %s40 = ssub.s32 %s11, %s18
    %p41 = scmp.eq.s32.totalorder %s40, 0
    %s43 = sadd.s32 %s42, 1
    %s44 = scalar_select %p41, %s42, %s43
    %p47 = pneg %p41
    %p48 = scmp.eq.s32.totalorder %s11, 1
    %p49 = por %p47, %p48
    %p50 = scmp.ne.s32.totalorder %s42, %s45
    %p51 = scmp.eq.s32.totalorder %s11, 0
    %p52 = por %p50, %p51
    %p53 = scmp.ne.s32.totalorder %s42, %s45
    %p54 = scmp.eq.s32.totalorder %s16, 1
    %p55 = por %p53, %p54
    %p56 = scmp.ne.s32.totalorder %s45, %s46
    %p57 = scmp.eq.s32.totalorder %s16, 0
    %p58 = por %p56, %p57
    %p59 = scmp.ne.s32.totalorder %s45, %s46
    %p60 = scmp.eq.s32.totalorder %s17, 1
    %p61 = por %p59, %p60
    %p63 = scmp.ne.s32.totalorder %s46, %s62
    %p64 = scmp.eq.s32.totalorder %s17, 0
    %p65 = por %p63, %p64
    %s67 = sadd.s32 %s66, 1
    %p70 = scmp.eq.s32.totalorder %s11, 1
    %p71 = scmp.ne.s32.totalorder %s66, %s68
    %p72 = scmp.eq.s32.totalorder %s11, 0
    %p73 = por %p71, %p72
    %p74 = scmp.ne.s32.totalorder %s66, %s68
    %p75 = scmp.eq.s32.totalorder %s16, 1
    %p76 = por %p74, %p75
    %p77 = scmp.ne.s32.totalorder %s68, %s69
    %p78 = scmp.eq.s32.totalorder %s16, 0
    %p79 = por %p77, %p78
    %p80 = scmp.ne.s32.totalorder %s68, %s69
    %p81 = scmp.eq.s32.totalorder %s17, 1
    %p82 = por %p80, %p81
    %p84 = scmp.ne.s32.totalorder %s69, %s83
    %p85 = scmp.eq.s32.totalorder %s17, 0
    %p86 = por %p84, %p85
    %s88 = sadd.s32 %s87, 1
    %p91 = scmp.eq.s32.totalorder %s11, 1
    %p92 = scmp.ne.s32.totalorder %s87, %s89
    %p93 = scmp.eq.s32.totalorder %s11, 0
    %p94 = por %p92, %p93
    %p95 = scmp.ne.s32.totalorder %s87, %s89
    %p96 = scmp.eq.s32.totalorder %s16, 1
    %p97 = por %p95, %p96
    %p98 = scmp.ne.s32.totalorder %s89, %s90
    %p99 = scmp.eq.s32.totalorder %s16, 0
    %p100 = por %p98, %p99
    %p101 = scmp.ne.s32.totalorder %s89, %s90
    %p102 = scmp.eq.s32.totalorder %s17, 1
    %p103 = por %p101, %p102
    %p105 = scmp.ne.s32.totalorder %s90, %s104
    %p106 = scmp.eq.s32.totalorder %s17, 0
    %p107 = por %p105, %p106
    %s109 = sadd.s32 %s108, 1
    %p112 = scmp.eq.s32.totalorder %s11, 1
    %p113 = scmp.ne.s32.totalorder %s108, %s110
    %p114 = scmp.eq.s32.totalorder %s11, 0
    %p115 = por %p113, %p114
    %p116 = scmp.ne.s32.totalorder %s108, %s110
    %p117 = scmp.eq.s32.totalorder %s16, 1
    %p118 = por %p116, %p117
    %p119 = scmp.ne.s32.totalorder %s110, %s111
    %p120 = scmp.eq.s32.totalorder %s16, 0
    %p121 = por %p119, %p120
    %p122 = scmp.ne.s32.totalorder %s110, %s111
    %p123 = scmp.eq.s32.totalorder %s17, 1
    %p124 = por %p122, %p123
    %p126 = scmp.ne.s32.totalorder %s111, %s125
    %p127 = scmp.eq.s32.totalorder %s17, 0
    %p128 = por %p126, %p127
    %s129 = ssub.s32 %s11, %s18
    %p130 = scmp.eq.s32.totalorder %s129, 0
    %s132 = sadd.s32 %s131, 1
    %s133 = scalar_select %p130, %s131, %s132
    %p136 = pneg %p130
    %p137 = scmp.eq.s32.totalorder %s11, 1
    %p138 = por %p136, %p137
    %p139 = scmp.ne.s32.totalorder %s131, %s134
    %p140 = scmp.eq.s32.totalorder %s11, 0
    %p141 = por %p139, %p140
    %p142 = scmp.ne.s32.totalorder %s131, %s134
    %p143 = scmp.eq.s32.totalorder %s16, 1
    %p144 = por %p142, %p143
    %p145 = scmp.ne.s32.totalorder %s134, %s135
    %p146 = scmp.eq.s32.totalorder %s16, 0
    %p147 = por %p145, %p146
    %p148 = scmp.ne.s32.totalorder %s134, %s135
    %p149 = scmp.eq.s32.totalorder %s17, 1
    %p150 = por %p148, %p149
    %p152 = scmp.ne.s32.totalorder %s135, %s151
    %p153 = scmp.eq.s32.totalorder %s17, 0
    %p154 = por %p152, %p153
    %p155 = scmp.le.s32.totalorder 1, %s11
    %p156 = scmp.lt.s32.totalorder %s11, 3
    %p157 = pnand %p155, %p156
    %p158 = pneg %p157
    // Predicated region
    $region9: #{attn_fpn_forward.13} parent=5 // pred_check
      _
    $region10: #{attn_fpn_forward.13} parent=5 // pred_check_branch
      %160 = sbr.rel (%p157) target = $region12
    $region11: #{attn_fpn_forward.13} parent=5 // pred_region
      %s161 = ssub.s32 %s11, 1
      // Predicated region
      $region13: #{attn_fpn_forward.13} parent=11 // pred_check
        %p162 = pneg %p32
      $region14: #{attn_fpn_forward.13} parent=11 // pred_check_branch
        %164 = sbr.rel (%p162) target = $region16
      $region15: #{attn_fpn_forward.13} parent=11 // pred_region
        _
      $region16: #{attn_fpn_forward.13} parent=11 // pred_fallthru
        _
      // Predicated region
      $region17: #{attn_fpn_forward.13} parent=11 // pred_check
        %p165 = pneg %p79
      $region18: #{attn_fpn_forward.13} parent=11 // pred_check_branch
        %167 = sbr.rel (%p165) target = $region20
      $region19: #{attn_fpn_forward.13} parent=11 // pred_region
        _
      $region20: #{attn_fpn_forward.13} parent=11 // pred_fallthru
        _
      // Predicated region
      $region21: #{attn_fpn_forward.13} parent=11 // pred_check
        %p168 = pneg %p100
      $region22: #{attn_fpn_forward.13} parent=11 // pred_check_branch
        %170 = sbr.rel (%p168) target = $region24
      $region23: #{attn_fpn_forward.13} parent=11 // pred_region
        _
      $region24: #{attn_fpn_forward.13} parent=11 // pred_fallthru
        _
      // Predicated region
      $region25: #{attn_fpn_forward.13} parent=11 // pred_check
        %p171 = pneg %p121
      $region26: #{attn_fpn_forward.13} parent=11 // pred_check_branch
        %173 = sbr.rel (%p171) target = $region28
      $region27: #{attn_fpn_forward.13} parent=11 // pred_region
        _
      $region28: #{attn_fpn_forward.13} parent=11 // pred_fallthru
        _
    $region12: #{attn_fpn_forward.13} parent=5 // pred_fallthru
      _
    %p174 = scmp.lt.s32.totalorder %s11, 2
    // Predicated region
    $region29: #{attn_fpn_forward.13} parent=5 // pred_check
      %p175 = pneg %p174
    $region30: #{attn_fpn_forward.13} parent=5 // pred_check_branch
      %177 = sbr.rel (%p175) target = $region32
    $region31: #{attn_fpn_forward.13} parent=5 // pred_region
      // Predicated region
      $region33: #{attn_fpn_forward.13} parent=31 // pred_check
        %p178 = pneg %p52
      $region34: #{attn_fpn_forward.13} parent=31 // pred_check_branch
        %180 = sbr.rel (%p178) target = $region36
      $region35: #{attn_fpn_forward.13} parent=31 // pred_region
        %p181 = scmp.lt.s32.totalorder %s11, 1
        %s182 = scalar_select %p181, %s11, 1
        %s183 = smul.addr %s182, 27
        %s184 = smul.addr %s183, 4
        %s185 = scalar_lea.vmem %s1, %s184
      $region36: #{attn_fpn_forward.13} parent=31 // pred_fallthru
        _
    $region32: #{attn_fpn_forward.13} parent=5 // pred_fallthru
      _
    %p186 = scmp.le.s32.totalorder 1, %s11
    %p187 = scmp.lt.s32.totalorder %s11, 3
    %p188 = pnand %p186, %p187
    %p189 = pneg %p188
    // Predicated region
    $region37: #{attn_fpn_forward.13} parent=5 // pred_check
      _
    $region38: #{attn_fpn_forward.13} parent=5 // pred_check_branch
      %191 = sbr.rel (%p188) target = $region40
    $region39: #{attn_fpn_forward.13} parent=5 // pred_region
      %s192 = ssub.s32 %s11, 1
      %p193 = pneg %p32
      %p194 = pneg %p29
      %p195 = scmp.lt.s32.totalorder %s16, 1
      %s196 = scalar_select %p195, %s16, 1
      %s197 = smul.addr %s196, 27
      %s198 = smul.addr %s197, 4
      %s199 = scalar_lea.vmem %s1, %s198
      %p200 = pneg %p58
      %p201 = pneg %p55
      %p202 = pneg %p79
      %p203 = pneg %p76
      %p204 = pneg %p100
      %p205 = pneg %p97
      %p206 = pneg %p121
      %p207 = pneg %p118
      %p208 = pneg %p147
      %p209 = pneg %p144
      %p210 = scmp.lt.s32.totalorder %s16, 1
      %s211 = scalar_select %p210, %s16, 1
      %s212 = smul.addr %s211, 2
      %s213 = smul.addr %s212, 8
      %s214 = scalar_lea.vmem %s5, %s213
      %p215 = scmp.lt.s32.totalorder %s16, 1
      %s216 = scalar_select %p215, %s16, 1
      %s217 = smul.addr %s216, 27
      %s218 = smul.addr %s217, 4
      %s219 = scalar_lea.vmem %s1, %s218
      %p220 = scmp.lt.s32.totalorder %s16, 1
      %s221 = scalar_select %p220, %s16, 1
      %s222 = smul.addr %s221, 2
      %s223 = smul.addr %s222, 8
      %s224 = scalar_lea.vmem %s5, %s223
      %v226 = vld [vmem:[%s0] sm:$0xff]
      %v227 = vld [vmem:[%s0 + $0x8] sm:$0xff]
      %v228 = vld [vmem:[%s219] sm:$0xf]
      %v229 = vld [vmem:[%s219 + $0x4] sm:$0xf]
      %v230 = vld [vmem:[%s219 + $0x8] sm:$0xf]
      %v231 = vld [vmem:[%s219 + $0xc] sm:$0xf]
      %v232 = vld [vmem:[%s219 + $0x10] sm:$0xf]
      %v233 = vld [vmem:[%s219 + $0x14] sm:$0xf]
      %v234 = vld [vmem:[%s219 + $0x18] sm:$0xf]
      %v235 = vld [vmem:[%s219 + $0x1c] sm:$0xf]
      %v236 = vld [vmem:[%s219 + $0x20] sm:$0xf]
      %v237 = vld [vmem:[%s219 + $0x24] sm:$0xf]
      %v238 = vld [vmem:[%s219 + $0x28] sm:$0xf]
      %v239 = vld [vmem:[%s219 + $0x2c] sm:$0xf]
      %v240 = vld [vmem:[%s219 + $0x30] sm:$0xf]
      %v241 = vld [vmem:[%s219 + $0x34] sm:$0xf]
      %v242 = vld [vmem:[%s219 + $0x38] sm:$0xf]
      %v243 = vld [vmem:[%s219 + $0x3c] sm:$0xf]
      %v244 = vld [vmem:[%s219 + $0x40] sm:$0xf]
      %v245 = vld [vmem:[%s219 + $0x44] sm:$0xf]
      %v246 = vld [vmem:[%s219 + $0x48] sm:$0xf]
      %v247 = vld [vmem:[%s219 + $0x4c] sm:$0xf]
      %v248 = vld [vmem:[%s219 + $0x50] sm:$0xf]
      %v249 = vld [vmem:[%s219 + $0x54] sm:$0xf]
      %v250 = vld [vmem:[%s219 + $0x58] sm:$0xf]
      %v251 = vld [vmem:[%s219 + $0x5c] sm:$0xf]
      %v252 = vld [vmem:[%s219 + $0x60] sm:$0xf]
      %v253 = vld [vmem:[%s219 + $0x64] sm:$0xf]
      %v254 = vld [vmem:[%s219 + $0x68] sm:$0xf]
      %v255 = vld [vmem:[%s2] sm:$0xff]
      %v256 = vld [vmem:[%s2 + $0x8] sm:$0xff]
      %258 = vset.pattern.permute.xlu0 0
      %259 = vperm.xlu0 %258, %v255
      %v260 = vpop.permute.xlu0 %259
      %263 = vset.pattern.permute.xlu0 0
      %264 = vperm.xlu0 %263, %v256
      %v265 = vpop.permute.xlu0 %264
      %v269 = vunpack.c.l.b16 %v226
      %v270 = vunpack.c.h.b16 %v226
      %v271 = vunpack.c.l.b16 %v227
      %v272 = vunpack.c.h.b16 %v227
      %v273 = vpack.c.b16 %v271, %v269
      %v274 = vpack.c.b16 %v272, %v270
      %v303 = vunpack.c.l.b16 %v228
      %v304 = vunpack.c.l.b16 %v229
      %v305 = vunpack.c.l.b16 %v230
      %v306 = vunpack.c.l.b16 %v231
      %v307 = vunpack.c.l.b16 %v232
      %v308 = vunpack.c.l.b16 %v233
      %v309 = vunpack.c.l.b16 %v234
      %v310 = vunpack.c.l.b16 %v235
      %v311 = vunpack.c.l.b16 %v236
      %v312 = vunpack.c.l.b16 %v237
      %v313 = vunpack.c.l.b16 %v238
      %v314 = vunpack.c.l.b16 %v239
      %v315 = vunpack.c.l.b16 %v240
      %v316 = vunpack.c.l.b16 %v241
      %v317 = vunpack.c.l.b16 %v242
      %v318 = vunpack.c.l.b16 %v243
      %v319 = vunpack.c.l.b16 %v244
      %v320 = vunpack.c.l.b16 %v245
      %v321 = vunpack.c.l.b16 %v246
      %v322 = vunpack.c.l.b16 %v247
      %v323 = vunpack.c.l.b16 %v248
      %v324 = vunpack.c.l.b16 %v249
      %v325 = vunpack.c.l.b16 %v250
      %v326 = vunpack.c.l.b16 %v251
      %v327 = vunpack.c.l.b16 %v252
      %v328 = vunpack.c.l.b16 %v253
      %v329 = vunpack.c.l.b16 %v254
      %v330 = vpack.c.b16 %v304, %v303
      %v331 = vpack.c.b16 %v306, %v305
      %v332 = vpack.c.b16 %v308, %v307
      %v333 = vpack.c.b16 %v310, %v309
      %v334 = vpack.c.b16 %v312, %v311
      %v335 = vpack.c.b16 %v314, %v313
      %v336 = vpack.c.b16 %v316, %v315
      %v337 = vpack.c.b16 %v318, %v317
      %v338 = vpack.c.b16 %v320, %v319
      %v339 = vpack.c.b16 %v322, %v321
      %v340 = vpack.c.b16 %v324, %v323
      %v341 = vpack.c.b16 %v326, %v325
      %v342 = vpack.c.b16 %v328, %v327
      %v343 = vpack.c.b16 %v329, %v329
      %vm357 = vcmask 719872
      %v359 = vsel %vm357, %v274, 0
      %vm361 = vcmask 1043456
      %v363 = vsel %vm361, %v343, 0
      %365 = vmatprep.subr.bf16.mxu0 0
      %366 = vmatpush1.bf16.msra.mxu0 %v330
      %367 = vmatprep.subr.bf16.mxu0 0
      %368 = vmatpush1.bf16.msra.mxu0 %v331
      %369 = vmatprep.subr.bf16.mxu0 0
      %370 = vmatpush1.bf16.msra.mxu0 %v332
      %371 = vmatprep.subr.bf16.mxu0 0
      %372 = vmatpush1.bf16.msra.mxu0 %v333
      %373 = vmatprep.subr.bf16.mxu0 0
      %374 = vmatpush1.bf16.msra.mxu0 %v334
      %375 = vmatprep.subr.bf16.mxu0 0
      %376 = vmatpush1.bf16.msra.mxu0 %v335
      %377 = vmatprep.subr.bf16.mxu0 0
      %378 = vmatpush1.bf16.msra.mxu0 %v336
      %379 = vmatprep.subr.bf16.mxu0 0
      %380 = vmatpush1.bf16.msra.mxu0 %v337
      %381 = vmatprep.subr.bf16.mxu0 0
      %382 = vmatpush1.bf16.msra.mxu0 %v338
      %383 = vmatprep.subr.bf16.mxu0 0
      %384 = vmatpush1.bf16.msra.mxu0 %v339
      %385 = vmatprep.subr.bf16.mxu0 0
      %386 = vmatpush1.bf16.msra.mxu0 %v340
      %387 = vmatprep.subr.bf16.mxu0 0
      %388 = vmatpush1.bf16.msra.mxu0 %v341
      %389 = vmatprep.subr.bf16.mxu0 0
      %390 = vmatpush1.bf16.msra.mxu0 %v342
      %391 = vmatprep.subr.bf16.mxu0 0
      %392 = vmatpush1.bf16.msra.mxu0 %v363
      %393 = vmatprep.subr.bf16.mxu0 0
      %394 = vmatpush1.bf16.msra.mxu0 0
      %395 = vmatprep.subr.bf16.mxu0 0
      %396 = vmatpush1.bf16.msra.mxu0 0
      %397 = vmatprep.mubr.bf16.mxu0 %v359
      %398 = vmatmul.mubr.bf16.gmra.mrb[0].mxu0 %v273
      %v399 = vpop.f32.mrb[0].mxu0
      %v400 = vadd.f32 %v260, %v399
      %v401 = vpop.f32.mrb[0].mxu0
      %v402 = vpop.f32.mrb[0].mxu0
      %v403 = vadd.f32 %v265, %v402
      %v404 = vpop.f32.mrb[0].mxu0
      %405 = vdwg.mxu0
      %vm406 = vcmask 64512
      %v407 = vsel %vm406, %v400, 0.0
      %408 = vadd.xlane.f32.xlu0 %v407
      %v409 = vpop.xlane.xlu0 %408
      %v410 = vsel %vm406, %v403, 0.0
      %411 = vadd.xlane.f32.xlu0 %v410
      %v412 = vpop.xlane.xlu0 %411
      %v413 = vrcp.pop 8.0
      %v414 = vmul.f32 %v409, %v413
      %v415 = vmul.f32 %v412, %v413
      %v416 = vsub.f32 %v400, %v414
      %v417 = vsub.f32 %v403, %v415
      %v418 = vmul.f32 %v416, %v416
      %v419 = vmul.f32 %v417, %v417
      %v420 = vsel %vm406, %v418, 0.0
      %421 = vadd.xlane.f32.xlu0 %v420
      %v422 = vpop.xlane.xlu0 %421
      %v423 = vsel %vm406, %v419, 0.0
      %424 = vadd.xlane.f32.xlu0 %v423
      %v425 = vpop.xlane.xlu0 %424
      %v426 = vmul.f32 %v422, %v413
      %v427 = vmul.f32 %v425, %v413
      %v428 = vadd.f32 %v426, 1e-05
      %v429 = vadd.f32 %v427, 1e-05
      %v430 = vrsqrt.pop %v428
      %v431 = vrsqrt.pop %v429
      %v432 = vmul.f32 %v416, %v430
      %v433 = vmul.f32 %v417, %v431
      %v434 = vld [vmem:[%s3] sm:$0xff]
      %v435 = vld [vmem:[%s3 + $0x8] sm:$0xff]
      %437 = vset.pattern.permute.xlu0 0
      %438 = vperm.xlu0 %437, %v434
      %v439 = vpop.permute.xlu0 %438
      %442 = vset.pattern.permute.xlu0 0
      %443 = vperm.xlu0 %442, %v435
      %v444 = vpop.permute.xlu0 %443
      %v446 = vmul.f32 %v432, %v439
      %v447 = vmul.f32 %v433, %v444
      %v448 = vld [vmem:[%s4] sm:$0xff]
      %v449 = vld [vmem:[%s4 + $0x8] sm:$0xff]
      %451 = vset.pattern.permute.xlu0 0
      %452 = vperm.xlu0 %451, %v448
      %v453 = vpop.permute.xlu0 %452
      %456 = vset.pattern.permute.xlu0 0
      %457 = vperm.xlu0 %456, %v449
      %v458 = vpop.permute.xlu0 %457
      %v460 = vadd.f32 %v446, %v453
      %v461 = vadd.f32 %v447, %v458
      %vm462 = vcmp.ge.f32.partialorder %v460, 0.0
      %vm463 = vcmp.ge.f32.partialorder %v461, 0.0
      %v464 = vmul.f32 %v460, 0.01
      %v465 = vmul.f32 %v461, 0.01
      %v466 = vsel %vm462, %v460, %v464
      %v467 = vsel %vm463, %v461, %v465
      %468 = vst.msk [vmem:[%s224] sm:$0xff] %vm406, %v466
      %469 = vst.msk [vmem:[%s224 + $0x8] sm:$0xff] %vm406, %v467
      %p470 = scmp.lt.s32.totalorder %s16, 1
      %s471 = scalar_select %p470, %s16, 1
      %s472 = smul.addr %s471, 2
      %s473 = smul.addr %s472, 8
      %s474 = scalar_lea.vmem %s5, %s473
      // Predicated region
      $region41: #{attn_fpn_forward.13} parent=39 // pred_check
        %p475 = pneg %p144
      $region42: #{attn_fpn_forward.13} parent=39 // pred_check_branch
        %477 = sbr.rel (%p475) target = $region44
      $region43: #{attn_fpn_forward.13} parent=39 // pred_region
        _
      $region44: #{attn_fpn_forward.13} parent=39 // pred_fallthru
        _
    $region40: #{attn_fpn_forward.13} parent=5 // pred_fallthru
      _
    %p478 = scmp.le.s32.totalorder 2, %s11
    // Predicated region
    $region45: #{attn_fpn_forward.13} parent=5 // pred_check
      %p479 = pneg %p478
    $region46: #{attn_fpn_forward.13} parent=5 // pred_check_branch
      %481 = sbr.rel (%p479) target = $region48
    $region47: #{attn_fpn_forward.13} parent=5 // pred_region
      %s482 = ssub.s32 %s11, 2
      // Predicated region
      $region49: #{attn_fpn_forward.13} parent=47 // pred_check
        %p483 = pneg %p150
      $region50: #{attn_fpn_forward.13} parent=47 // pred_check_branch
        %485 = sbr.rel (%p483) target = $region52
      $region51: #{attn_fpn_forward.13} parent=47 // pred_region
        %p486 = scmp.lt.s32.totalorder %s17, 1
        %s487 = scalar_select %p486, %s17, 1
        %s488 = smul.addr %s487, 2
        %s489 = smul.addr %s488, 8
        %s490 = scalar_lea.vmem %s5, %s489
      $region52: #{attn_fpn_forward.13} parent=47 // pred_fallthru
        _
    $region48: #{attn_fpn_forward.13} parent=5 // pred_fallthru
      _
  $region6: #{attn_fpn_forward.13} parent=0 // loop_footer
    %s15 = sadd.s32 1, %s11
  $region7: #{attn_fpn_forward.13} parent=0 // loop_footer_branch
    %10 = sbr.rel target = $region3
  $region8: #{attn_fpn_forward.13} parent=0 // loop_exit
    _

// kernel: attn_fpn_forward.14
$region0: #{attn_fpn_forward.14}
  #allocation0 [shape = 'u32[]', space=smem, size = 0x4, offset = 0x4, fixed_abs, tag = 'smem constant byte address 0x4 - core index']
  #allocation1 [shape = 'u32[144,128]{1,0:T(1,128)}', space=vmem, size = 0x12000, scoped, tag = 'internal scratch']
  %s0 = inlined_call_operand.vmem [shape: bf16[16,432], index: 0, kind: input, shape index: {}]
  %s1 = inlined_call_operand.vmem [shape: bf16[2,432,8], index: 1, kind: input, shape index: {}]
  %s2 = inlined_call_operand.vmem [shape: f32[16,1], index: 2, kind: input, shape index: {}]
  %s3 = inlined_call_operand.vmem [shape: f32[16,1], index: 3, kind: input, shape index: {}]
  %s4 = inlined_call_operand.vmem [shape: f32[16,1], index: 4, kind: input, shape index: {}]
  %s5 = inlined_call_operand.vmem [shape: f32[8,16], index: 5, kind: input, shape index: {}]
  %s6 = inlined_call_operand.vmem [shape: f32[8,1], index: 6, kind: input, shape index: {}]
  %s7 = inlined_call_operand.hbm [shape: f32[2,16,8], index: 7, kind: output, shape index: {0}]
  %s8 = inlined_call_operand.vmem [shape: f32[2,8,8], index: 8, kind: output, shape index: {1}]
  %9 = xla_tuple %s7, %s8
  %s10 = sld [smem:[#allocation0]]
  $region69: #{attn_fpn_forward.14} parent=0
    _
  %s12 = ssub.s32 1, %s10
  %s13 = scalar_select 0, %s12, %s10
  $region1: #{attn_fpn_forward.14} parent=0
    #allocation2 [shape = 'u8[16384]{0}', space=vmem, size = 0x4000, scoped, tag = 'output window, operand 0']
    #allocation3 [shape = 's32[2]{0}', space=sflag, size = 0x8, scoped, tag = 'scoped memory for attn_fpn_forward.14']
    %14 = vsyncpa [#allocation3], 0
    %s15 = scalar_lea.sflag [#allocation3], 1
    %16 = vsyncpa %s15, 0
    loop: start=0, step=1, limit=4
    $region2: #{attn_fpn_forward.14} parent=1 // loop_pre_header
      _
    $region3: #{attn_fpn_forward.14} parent=1 // loop_header
      %s18 = sphi 0, %s22
      %p19 = scmp.ge.s32.totalorder %s18, 4
      %s26 = sphi 0, %s26
      %s28 = sphi 0, %s26
      %s29 = sphi 0, %s28
      %s43 = sphi 0, %s29
      %s49 = sphi 0, %s51
      %s52 = sphi 0, %s49
      %s53 = sphi 0, %s52
      %s69 = sphi 0, %s53
      %s73 = sphi 0, %s73
      %s75 = sphi 0, %s73
      %s76 = sphi 0, %s75
      %s90 = sphi 0, %s76
      %s94 = sphi 0, %s94
      %s96 = sphi 0, %s94
      %s97 = sphi 0, %s96
      %s111 = sphi 0, %s97
      %s115 = sphi 0, %s115
      %s117 = sphi 0, %s115
      %s118 = sphi 0, %s117
      %s132 = sphi 0, %s118
      %s136 = sphi 0, %s136
      %s138 = sphi 0, %s136
      %s139 = sphi 0, %s138
      %s153 = sphi 0, %s139
      %s157 = sphi 0, %s157
      %s159 = sphi 0, %s157
      %s160 = sphi 0, %s159
      %s174 = sphi 0, %s160
      %s180 = sphi 0, %s182
      %s183 = sphi 0, %s180
      %s184 = sphi 0, %s183
      %s200 = sphi 0, %s184
      %s206 = sphi 0, %s208
      %s209 = sphi 0, %s206
      %s210 = sphi 0, %s209
      %s226 = sphi 0, %s210
    $region4: #{attn_fpn_forward.14} parent=1 // loop_header_branch
      %21 = sbr.rel (%p19) target = $region8
    $region5: #{attn_fpn_forward.14} parent=1 // loop_body
      %s23 = ssub.s32 %s18, 1
      %s24 = ssub.s32 %s18, 2
      %s25 = sadd.s32 %s18, 1
      %s27 = sadd.s32 %s26, 1
      %p30 = scmp.eq.s32.totalorder %s18, 1
      %p31 = scmp.ne.s32.totalorder %s26, %s28
      %p32 = scmp.eq.s32.totalorder %s18, 0
      %p33 = por %p31, %p32
      %p34 = scmp.ne.s32.totalorder %s26, %s28
      %p35 = scmp.eq.s32.totalorder %s23, 1
      %p36 = por %p34, %p35
      %p37 = scmp.ne.s32.totalorder %s28, %s29
      %p38 = scmp.eq.s32.totalorder %s23, 0
      %p39 = por %p37, %p38
      %p40 = scmp.ne.s32.totalorder %s28, %s29
      %p41 = scmp.eq.s32.totalorder %s24, 1
      %p42 = por %p40, %p41
      %p44 = scmp.ne.s32.totalorder %s29, %s43
      %p45 = scmp.eq.s32.totalorder %s24, 0
      %p46 = por %p44, %p45
      %s47 = ssub.s32 %s18, %s25
      %p48 = scmp.eq.s32.totalorder %s47, 0
      %s50 = sadd.s32 %s49, 1
      %s51 = scalar_select %p48, %s49, %s50
      %p54 = pneg %p48
      %p55 = scmp.eq.s32.totalorder %s18, 1
      %p56 = por %p54, %p55
      %p57 = scmp.ne.s32.totalorder %s49, %s52
      %p58 = scmp.eq.s32.totalorder %s18, 0
      %p59 = por %p57, %p58
      %p60 = scmp.ne.s32.totalorder %s49, %s52
      %p61 = scmp.eq.s32.totalorder %s23, 1
      %p62 = por %p60, %p61
      %p63 = scmp.ne.s32.totalorder %s52, %s53
      %p64 = scmp.eq.s32.totalorder %s23, 0
      %p65 = por %p63, %p64
      %p66 = scmp.ne.s32.totalorder %s52, %s53
      %p67 = scmp.eq.s32.totalorder %s24, 1
      %p68 = por %p66, %p67
      %p70 = scmp.ne.s32.totalorder %s53, %s69
      %p71 = scmp.eq.s32.totalorder %s24, 0
      %p72 = por %p70, %p71
      %s74 = sadd.s32 %s73, 1
      %p77 = scmp.eq.s32.totalorder %s18, 1
      %p78 = scmp.ne.s32.totalorder %s73, %s75
      %p79 = scmp.eq.s32.totalorder %s18, 0
      %p80 = por %p78, %p79
      %p81 = scmp.ne.s32.totalorder %s73, %s75
      %p82 = scmp.eq.s32.totalorder %s23, 1
      %p83 = por %p81, %p82
      %p84 = scmp.ne.s32.totalorder %s75, %s76
      %p85 = scmp.eq.s32.totalorder %s23, 0
      %p86 = por %p84, %p85
      %p87 = scmp.ne.s32.totalorder %s75, %s76
      %p88 = scmp.eq.s32.totalorder %s24, 1
      %p89 = por %p87, %p88
      %p91 = scmp.ne.s32.totalorder %s76, %s90
      %p92 = scmp.eq.s32.totalorder %s24, 0
      %p93 = por %p91, %p92
      %s95 = sadd.s32 %s94, 1
      %p98 = scmp.eq.s32.totalorder %s18, 1
      %p99 = scmp.ne.s32.totalorder %s94, %s96
      %p100 = scmp.eq.s32.totalorder %s18, 0
      %p101 = por %p99, %p100
      %p102 = scmp.ne.s32.totalorder %s94, %s96
      %p103 = scmp.eq.s32.totalorder %s23, 1
      %p104 = por %p102, %p103
      %p105 = scmp.ne.s32.totalorder %s96, %s97
      %p106 = scmp.eq.s32.totalorder %s23, 0
      %p107 = por %p105, %p106
      %p108 = scmp.ne.s32.totalorder %s96, %s97
      %p109 = scmp.eq.s32.totalorder %s24, 1
      %p110 = por %p108, %p109
      %p112 = scmp.ne.s32.totalorder %s97, %s111
      %p113 = scmp.eq.s32.totalorder %s24, 0
      %p114 = por %p112, %p113
      %s116 = sadd.s32 %s115, 1
      %p119 = scmp.eq.s32.totalorder %s18, 1
      %p120 = scmp.ne.s32.totalorder %s115, %s117
      %p121 = scmp.eq.s32.totalorder %s18, 0
      %p122 = por %p120, %p121
      %p123 = scmp.ne.s32.totalorder %s115, %s117
      %p124 = scmp.eq.s32.totalorder %s23, 1
      %p125 = por %p123, %p124
      %p126 = scmp.ne.s32.totalorder %s117, %s118
      %p127 = scmp.eq.s32.totalorder %s23, 0
      %p128 = por %p126, %p127
      %p129 = scmp.ne.s32.totalorder %s117, %s118
      %p130 = scmp.eq.s32.totalorder %s24, 1
      %p131 = por %p129, %p130
      %p133 = scmp.ne.s32.totalorder %s118, %s132
      %p134 = scmp.eq.s32.totalorder %s24, 0
      %p135 = por %p133, %p134
      %s137 = sadd.s32 %s136, 1
      %p140 = scmp.eq.s32.totalorder %s18, 1
      %p141 = scmp.ne.s32.totalorder %s136, %s138
      %p142 = scmp.eq.s32.totalorder %s18, 0
      %p143 = por %p141, %p142
      %p144 = scmp.ne.s32.totalorder %s136, %s138
      %p145 = scmp.eq.s32.totalorder %s23, 1
      %p146 = por %p144, %p145
      %p147 = scmp.ne.s32.totalorder %s138, %s139
      %p148 = scmp.eq.s32.totalorder %s23, 0
      %p149 = por %p147, %p148
      %p150 = scmp.ne.s32.totalorder %s138, %s139
      %p151 = scmp.eq.s32.totalorder %s24, 1
      %p152 = por %p150, %p151
      %p154 = scmp.ne.s32.totalorder %s139, %s153
      %p155 = scmp.eq.s32.totalorder %s24, 0
      %p156 = por %p154, %p155
      %s158 = sadd.s32 %s157, 1
      %p161 = scmp.eq.s32.totalorder %s18, 1
      %p162 = scmp.ne.s32.totalorder %s157, %s159
      %p163 = scmp.eq.s32.totalorder %s18, 0
      %p164 = por %p162, %p163
      %p165 = scmp.ne.s32.totalorder %s157, %s159
      %p166 = scmp.eq.s32.totalorder %s23, 1
      %p167 = por %p165, %p166
      %p168 = scmp.ne.s32.totalorder %s159, %s160
      %p169 = scmp.eq.s32.totalorder %s23, 0
      %p170 = por %p168, %p169
      %p171 = scmp.ne.s32.totalorder %s159, %s160
      %p172 = scmp.eq.s32.totalorder %s24, 1
      %p173 = por %p171, %p172
      %p175 = scmp.ne.s32.totalorder %s160, %s174
      %p176 = scmp.eq.s32.totalorder %s24, 0
      %p177 = por %p175, %p176
      %s178 = ssub.s32 %s18, %s25
      %p179 = scmp.eq.s32.totalorder %s178, 0
      %s181 = sadd.s32 %s180, 1
      %s182 = scalar_select %p179, %s180, %s181
      %p185 = pneg %p179
      %p186 = scmp.eq.s32.totalorder %s18, 1
      %p187 = por %p185, %p186
      %p188 = scmp.ne.s32.totalorder %s180, %s183
      %p189 = scmp.eq.s32.totalorder %s18, 0
      %p190 = por %p188, %p189
      %p191 = scmp.ne.s32.totalorder %s180, %s183
      %p192 = scmp.eq.s32.totalorder %s23, 1
      %p193 = por %p191, %p192
      %p194 = scmp.ne.s32.totalorder %s183, %s184
      %p195 = scmp.eq.s32.totalorder %s23, 0
      %p196 = por %p194, %p195
      %p197 = scmp.ne.s32.totalorder %s183, %s184
      %p198 = scmp.eq.s32.totalorder %s24, 1
      %p199 = por %p197, %p198
      %p201 = scmp.ne.s32.totalorder %s184, %s200
      %p202 = scmp.eq.s32.totalorder %s24, 0
      %p203 = por %p201, %p202
      %s204 = ssub.s32 %s18, %s25
      %p205 = scmp.eq.s32.totalorder %s204, 0
      %s207 = sadd.s32 %s206, 1
      %s208 = scalar_select %p205, %s206, %s207
      %p211 = pneg %p205
      %p212 = scmp.eq.s32.totalorder %s18, 1
      %p213 = por %p211, %p212
      %p214 = scmp.ne.s32.totalorder %s206, %s209
      %p215 = scmp.eq.s32.totalorder %s18, 0
      %p216 = por %p214, %p215
      %p217 = scmp.ne.s32.totalorder %s206, %s209
      %p218 = scmp.eq.s32.totalorder %s23, 1
      %p219 = por %p217, %p218
      %p220 = scmp.ne.s32.totalorder %s209, %s210
      %p221 = scmp.eq.s32.totalorder %s23, 0
      %p222 = por %p220, %p221
      %p223 = scmp.ne.s32.totalorder %s209, %s210
      %p224 = scmp.eq.s32.totalorder %s24, 1
      %p225 = por %p223, %p224
      %p227 = scmp.ne.s32.totalorder %s210, %s226
      %p228 = scmp.eq.s32.totalorder %s24, 0
      %p229 = por %p227, %p228
      %p230 = scmp.le.s32.totalorder 1, %s18
      %p231 = scmp.lt.s32.totalorder %s18, 3
      %p232 = pnand %p230, %p231
      %p233 = pneg %p232
      // Predicated region
      $region9: #{attn_fpn_forward.14} parent=5 // pred_check
        _
      $region10: #{attn_fpn_forward.14} parent=5 // pred_check_branch
        %235 = sbr.rel (%p232) target = $region12
      $region11: #{attn_fpn_forward.14} parent=5 // pred_region
        %s236 = ssub.s32 %s18, 1
        // Predicated region
        $region13: #{attn_fpn_forward.14} parent=11 // pred_check
          %p237 = pneg %p39
        $region14: #{attn_fpn_forward.14} parent=11 // pred_check_branch
          %239 = sbr.rel (%p237) target = $region16
        $region15: #{attn_fpn_forward.14} parent=11 // pred_region
          _
        $region16: #{attn_fpn_forward.14} parent=11 // pred_fallthru
          _
        // Predicated region
        $region17: #{attn_fpn_forward.14} parent=11 // pred_check
          %p240 = pneg %p86
        $region18: #{attn_fpn_forward.14} parent=11 // pred_check_branch
          %242 = sbr.rel (%p240) target = $region20
        $region19: #{attn_fpn_forward.14} parent=11 // pred_region
          _
        $region20: #{attn_fpn_forward.14} parent=11 // pred_fallthru
          _
        // Predicated region
        $region21: #{attn_fpn_forward.14} parent=11 // pred_check
          %p243 = pneg %p107
        $region22: #{attn_fpn_forward.14} parent=11 // pred_check_branch
          %245 = sbr.rel (%p243) target = $region24
        $region23: #{attn_fpn_forward.14} parent=11 // pred_region
          _
        $region24: #{attn_fpn_forward.14} parent=11 // pred_fallthru
          _
        // Predicated region
        $region25: #{attn_fpn_forward.14} parent=11 // pred_check
          %p246 = pneg %p128
        $region26: #{attn_fpn_forward.14} parent=11 // pred_check_branch
          %248 = sbr.rel (%p246) target = $region28
        $region27: #{attn_fpn_forward.14} parent=11 // pred_region
          _
        $region28: #{attn_fpn_forward.14} parent=11 // pred_fallthru
          _
        // Predicated region
        $region29: #{attn_fpn_forward.14} parent=11 // pred_check
          %p249 = pneg %p149
        $region30: #{attn_fpn_forward.14} parent=11 // pred_check_branch
          %251 = sbr.rel (%p249) target = $region32
        $region31: #{attn_fpn_forward.14} parent=11 // pred_region
          _
        $region32: #{attn_fpn_forward.14} parent=11 // pred_fallthru
          _
        // Predicated region
        $region33: #{attn_fpn_forward.14} parent=11 // pred_check
          %p252 = pneg %p170
        $region34: #{attn_fpn_forward.14} parent=11 // pred_check_branch
          %254 = sbr.rel (%p252) target = $region36
        $region35: #{attn_fpn_forward.14} parent=11 // pred_region
          _
        $region36: #{attn_fpn_forward.14} parent=11 // pred_fallthru
          _
      $region12: #{attn_fpn_forward.14} parent=5 // pred_fallthru
        _
      %p255 = scmp.lt.s32.totalorder %s18, 2
      // Predicated region
      $region37: #{attn_fpn_forward.14} parent=5 // pred_check
        %p256 = pneg %p255
      $region38: #{attn_fpn_forward.14} parent=5 // pred_check_branch
        %258 = sbr.rel (%p256) target = $region40
      $region39: #{attn_fpn_forward.14} parent=5 // pred_region
        // Predicated region
        $region41: #{attn_fpn_forward.14} parent=39 // pred_check
          %p259 = pneg %p59
        $region42: #{attn_fpn_forward.14} parent=39 // pred_check_branch
          %261 = sbr.rel (%p259) target = $region44
        $region43: #{attn_fpn_forward.14} parent=39 // pred_region
          %p262 = scmp.lt.s32.totalorder %s18, 1
          %s263 = scalar_select %p262, %s18, 1
          %s264 = smul.addr %s263, 54
          %s265 = smul.addr %s264, 4
          %s266 = scalar_lea.vmem %s1, %s265
        $region44: #{attn_fpn_forward.14} parent=39 // pred_fallthru
          _
      $region40: #{attn_fpn_forward.14} parent=5 // pred_fallthru
        _
      %p267 = scmp.le.s32.totalorder 1, %s18
      %p268 = scmp.lt.s32.totalorder %s18, 3
      %p269 = pnand %p267, %p268
      %p270 = pneg %p269
      // Predicated region
      $region45: #{attn_fpn_forward.14} parent=5 // pred_check
        _
      $region46: #{attn_fpn_forward.14} parent=5 // pred_check_branch
        %272 = sbr.rel (%p269) target = $region48
      $region47: #{attn_fpn_forward.14} parent=5 // pred_region
        %s273 = ssub.s32 %s18, 1
        %p274 = pneg %p39
        %p275 = pneg %p36
        %p276 = scmp.lt.s32.totalorder %s23, 1
        %s277 = scalar_select %p276, %s23, 1
        %s278 = smul.addr %s277, 54
        %s279 = smul.addr %s278, 4
        %s280 = scalar_lea.vmem %s1, %s279
        %p281 = pneg %p65
        %p282 = pneg %p62
        %p283 = pneg %p86
        %p284 = pneg %p83
        %p285 = pneg %p107
        %p286 = pneg %p104
        %p287 = pneg %p128
        %p288 = pneg %p125
        %p289 = pneg %p149
        %p290 = pneg %p146
        %p291 = pneg %p170
        %p292 = pneg %p167
        %p293 = pneg %p196
        %p294 = pneg %p193
        %s295 = sand.u32 %s183, 1
        %s296 = scalar_lea.sflag [#allocation3], %s295
        %s297 = sand.u32 %s183, 1
        %s298 = smul.addr %s297, 16
        %s299 = scalar_lea.vmem [#allocation2], %s298
        %p300 = pneg %p222
        %p301 = pneg %p219
        %p302 = scmp.lt.s32.totalorder %s23, 1
        %s303 = scalar_select %p302, %s23, 1
        %s304 = smul.addr %s303, 8
        %s305 = scalar_lea.vmem %s8, %s304
        %p306 = scmp.lt.s32.totalorder %s23, 1
        %s307 = scalar_select %p306, %s23, 1
        %s308 = smul.addr %s307, 54
        %s309 = smul.addr %s308, 4
        %s310 = scalar_lea.vmem %s1, %s309
        %p311 = scmp.lt.s32.totalorder %s23, 1
        %s312 = scalar_select %p311, %s23, 1
        %s313 = smul.addr %s312, 8
        %s314 = scalar_lea.vmem %s8, %s313
        %v316 = vld [vmem:[%s0] sm:$0xff]
        %v317 = vld [vmem:[%s0 + $0x8] sm:$0xff]
        %v318 = vld [vmem:[%s0 + $0x10] sm:$0xff]
        %v319 = vld [vmem:[%s0 + $0x18] sm:$0xff]
        %v320 = vld [vmem:[%s310] sm:$0xf]
        %v321 = vld [vmem:[%s310 + $0x4] sm:$0xf]
        %v322 = vld [vmem:[%s310 + $0x8] sm:$0xf]
        %v323 = vld [vmem:[%s310 + $0xc] sm:$0xf]
        %v324 = vld [vmem:[%s310 + $0x10] sm:$0xf]
        %v325 = vld [vmem:[%s310 + $0x14] sm:$0xf]
        %v326 = vld [vmem:[%s310 + $0x18] sm:$0xf]
        %v327 = vld [vmem:[%s310 + $0x1c] sm:$0xf]
        %v328 = vld [vmem:[%s310 + $0x20] sm:$0xf]
        %v329 = vld [vmem:[%s310 + $0x24] sm:$0xf]
        %v330 = vld [vmem:[%s310 + $0x28] sm:$0xf]
        %v331 = vld [vmem:[%s310 + $0x2c] sm:$0xf]
        %v332 = vld [vmem:[%s310 + $0x30] sm:$0xf]
        %v333 = vld [vmem:[%s310 + $0x34] sm:$0xf]
        %v334 = vld [vmem:[%s310 + $0x38] sm:$0xf]
        %v335 = vld [vmem:[%s310 + $0x3c] sm:$0xf]
        %v336 = vld [vmem:[%s310 + $0x40] sm:$0xf]
        %v337 = vld [vmem:[%s310 + $0x44] sm:$0xf]
        %v338 = vld [vmem:[%s310 + $0x48] sm:$0xf]
        %v339 = vld [vmem:[%s310 + $0x4c] sm:$0xf]
        %v340 = vld [vmem:[%s310 + $0x50] sm:$0xf]
        %v341 = vld [vmem:[%s310 + $0x54] sm:$0xf]
        %v342 = vld [vmem:[%s310 + $0x58] sm:$0xf]
        %v343 = vld [vmem:[%s310 + $0x5c] sm:$0xf]
        %v344 = vld [vmem:[%s310 + $0x60] sm:$0xf]
        %v345 = vld [vmem:[%s310 + $0x64] sm:$0xf]
        %v346 = vld [vmem:[%s310 + $0x68] sm:$0xf]
        %v347 = vld [vmem:[%s310 + $0x6c] sm:$0xf]
        %v348 = vld [vmem:[%s310 + $0x70] sm:$0xf]
        %v349 = vld [vmem:[%s310 + $0x74] sm:$0xf]
        %v350 = vld [vmem:[%s310 + $0x78] sm:$0xf]
        %v351 = vld [vmem:[%s310 + $0x7c] sm:$0xf]
        %v352 = vld [vmem:[%s310 + $0x80] sm:$0xf]
        %v353 = vld [vmem:[%s310 + $0x84] sm:$0xf]
        %v354 = vld [vmem:[%s310 + $0x88] sm:$0xf]
        %v355 = vld [vmem:[%s310 + $0x8c] sm:$0xf]
        %v356 = vld [vmem:[%s310 + $0x90] sm:$0xf]
        %v357 = vld [vmem:[%s310 + $0x94] sm:$0xf]
        %v358 = vld [vmem:[%s310 + $0x98] sm:$0xf]
        %v359 = vld [vmem:[%s310 + $0x9c] sm:$0xf]
        %v360 = vld [vmem:[%s310 + $0xa0] sm:$0xf]
        %v361 = vld [vmem:[%s310 + $0xa4] sm:$0xf]
        %v362 = vld [vmem:[%s310 + $0xa8] sm:$0xf]
        %v363 = vld [vmem:[%s310 + $0xac] sm:$0xf]
        %v364 = vld [vmem:[%s310 + $0xb0] sm:$0xf]
        %v365 = vld [vmem:[%s310 + $0xb4] sm:$0xf]
        %v366 = vld [vmem:[%s310 + $0xb8] sm:$0xf]
        %v367 = vld [vmem:[%s310 + $0xbc] sm:$0xf]
        %v368 = vld [vmem:[%s310 + $0xc0] sm:$0xf]
        %v369 = vld [vmem:[%s310 + $0xc4] sm:$0xf]
        %v370 = vld [vmem:[%s310 + $0xc8] sm:$0xf]
        %v371 = vld [vmem:[%s310 + $0xcc] sm:$0xf]
        %v372 = vld [vmem:[%s310 + $0xd0] sm:$0xf]
        %v373 = vld [vmem:[%s310 + $0xd4] sm:$0xf]
        %v374 = vld [vmem:[%s2] sm:$0xff]
        %v375 = vld [vmem:[%s2 + $0x8] sm:$0xff]
        %377 = vset.pattern.permute.xlu0 0
        %378 = vperm.xlu0 %377, %v374
        %v379 = vpop.permute.xlu0 %378
        %382 = vset.pattern.permute.xlu0 0
        %383 = vperm.xlu0 %382, %v375
        %v384 = vpop.permute.xlu0 %383
        %v390 = vunpack.c.l.b16 %v316
        %v391 = vunpack.c.h.b16 %v316
        %v392 = vunpack.c.l.b16 %v317
        %v393 = vunpack.c.h.b16 %v317
        %v394 = vunpack.c.l.b16 %v318
        %v395 = vunpack.c.h.b16 %v318
        %v396 = vunpack.c.l.b16 %v319
        %v397 = vunpack.c.h.b16 %v319
        %v398 = vpack.c.b16 %v394, %v390
        %v399 = vpack.c.b16 %v395, %v391
        %v400 = vpack.c.b16 %v396, %v392
        %v401 = vpack.c.b16 %v397, %v393
        %v459 = vunpack.c.l.b16 %v320
        %v460 = vunpack.c.l.b16 %v321
        %v461 = vunpack.c.l.b16 %v322
        %v462 = vunpack.c.l.b16 %v323
        %v463 = vunpack.c.l.b16 %v324
        %v464 = vunpack.c.l.b16 %v325
        %v465 = vunpack.c.l.b16 %v326
        %v466 = vunpack.c.l.b16 %v327
        %v467 = vunpack.c.l.b16 %v328
        %v468 = vunpack.c.l.b16 %v329
        %v469 = vunpack.c.l.b16 %v330
        %v470 = vunpack.c.l.b16 %v331
        %v471 = vunpack.c.l.b16 %v332
        %v472 = vunpack.c.l.b16 %v333
        %v473 = vunpack.c.l.b16 %v334
        %v474 = vunpack.c.l.b16 %v335
        %v475 = vunpack.c.l.b16 %v336
        %v476 = vunpack.c.l.b16 %v337
        %v477 = vunpack.c.l.b16 %v338
        %v478 = vunpack.c.l.b16 %v339
        %v479 = vunpack.c.l.b16 %v340
        %v480 = vunpack.c.l.b16 %v341
        %v481 = vunpack.c.l.b16 %v342
        %v482 = vunpack.c.l.b16 %v343
        %v483 = vunpack.c.l.b16 %v344
        %v484 = vunpack.c.l.b16 %v345
        %v485 = vunpack.c.l.b16 %v346
        %v486 = vunpack.c.l.b16 %v347
        %v487 = vunpack.c.l.b16 %v348
        %v488 = vunpack.c.l.b16 %v349
        %v489 = vunpack.c.l.b16 %v350
        %v490 = vunpack.c.l.b16 %v351
        %v491 = vunpack.c.l.b16 %v352
        %v492 = vunpack.c.l.b16 %v353
        %v493 = vunpack.c.l.b16 %v354
        %v494 = vunpack.c.l.b16 %v355
        %v495 = vunpack.c.l.b16 %v356
        %v496 = vunpack.c.l.b16 %v357
        %v497 = vunpack.c.l.b16 %v358
        %v498 = vunpack.c.l.b16 %v359
        %v499 = vunpack.c.l.b16 %v360
        %v500 = vunpack.c.l.b16 %v361
        %v501 = vunpack.c.l.b16 %v362
        %v502 = vunpack.c.l.b16 %v363
        %v503 = vunpack.c.l.b16 %v364
        %v504 = vunpack.c.l.b16 %v365
        %v505 = vunpack.c.l.b16 %v366
        %v506 = vunpack.c.l.b16 %v367
        %v507 = vunpack.c.l.b16 %v368
        %v508 = vunpack.c.l.b16 %v369
        %v509 = vunpack.c.l.b16 %v370
        %v510 = vunpack.c.l.b16 %v371
        %v511 = vunpack.c.l.b16 %v372
        %v512 = vunpack.c.l.b16 %v373
        %v513 = vpack.c.b16 %v460, %v459
        %v514 = vpack.c.b16 %v462, %v461
        %v515 = vpack.c.b16 %v464, %v463
        %v516 = vpack.c.b16 %v466, %v465
        %v517 = vpack.c.b16 %v468, %v467
        %v518 = vpack.c.b16 %v470, %v469
        %v519 = vpack.c.b16 %v472, %v471
        %v520 = vpack.c.b16 %v474, %v473
        %v521 = vpack.c.b16 %v476, %v475
        %v522 = vpack.c.b16 %v478, %v477
        %v523 = vpack.c.b16 %v480, %v479
        %v524 = vpack.c.b16 %v482, %v481
        %v525 = vpack.c.b16 %v484, %v483
        %v526 = vpack.c.b16 %v486, %v485
        %v527 = vpack.c.b16 %v488, %v487
        %v528 = vpack.c.b16 %v490, %v489
        %v529 = vpack.c.b16 %v492, %v491
        %v530 = vpack.c.b16 %v494, %v493
        %v531 = vpack.c.b16 %v496, %v495
        %v532 = vpack.c.b16 %v498, %v497
        %v533 = vpack.c.b16 %v500, %v499
        %v534 = vpack.c.b16 %v502, %v501
        %v535 = vpack.c.b16 %v504, %v503
        %v536 = vpack.c.b16 %v506, %v505
        %v537 = vpack.c.b16 %v508, %v507
        %v538 = vpack.c.b16 %v510, %v509
        %v539 = vpack.c.b16 %v512, %v511
        %vm567 = vcmask 392192
        %v569 = vsel %vm567, %v401, 0
        %571 = vmatprep.subr.bf16.mxu0 0
        %572 = vmatpush1.bf16.msra.mxu0 %v513
        %573 = vmatprep.subr.bf16.mxu0 0
        %574 = vmatpush1.bf16.msra.mxu0 %v514
        %575 = vmatprep.subr.bf16.mxu0 0
        %576 = vmatpush1.bf16.msra.mxu0 %v515
        %577 = vmatprep.subr.bf16.mxu0 0
        %578 = vmatpush1.bf16.msra.mxu0 %v516
        %579 = vmatprep.subr.bf16.mxu0 0
        %580 = vmatpush1.bf16.msra.mxu0 %v517
        %581 = vmatprep.subr.bf16.mxu0 0
        %582 = vmatpush1.bf16.msra.mxu0 %v518
        %583 = vmatprep.subr.bf16.mxu0 0
        %584 = vmatpush1.bf16.msra.mxu0 %v519
        %585 = vmatprep.subr.bf16.mxu0 0
        %586 = vmatpush1.bf16.msra.mxu0 %v520
        %587 = vmatprep.subr.bf16.mxu0 0
        %588 = vmatpush1.bf16.msra.mxu0 %v521
        %589 = vmatprep.subr.bf16.mxu0 0
        %590 = vmatpush1.bf16.msra.mxu0 %v522
        %591 = vmatprep.subr.bf16.mxu0 0
        %592 = vmatpush1.bf16.msra.mxu0 %v523
        %593 = vmatprep.subr.bf16.mxu0 0
        %594 = vmatpush1.bf16.msra.mxu0 %v524
        %595 = vmatprep.subr.bf16.mxu0 0
        %596 = vmatpush1.bf16.msra.mxu0 %v525
        %597 = vmatprep.subr.bf16.mxu0 0
        %598 = vmatpush1.bf16.msra.mxu0 %v526
        %599 = vmatprep.subr.bf16.mxu0 0
        %600 = vmatpush1.bf16.msra.mxu0 %v527
        %601 = vmatprep.subr.bf16.mxu0 0
        %602 = vmatpush1.bf16.msra.mxu0 %v528
        %603 = vmatprep.mubr.bf16.mxu0 %v399
        %604 = vmatmul.mubr.bf16.gmra.mrb[0].mxu0 %v398
        %v605 = vpop.f32.mrb[0].mxu0
        %v606 = vadd.f32 %v379, %v605
        %v607 = vpop.f32.mrb[0].mxu0
        %v608 = vpop.f32.mrb[0].mxu0
        %v609 = vadd.f32 %v384, %v608
        %v610 = vpop.f32.mrb[0].mxu0
        %611 = vdwg.mxu0
        %612 = vmatprep.subr.bf16.mxu0 0
        %613 = vmatpush1.bf16.msra.mxu0 %v529
        %614 = vmatprep.subr.bf16.mxu0 0
        %615 = vmatpush1.bf16.msra.mxu0 %v530
        %616 = vmatprep.subr.bf16.mxu0 0
        %617 = vmatpush1.bf16.msra.mxu0 %v531
        %618 = vmatprep.subr.bf16.mxu0 0
        %619 = vmatpush1.bf16.msra.mxu0 %v532
        %620 = vmatprep.subr.bf16.mxu0 0
        %621 = vmatpush1.bf16.msra.mxu0 %v533
        %622 = vmatprep.subr.bf16.mxu0 0
        %623 = vmatpush1.bf16.msra.mxu0 %v534
        %624 = vmatprep.subr.bf16.mxu0 0
        %625 = vmatpush1.bf16.msra.mxu0 %v535
        %626 = vmatprep.subr.bf16.mxu0 0
        %627 = vmatpush1.bf16.msra.mxu0 %v536
        %628 = vmatprep.subr.bf16.mxu0 0
        %629 = vmatpush1.bf16.msra.mxu0 %v537
        %630 = vmatprep.subr.bf16.mxu0 0
        %631 = vmatpush1.bf16.msra.mxu0 %v538
        %632 = vmatprep.subr.bf16.mxu0 0
        %633 = vmatpush1.bf16.msra.mxu0 %v539
        %634 = vmatprep.subr.bf16.mxu0 0
        %635 = vmatpush1.bf16.msra.mxu0 0
        %636 = vmatprep.subr.bf16.mxu0 0
        %637 = vmatpush1.bf16.msra.mxu0 0
        %638 = vmatprep.subr.bf16.mxu0 0
        %639 = vmatpush1.bf16.msra.mxu0 0
        %640 = vmatprep.subr.bf16.mxu0 0
        %641 = vmatpush1.bf16.msra.mxu0 0
        %642 = vmatprep.subr.bf16.mxu0 0
        %643 = vmatpush1.bf16.msra.mxu0 0
        %644 = vmatprep.mubr.bf16.mxu0 %v569
        %645 = vmatmul.mubr.bf16.gmra.mrb[0].mxu0 %v400
        %v646 = vpop.f32.mrb[0].mxu0
        %v647 = vadd.f32 %v606, %v646
        %v648 = vpop.f32.mrb[0].mxu0
        %v649 = vpop.f32.mrb[0].mxu0
        %v650 = vadd.f32 %v609, %v649
        %v651 = vpop.f32.mrb[0].mxu0
        %652 = vdwg.mxu0
        %vm653 = vcmask 64512
        %v654 = vsel %vm653, %v647, 0.0
        %655 = vadd.xlane.f32.xlu0 %v654
        %v656 = vpop.xlane.xlu0 %655
        %v657 = vsel %vm653, %v650, 0.0
        %658 = vadd.xlane.f32.xlu0 %v657
        %v659 = vpop.xlane.xlu0 %658
        %v660 = vrcp.pop 8.0
        %v661 = vmul.f32 %v656, %v660
        %v662 = vmul.f32 %v659, %v660
        %v663 = vsub.f32 %v647, %v661
        %v664 = vsub.f32 %v650, %v662
        %v665 = vmul.f32 %v663, %v663
        %v666 = vmul.f32 %v664, %v664
        %v667 = vsel %vm653, %v665, 0.0
        %668 = vadd.xlane.f32.xlu0 %v667
        %v669 = vpop.xlane.xlu0 %668
        %v670 = vsel %vm653, %v666, 0.0
        %671 = vadd.xlane.f32.xlu0 %v670
        %v672 = vpop.xlane.xlu0 %671
        %v673 = vmul.f32 %v669, %v660
        %v674 = vmul.f32 %v672, %v660
        %v675 = vadd.f32 %v673, 1e-05
        %v676 = vadd.f32 %v674, 1e-05
        %v677 = vrsqrt.pop %v675
        %v678 = vrsqrt.pop %v676
        %v679 = vmul.f32 %v663, %v677
        %v680 = vmul.f32 %v664, %v678
        %v681 = vld [vmem:[%s3] sm:$0xff]
        %v682 = vld [vmem:[%s3 + $0x8] sm:$0xff]
        %684 = vset.pattern.permute.xlu0 0
        %685 = vperm.xlu0 %684, %v681
        %v686 = vpop.permute.xlu0 %685
        %689 = vset.pattern.permute.xlu0 0
        %690 = vperm.xlu0 %689, %v682
        %v691 = vpop.permute.xlu0 %690
        %v693 = vmul.f32 %v679, %v686
        %v694 = vmul.f32 %v680, %v691
        %v695 = vld [vmem:[%s4] sm:$0xff]
        %v696 = vld [vmem:[%s4 + $0x8] sm:$0xff]
        %698 = vset.pattern.permute.xlu0 0
        %699 = vperm.xlu0 %698, %v695
        %v700 = vpop.permute.xlu0 %699
        %703 = vset.pattern.permute.xlu0 0
        %704 = vperm.xlu0 %703, %v696
        %v705 = vpop.permute.xlu0 %704
        %v707 = vadd.f32 %v693, %v700
        %v708 = vadd.f32 %v694, %v705
        %vm709 = vcmp.ge.f32.partialorder %v707, 0.0
        %vm710 = vcmp.ge.f32.partialorder %v708, 0.0
        %v711 = vmul.f32 %v707, 0.01
        %v712 = vmul.f32 %v708, 0.01
        %v713 = vsel %vm709, %v707, %v711
        %v714 = vsel %vm710, %v708, %v712
        %715 = vst.msk [vmem:[%s299] sm:$0xff] %vm653, %v713
        %716 = vst.msk [vmem:[%s299 + $0x8] sm:$0xff] %vm653, %v714
        %v717 = vld [vmem:[%s5] sm:$0xff]
        %v718 = vld [vmem:[%s6] sm:$0xff]
        %720 = vset.pattern.permute.xlu0 0
        %721 = vperm.xlu0 %720, %v718
        %v722 = vpop.permute.xlu0 %721
        %vm724 = vcmask 130048
        %v726 = vsel %vm724, %v717, 0
        %728 = vmatprep.subr.mxu0 0.0
        %729 = vmatpush1.msra.mxu0 %v713
        %730 = vmatprep.subr.mxu0 0.0
        %731 = vmatpush1.msra.mxu0 %v714
        %732 = vmatprep.subr.mxu0 0.0
        %733 = vmatpush1.msra.mxu0 0.0
        %734 = vmatprep.subr.mxu0 0.0
        %735 = vmatpush1.msra.mxu0 0.0
        %736 = vmatprep.subr.mxu0 0.0
        %737 = vmatpush1.msra.mxu0 0.0
        %738 = vmatprep.subr.mxu0 0.0
        %739 = vmatpush1.msra.mxu0 0.0
        %740 = vmatprep.subr.mxu0 0.0
        %741 = vmatpush1.msra.mxu0 0.0
        %742 = vmatprep.subr.mxu0 0.0
        %743 = vmatpush1.msra.mxu0 0.0
        %744 = vmatprep.subr.mxu0 0.0
        %745 = vmatpush1.msra.mxu0 0.0
        %746 = vmatprep.subr.mxu0 0.0
        %747 = vmatpush1.msra.mxu0 0.0
        %748 = vmatprep.subr.mxu0 0.0
        %749 = vmatpush1.msra.mxu0 0.0
        %750 = vmatprep.subr.mxu0 0.0
        %751 = vmatpush1.msra.mxu0 0.0
        %752 = vmatprep.subr.mxu0 0.0
        %753 = vmatpush1.msra.mxu0 0.0
        %754 = vmatprep.subr.mxu0 0.0
        %755 = vmatpush1.msra.mxu0 0.0
        %756 = vmatprep.subr.mxu0 0.0
        %757 = vmatpush1.msra.mxu0 0.0
        %758 = vmatprep.subr.mxu0 0.0
        %759 = vmatpush1.msra.mxu0 0.0
        %760 = vmatprep.subr.mxu0 0.0
        %761 = vmatpush1.msra.mxu0 0.0
        %762 = vmatprep.subr.mxu0 0.0
        %763 = vmatpush1.msra.mxu0 0.0
        %764 = vmatprep.subr.mxu0 0.0
        %765 = vmatpush1.msra.mxu0 0.0
        %766 = vmatprep.subr.mxu0 0.0
        %767 = vmatpush1.msra.mxu0 0.0
        %768 = vmatprep.subr.mxu0 0.0
        %769 = vmatpush1.msra.mxu0 0.0
        %770 = vmatprep.subr.mxu0 0.0
        %771 = vmatpush1.msra.mxu0 0.0
        %772 = vmatprep.subr.mxu0 0.0
        %773 = vmatpush1.msra.mxu0 0.0
        %774 = vmatprep.subr.mxu0 0.0
        %775 = vmatpush1.msra.mxu0 0.0
        %776 = vmatprep.subr.mxu0 0.0
        %777 = vmatpush1.msra.mxu0 0.0
        %778 = vmatprep.subr.mxu0 0.0
        %779 = vmatpush1.msra.mxu0 0.0
        %780 = vmatprep.subr.mxu0 0.0
        %781 = vmatpush1.msra.mxu0 0.0
        %782 = vmatprep.subr.mxu0 0.0
        %783 = vmatpush1.msra.mxu0 0.0
        %784 = vmatprep.subr.mxu0 0.0
        %785 = vmatpush1.msra.mxu0 0.0
        %786 = vmatprep.subr.mxu0 0.0
        %787 = vmatpush1.msra.mxu0 0.0
        %788 = vmatprep.subr.mxu0 0.0
        %789 = vmatpush1.msra.mxu0 0.0
        %790 = vmatprep.subr.mxu0 0.0
        %791 = vmatpush1.msra.mxu0 0.0
        %792 = vmatprep.mubr.f32.mxu0 0.0
        %793 = vmatmul.mubr.f32.gmra.mrb[0].mxu0 %v726
        %v794 = vpop.f32.mrb[0].mxu0
        %v795 = vadd.f32 %v722, %v794
        %v796 = vpop.f32.mrb[0].mxu0
        %797 = vdwg.mxu0
        %798 = vst.msk [vmem:[%s314] sm:$0xff] %vm653, %v795
        %s799 = sand.u32 %s183, 1
        %s800 = scalar_lea.sflag [#allocation3], %s799
        %s801 = sand.u32 %s183, 1
        %s802 = smul.addr %s801, 16
        %s803 = scalar_lea.vmem [#allocation2], %s802
        %p804 = scmp.lt.s32.totalorder %s23, 1
        %s805 = scalar_select %p804, %s23, 1
        %s806 = smul.addr %s805, 8
        %s807 = scalar_lea.vmem %s8, %s806
        // Predicated region
        $region49: #{attn_fpn_forward.14} parent=47 // pred_check
          %p808 = pneg %p193
        $region50: #{attn_fpn_forward.14} parent=47 // pred_check_branch
          %810 = sbr.rel (%p808) target = $region52
        $region51: #{attn_fpn_forward.14} parent=47 // pred_region
          %s812 = ssub.s32 256, 256
          %813 = vsyncadd %s800, %s812
          %s814 = smul.addr %s23, 2
          %s815 = smul.addr %s814, 128
          %s816 = scalar_lea.hbm %s7, %s815
          %s817 = sshll.u32 %s803, 4
          %s818 = int_to_ptr.vmem [resolvable:$true] %s817
          %823 = dma.vmem_to_hbm [thread:$0]  %s818, 256, %s816, %s800, 128, 128, 8
        $region52: #{attn_fpn_forward.14} parent=47 // pred_fallthru
          _
        // Predicated region
        $region53: #{attn_fpn_forward.14} parent=47 // pred_check
          %p824 = pneg %p219
        $region54: #{attn_fpn_forward.14} parent=47 // pred_check_branch
          %826 = sbr.rel (%p824) target = $region56
        $region55: #{attn_fpn_forward.14} parent=47 // pred_region
          _
        $region56: #{attn_fpn_forward.14} parent=47 // pred_fallthru
          _
      $region48: #{attn_fpn_forward.14} parent=5 // pred_fallthru
        _
      %p827 = scmp.le.s32.totalorder 2, %s18
      // Predicated region
      $region57: #{attn_fpn_forward.14} parent=5 // pred_check
        %p828 = pneg %p827
      $region58: #{attn_fpn_forward.14} parent=5 // pred_check_branch
        %830 = sbr.rel (%p828) target = $region60
      $region59: #{attn_fpn_forward.14} parent=5 // pred_region
        %s831 = ssub.s32 %s18, 2
        // Predicated region
        $region61: #{attn_fpn_forward.14} parent=59 // pred_check
          %p832 = pneg %p199
        $region62: #{attn_fpn_forward.14} parent=59 // pred_check_branch
          %834 = sbr.rel (%p832) target = $region64
        $region63: #{attn_fpn_forward.14} parent=59 // pred_region
          %s835 = sand.u32 %s184, 1
          %s836 = scalar_lea.sflag [#allocation3], %s835
          %s837 = sand.u32 %s184, 1
          %s838 = smul.addr %s837, 16
          %s839 = scalar_lea.vmem [#allocation2], %s838
          %840 = dma.done %s836, 256
        $region64: #{attn_fpn_forward.14} parent=59 // pred_fallthru
          _
        // Predicated region
        $region65: #{attn_fpn_forward.14} parent=59 // pred_check
          %p841 = pneg %p225
        $region66: #{attn_fpn_forward.14} parent=59 // pred_check_branch
          %843 = sbr.rel (%p841) target = $region68
        $region67: #{attn_fpn_forward.14} parent=59 // pred_region
          %p844 = scmp.lt.s32.totalorder %s24, 1
          %s845 = scalar_select %p844, %s24, 1
          %s846 = smul.addr %s845, 8
          %s847 = scalar_lea.vmem %s8, %s846
        $region68: #{attn_fpn_forward.14} parent=59 // pred_fallthru
          _
      $region60: #{attn_fpn_forward.14} parent=5 // pred_fallthru
        _
    $region6: #{attn_fpn_forward.14} parent=1 // loop_footer
      %s22 = sadd.s32 1, %s18
    $region7: #{attn_fpn_forward.14} parent=1 // loop_footer_branch
      %17 = sbr.rel target = $region3
    $region8: #{attn_fpn_forward.14} parent=1 // loop_exit
      _
    %848 = vsyncpa [#allocation3], 1
    %s849 = scalar_lea.sflag [#allocation3], 1
    %850 = vsyncpa %s849, 1

// kernel: attn_fpn_forward.17
$region0: #{attn_fpn_forward.17}
  #allocation0 [shape = 'u32[]', space=smem, size = 0x4, offset = 0x4, fixed_abs, tag = 'smem constant byte address 0x4 - core index']
  #allocation1 [shape = 'u32[144,128]{1,0:T(1,128)}', space=vmem, size = 0x12000, scoped, tag = 'internal scratch']
  %s0 = inlined_call_operand.vmem [shape: bf16[8,216], index: 0, kind: input, shape index: {}]
  %s1 = inlined_call_operand.vmem [shape: bf16[2,216,8], index: 1, kind: input, shape index: {}]
  %s2 = inlined_call_operand.vmem [shape: f32[8,1], index: 2, kind: input, shape index: {}]
  %s3 = inlined_call_operand.vmem [shape: f32[2,8,8], index: 3, kind: output, shape index: {}]
  %s4 = sld [smem:[#allocation0]]
  $region45: #{attn_fpn_forward.17} parent=0
    _
  %s6 = ssub.s32 1, %s4
  %s7 = scalar_select 0, %s6, %s4
  loop: start=0, step=1, limit=4
  $region2: #{attn_fpn_forward.17} parent=0 // loop_pre_header
    _
  $region3: #{attn_fpn_forward.17} parent=0 // loop_header
    %s9 = sphi 0, %s13
    %p10 = scmp.ge.s32.totalorder %s9, 4
    %s17 = sphi 0, %s17
    %s19 = sphi 0, %s17
    %s20 = sphi 0, %s19
    %s34 = sphi 0, %s20
    %s40 = sphi 0, %s42
    %s43 = sphi 0, %s40
    %s44 = sphi 0, %s43
    %s60 = sphi 0, %s44
    %s64 = sphi 0, %s64
    %s66 = sphi 0, %s64
    %s67 = sphi 0, %s66
    %s81 = sphi 0, %s67
    %s87 = sphi 0, %s89
    %s90 = sphi 0, %s87
    %s91 = sphi 0, %s90
    %s107 = sphi 0, %s91
  $region4: #{attn_fpn_forward.17} parent=0 // loop_header_branch
    %12 = sbr.rel (%p10) target = $region8
  $region5: #{attn_fpn_forward.17} parent=0 // loop_body
    %s14 = ssub.s32 %s9, 1
    %s15 = ssub.s32 %s9, 2
    %s16 = sadd.s32 %s9, 1
    %s18 = sadd.s32 %s17, 1
    %p21 = scmp.eq.s32.totalorder %s9, 1
    %p22 = scmp.ne.s32.totalorder %s17, %s19
    %p23 = scmp.eq.s32.totalorder %s9, 0
    %p24 = por %p22, %p23
    %p25 = scmp.ne.s32.totalorder %s17, %s19
    %p26 = scmp.eq.s32.totalorder %s14, 1
    %p27 = por %p25, %p26
    %p28 = scmp.ne.s32.totalorder %s19, %s20
    %p29 = scmp.eq.s32.totalorder %s14, 0
    %p30 = por %p28, %p29
    %p31 = scmp.ne.s32.totalorder %s19, %s20
    %p32 = scmp.eq.s32.totalorder %s15, 1
    %p33 = por %p31, %p32
    %p35 = scmp.ne.s32.totalorder %s20, %s34
    %p36 = scmp.eq.s32.totalorder %s15, 0
    %p37 = por %p35, %p36
    %s38 = ssub.s32 %s9, %s16
    %p39 = scmp.eq.s32.totalorder %s38, 0
    %s41 = sadd.s32 %s40, 1
    %s42 = scalar_select %p39, %s40, %s41
    %p45 = pneg %p39
    %p46 = scmp.eq.s32.totalorder %s9, 1
    %p47 = por %p45, %p46
    %p48 = scmp.ne.s32.totalorder %s40, %s43
    %p49 = scmp.eq.s32.totalorder %s9, 0
    %p50 = por %p48, %p49
    %p51 = scmp.ne.s32.totalorder %s40, %s43
    %p52 = scmp.eq.s32.totalorder %s14, 1
    %p53 = por %p51, %p52
    %p54 = scmp.ne.s32.totalorder %s43, %s44
    %p55 = scmp.eq.s32.totalorder %s14, 0
    %p56 = por %p54, %p55
    %p57 = scmp.ne.s32.totalorder %s43, %s44
    %p58 = scmp.eq.s32.totalorder %s15, 1
    %p59 = por %p57, %p58
    %p61 = scmp.ne.s32.totalorder %s44, %s60
    %p62 = scmp.eq.s32.totalorder %s15, 0
    %p63 = por %p61, %p62
    %s65 = sadd.s32 %s64, 1
    %p68 = scmp.eq.s32.totalorder %s9, 1
    %p69 = scmp.ne.s32.totalorder %s64, %s66
    %p70 = scmp.eq.s32.totalorder %s9, 0
    %p71 = por %p69, %p70
    %p72 = scmp.ne.s32.totalorder %s64, %s66
    %p73 = scmp.eq.s32.totalorder %s14, 1
    %p74 = por %p72, %p73
    %p75 = scmp.ne.s32.totalorder %s66, %s67
    %p76 = scmp.eq.s32.totalorder %s14, 0
    %p77 = por %p75, %p76
    %p78 = scmp.ne.s32.totalorder %s66, %s67
    %p79 = scmp.eq.s32.totalorder %s15, 1
    %p80 = por %p78, %p79
    %p82 = scmp.ne.s32.totalorder %s67, %s81
    %p83 = scmp.eq.s32.totalorder %s15, 0
    %p84 = por %p82, %p83
    %s85 = ssub.s32 %s9, %s16
    %p86 = scmp.eq.s32.totalorder %s85, 0
    %s88 = sadd.s32 %s87, 1
    %s89 = scalar_select %p86, %s87, %s88
    %p92 = pneg %p86
    %p93 = scmp.eq.s32.totalorder %s9, 1
    %p94 = por %p92, %p93
    %p95 = scmp.ne.s32.totalorder %s87, %s90
    %p96 = scmp.eq.s32.totalorder %s9, 0
    %p97 = por %p95, %p96
    %p98 = scmp.ne.s32.totalorder %s87, %s90
    %p99 = scmp.eq.s32.totalorder %s14, 1
    %p100 = por %p98, %p99
    %p101 = scmp.ne.s32.totalorder %s90, %s91
    %p102 = scmp.eq.s32.totalorder %s14, 0
    %p103 = por %p101, %p102
    %p104 = scmp.ne.s32.totalorder %s90, %s91
    %p105 = scmp.eq.s32.totalorder %s15, 1
    %p106 = por %p104, %p105
    %p108 = scmp.ne.s32.totalorder %s91, %s107
    %p109 = scmp.eq.s32.totalorder %s15, 0
    %p110 = por %p108, %p109
    %p111 = scmp.le.s32.totalorder 1, %s9
    %p112 = scmp.lt.s32.totalorder %s9, 3
    %p113 = pnand %p111, %p112
    %p114 = pneg %p113
    // Predicated region
    $region9: #{attn_fpn_forward.17} parent=5 // pred_check
      _
    $region10: #{attn_fpn_forward.17} parent=5 // pred_check_branch
      %116 = sbr.rel (%p113) target = $region12
    $region11: #{attn_fpn_forward.17} parent=5 // pred_region
      %s117 = ssub.s32 %s9, 1
      // Predicated region
      $region13: #{attn_fpn_forward.17} parent=11 // pred_check
        %p118 = pneg %p30
      $region14: #{attn_fpn_forward.17} parent=11 // pred_check_branch
        %120 = sbr.rel (%p118) target = $region16
      $region15: #{attn_fpn_forward.17} parent=11 // pred_region
        _
      $region16: #{attn_fpn_forward.17} parent=11 // pred_fallthru
        _
      // Predicated region
      $region17: #{attn_fpn_forward.17} parent=11 // pred_check
        %p121 = pneg %p77
      $region18: #{attn_fpn_forward.17} parent=11 // pred_check_branch
        %123 = sbr.rel (%p121) target = $region20
      $region19: #{attn_fpn_forward.17} parent=11 // pred_region
        _
      $region20: #{attn_fpn_forward.17} parent=11 // pred_fallthru
        _
    $region12: #{attn_fpn_forward.17} parent=5 // pred_fallthru
      _
    %p124 = scmp.lt.s32.totalorder %s9, 2
    // Predicated region
    $region21: #{attn_fpn_forward.17} parent=5 // pred_check
      %p125 = pneg %p124
    $region22: #{attn_fpn_forward.17} parent=5 // pred_check_branch
      %127 = sbr.rel (%p125) target = $region24
    $region23: #{attn_fpn_forward.17} parent=5 // pred_region
      // Predicated region
      $region25: #{attn_fpn_forward.17} parent=23 // pred_check
        %p128 = pneg %p50
      $region26: #{attn_fpn_forward.17} parent=23 // pred_check_branch
        %130 = sbr.rel (%p128) target = $region28
      $region27: #{attn_fpn_forward.17} parent=23 // pred_region
        %p131 = scmp.lt.s32.totalorder %s9, 1
        %s132 = scalar_select %p131, %s9, 1
        %s133 = smul.addr %s132, 27
        %s134 = smul.addr %s133, 4
        %s135 = scalar_lea.vmem %s1, %s134
      $region28: #{attn_fpn_forward.17} parent=23 // pred_fallthru
        _
    $region24: #{attn_fpn_forward.17} parent=5 // pred_fallthru
      _
    %p136 = scmp.le.s32.totalorder 1, %s9
    %p137 = scmp.lt.s32.totalorder %s9, 3
    %p138 = pnand %p136, %p137
    %p139 = pneg %p138
    // Predicated region
    $region29: #{attn_fpn_forward.17} parent=5 // pred_check
      _
    $region30: #{attn_fpn_forward.17} parent=5 // pred_check_branch
      %141 = sbr.rel (%p138) target = $region32
    $region31: #{attn_fpn_forward.17} parent=5 // pred_region
      %s142 = ssub.s32 %s9, 1
      %p143 = pneg %p30
      %p144 = pneg %p27
      %p145 = scmp.lt.s32.totalorder %s14, 1
      %s146 = scalar_select %p145, %s14, 1
      %s147 = smul.addr %s146, 27
      %s148 = smul.addr %s147, 4
      %s149 = scalar_lea.vmem %s1, %s148
      %p150 = pneg %p56
      %p151 = pneg %p53
      %p152 = pneg %p77
      %p153 = pneg %p74
      %p154 = pneg %p103
      %p155 = pneg %p100
      %p156 = scmp.lt.s32.totalorder %s14, 1
      %s157 = scalar_select %p156, %s14, 1
      %s158 = smul.addr %s157, 8
      %s159 = scalar_lea.vmem %s3, %s158
      %p160 = scmp.lt.s32.totalorder %s14, 1
      %s161 = scalar_select %p160, %s14, 1
      %s162 = smul.addr %s161, 27
      %s163 = smul.addr %s162, 4
      %s164 = scalar_lea.vmem %s1, %s163
      %p165 = scmp.lt.s32.totalorder %s14, 1
      %s166 = scalar_select %p165, %s14, 1
      %s167 = smul.addr %s166, 8
      %s168 = scalar_lea.vmem %s3, %s167
      %v170 = vld [vmem:[%s0] sm:$0xff]
      %v171 = vld [vmem:[%s164] sm:$0xf]
      %v172 = vld [vmem:[%s164 + $0x4] sm:$0xf]
      %v173 = vld [vmem:[%s164 + $0x8] sm:$0xf]
      %v174 = vld [vmem:[%s164 + $0xc] sm:$0xf]
      %v175 = vld [vmem:[%s164 + $0x10] sm:$0xf]
      %v176 = vld [vmem:[%s164 + $0x14] sm:$0xf]
      %v177 = vld [vmem:[%s164 + $0x18] sm:$0xf]
      %v178 = vld [vmem:[%s164 + $0x1c] sm:$0xf]
      %v179 = vld [vmem:[%s164 + $0x20] sm:$0xf]
      %v180 = vld [vmem:[%s164 + $0x24] sm:$0xf]
      %v181 = vld [vmem:[%s164 + $0x28] sm:$0xf]
      %v182 = vld [vmem:[%s164 + $0x2c] sm:$0xf]
      %v183 = vld [vmem:[%s164 + $0x30] sm:$0xf]
      %v184 = vld [vmem:[%s164 + $0x34] sm:$0xf]
      %v185 = vld [vmem:[%s164 + $0x38] sm:$0xf]
      %v186 = vld [vmem:[%s164 + $0x3c] sm:$0xf]
      %v187 = vld [vmem:[%s164 + $0x40] sm:$0xf]
      %v188 = vld [vmem:[%s164 + $0x44] sm:$0xf]
      %v189 = vld [vmem:[%s164 + $0x48] sm:$0xf]
      %v190 = vld [vmem:[%s164 + $0x4c] sm:$0xf]
      %v191 = vld [vmem:[%s164 + $0x50] sm:$0xf]
      %v192 = vld [vmem:[%s164 + $0x54] sm:$0xf]
      %v193 = vld [vmem:[%s164 + $0x58] sm:$0xf]
      %v194 = vld [vmem:[%s164 + $0x5c] sm:$0xf]
      %v195 = vld [vmem:[%s164 + $0x60] sm:$0xf]
      %v196 = vld [vmem:[%s164 + $0x64] sm:$0xf]
      %v197 = vld [vmem:[%s164 + $0x68] sm:$0xf]
      %v198 = vld [vmem:[%s2] sm:$0xff]
      %200 = vset.pattern.permute.xlu0 0
      %201 = vperm.xlu0 %200, %v198
      %v202 = vpop.permute.xlu0 %201
      %v205 = vunpack.c.l.b16 %v170
      %v206 = vunpack.c.h.b16 %v170
      %v207 = vpack.c.b16 %v205, %v205
      %v208 = vpack.c.b16 %v206, %v206
      %v237 = vunpack.c.l.b16 %v171
      %v238 = vunpack.c.l.b16 %v172
      %v239 = vunpack.c.l.b16 %v173
      %v240 = vunpack.c.l.b16 %v174
      %v241 = vunpack.c.l.b16 %v175
      %v242 = vunpack.c.l.b16 %v176
      %v243 = vunpack.c.l.b16 %v177
      %v244 = vunpack.c.l.b16 %v178
      %v245 = vunpack.c.l.b16 %v179
      %v246 = vunpack.c.l.b16 %v180
      %v247 = vunpack.c.l.b16 %v181
      %v248 = vunpack.c.l.b16 %v182
      %v249 = vunpack.c.l.b16 %v183
      %v250 = vunpack.c.l.b16 %v184
      %v251 = vunpack.c.l.b16 %v185
      %v252 = vunpack.c.l.b16 %v186
      %v253 = vunpack.c.l.b16 %v187
      %v254 = vunpack.c.l.b16 %v188
      %v255 = vunpack.c.l.b16 %v189
      %v256 = vunpack.c.l.b16 %v190
      %v257 = vunpack.c.l.b16 %v191
      %v258 = vunpack.c.l.b16 %v192
      %v259 = vunpack.c.l.b16 %v193
      %v260 = vunpack.c.l.b16 %v194
      %v261 = vunpack.c.l.b16 %v195
      %v262 = vunpack.c.l.b16 %v196
      %v263 = vunpack.c.l.b16 %v197
      %v264 = vpack.c.b16 %v238, %v237
      %v265 = vpack.c.b16 %v240, %v239
      %v266 = vpack.c.b16 %v242, %v241
      %v267 = vpack.c.b16 %v244, %v243
      %v268 = vpack.c.b16 %v246, %v245
      %v269 = vpack.c.b16 %v248, %v247
      %v270 = vpack.c.b16 %v250, %v249
      %v271 = vpack.c.b16 %v252, %v251
      %v272 = vpack.c.b16 %v254, %v253
      %v273 = vpack.c.b16 %v256, %v255
      %v274 = vpack.c.b16 %v258, %v257
      %v275 = vpack.c.b16 %v260, %v259
      %v276 = vpack.c.b16 %v262, %v261
      %v277 = vpack.c.b16 %v263, %v263
      %vm291 = vcmask 719872
      %v293 = vsel %vm291, %v208, 0
      %vm295 = vcmask 1043456
      %v297 = vsel %vm295, %v277, 0
      %299 = vmatprep.subr.bf16.mxu0 0
      %300 = vmatpush1.bf16.msra.mxu0 %v264
      %301 = vmatprep.subr.bf16.mxu0 0
      %302 = vmatpush1.bf16.msra.mxu0 %v265
      %303 = vmatprep.subr.bf16.mxu0 0
      %304 = vmatpush1.bf16.msra.mxu0 %v266
      %305 = vmatprep.subr.bf16.mxu0 0
      %306 = vmatpush1.bf16.msra.mxu0 %v267
      %307 = vmatprep.subr.bf16.mxu0 0
      %308 = vmatpush1.bf16.msra.mxu0 %v268
      %309 = vmatprep.subr.bf16.mxu0 0
      %310 = vmatpush1.bf16.msra.mxu0 %v269
      %311 = vmatprep.subr.bf16.mxu0 0
      %312 = vmatpush1.bf16.msra.mxu0 %v270
      %313 = vmatprep.subr.bf16.mxu0 0
      %314 = vmatpush1.bf16.msra.mxu0 %v271
      %315 = vmatprep.subr.bf16.mxu0 0
      %316 = vmatpush1.bf16.msra.mxu0 %v272
      %317 = vmatprep.subr.bf16.mxu0 0
      %318 = vmatpush1.bf16.msra.mxu0 %v273
      %319 = vmatprep.subr.bf16.mxu0 0
      %320 = vmatpush1.bf16.msra.mxu0 %v274
      %321 = vmatprep.subr.bf16.mxu0 0
      %322 = vmatpush1.bf16.msra.mxu0 %v275
      %323 = vmatprep.subr.bf16.mxu0 0
      %324 = vmatpush1.bf16.msra.mxu0 %v276
      %325 = vmatprep.subr.bf16.mxu0 0
      %326 = vmatpush1.bf16.msra.mxu0 %v297
      %327 = vmatprep.subr.bf16.mxu0 0
      %328 = vmatpush1.bf16.msra.mxu0 0
      %329 = vmatprep.subr.bf16.mxu0 0
      %330 = vmatpush1.bf16.msra.mxu0 0
      %331 = vmatprep.mubr.bf16.mxu0 %v293
      %332 = vmatmul.mubr.bf16.gmra.mrb[0].mxu0 %v207
      %v333 = vpop.f32.mrb[0].mxu0
      %v334 = vadd.f32 %v202, %v333
      %v335 = vpop.f32.mrb[0].mxu0
      %v336 = vpop.f32.mrb[0].mxu0
      %v337 = vpop.f32.mrb[0].mxu0
      %338 = vdwg.mxu0
      %vm339 = vcmask 64512
      %340 = vst.msk [vmem:[%s168] sm:$0xff] %vm339, %v334
      %p341 = scmp.lt.s32.totalorder %s14, 1
      %s342 = scalar_select %p341, %s14, 1
      %s343 = smul.addr %s342, 8
      %s344 = scalar_lea.vmem %s3, %s343
      // Predicated region
      $region33: #{attn_fpn_forward.17} parent=31 // pred_check
        %p345 = pneg %p100
      $region34: #{attn_fpn_forward.17} parent=31 // pred_check_branch
        %347 = sbr.rel (%p345) target = $region36
      $region35: #{attn_fpn_forward.17} parent=31 // pred_region
        _
      $region36: #{attn_fpn_forward.17} parent=31 // pred_fallthru
        _
    $region32: #{attn_fpn_forward.17} parent=5 // pred_fallthru
      _
    %p348 = scmp.le.s32.totalorder 2, %s9
    // Predicated region
    $region37: #{attn_fpn_forward.17} parent=5 // pred_check
      %p349 = pneg %p348
    $region38: #{attn_fpn_forward.17} parent=5 // pred_check_branch
      %351 = sbr.rel (%p349) target = $region40
    $region39: #{attn_fpn_forward.17} parent=5 // pred_region
      %s352 = ssub.s32 %s9, 2
      // Predicated region
      $region41: #{attn_fpn_forward.17} parent=39 // pred_check
        %p353 = pneg %p106
      $region42: #{attn_fpn_forward.17} parent=39 // pred_check_branch
        %355 = sbr.rel (%p353) target = $region44
      $region43: #{attn_fpn_forward.17} parent=39 // pred_region
        %p356 = scmp.lt.s32.totalorder %s15, 1
        %s357 = scalar_select %p356, %s15, 1
        %s358 = smul.addr %s357, 8
        %s359 = scalar_lea.vmem %s3, %s358
      $region44: #{attn_fpn_forward.17} parent=39 // pred_fallthru
        _
    $region40: #{attn_fpn_forward.17} parent=5 // pred_fallthru
      _
  $region6: #{attn_fpn_forward.17} parent=0 // loop_footer
    %s13 = sadd.s32 1, %s9
  $region7: #{attn_fpn_forward.17} parent=0 // loop_footer_branch
    %8 = sbr.rel target = $region3
  $region8: #{attn_fpn_forward.17} parent=0 // loop_exit
    _

// kernel: attn_fpn_forward.15
$region0: #{attn_fpn_forward.15}
  #allocation0 [shape = 'u32[]', space=smem, size = 0x4, offset = 0x4, fixed_abs, tag = 'smem constant byte address 0x4 - core index']
  #allocation1 [shape = 'u32[144,128]{1,0:T(1,128)}', space=vmem, size = 0x12000, scoped, tag = 'internal scratch']
  %s0 = inlined_call_operand.vmem [shape: bf16[64,8], index: 0, kind: input, shape index: {}]
  %s1 = inlined_call_operand.vmem [shape: bf16[2,8,8], index: 1, kind: input, shape index: {}]
  %s2 = inlined_call_operand.vmem [shape: f32[64,1], index: 2, kind: input, shape index: {}]
  %s3 = inlined_call_operand.vmem [shape: f32[2,64,8], index: 3, kind: output, shape index: {}]
  %s4 = sld [smem:[#allocation0]]
  $region45: #{attn_fpn_forward.15} parent=0
    _
  %s6 = ssub.s32 1, %s4
  %s7 = scalar_select 0, %s6, %s4
  loop: start=0, step=1, limit=4
  $region2: #{attn_fpn_forward.15} parent=0 // loop_pre_header
    _
  $region3: #{attn_fpn_forward.15} parent=0 // loop_header
    %s9 = sphi 0, %s13
    %p10 = scmp.ge.s32.totalorder %s9, 4
    %s17 = sphi 0, %s17
    %s19 = sphi 0, %s17
    %s20 = sphi 0, %s19
    %s34 = sphi 0, %s20
    %s40 = sphi 0, %s42
    %s43 = sphi 0, %s40
    %s44 = sphi 0, %s43
    %s60 = sphi 0, %s44
    %s64 = sphi 0, %s64
    %s66 = sphi 0, %s64
    %s67 = sphi 0, %s66
    %s81 = sphi 0, %s67
    %s87 = sphi 0, %s89
    %s90 = sphi 0, %s87
    %s91 = sphi 0, %s90
    %s107 = sphi 0, %s91
  $region4: #{attn_fpn_forward.15} parent=0 // loop_header_branch
    %12 = sbr.rel (%p10) target = $region8
  $region5: #{attn_fpn_forward.15} parent=0 // loop_body
    %s14 = ssub.s32 %s9, 1
    %s15 = ssub.s32 %s9, 2
    %s16 = sadd.s32 %s9, 1
    %s18 = sadd.s32 %s17, 1
    %p21 = scmp.eq.s32.totalorder %s9, 1
    %p22 = scmp.ne.s32.totalorder %s17, %s19
    %p23 = scmp.eq.s32.totalorder %s9, 0
    %p24 = por %p22, %p23
    %p25 = scmp.ne.s32.totalorder %s17, %s19
    %p26 = scmp.eq.s32.totalorder %s14, 1
    %p27 = por %p25, %p26
    %p28 = scmp.ne.s32.totalorder %s19, %s20
    %p29 = scmp.eq.s32.totalorder %s14, 0
    %p30 = por %p28, %p29
    %p31 = scmp.ne.s32.totalorder %s19, %s20
    %p32 = scmp.eq.s32.totalorder %s15, 1
    %p33 = por %p31, %p32
    %p35 = scmp.ne.s32.totalorder %s20, %s34
    %p36 = scmp.eq.s32.totalorder %s15, 0
    %p37 = por %p35, %p36
    %s38 = ssub.s32 %s9, %s16
    %p39 = scmp.eq.s32.totalorder %s38, 0
    %s41 = sadd.s32 %s40, 1
    %s42 = scalar_select %p39, %s40, %s41
    %p45 = pneg %p39
    %p46 = scmp.eq.s32.totalorder %s9, 1
    %p47 = por %p45, %p46
    %p48 = scmp.ne.s32.totalorder %s40, %s43
    %p49 = scmp.eq.s32.totalorder %s9, 0
    %p50 = por %p48, %p49
    %p51 = scmp.ne.s32.totalorder %s40, %s43
    %p52 = scmp.eq.s32.totalorder %s14, 1
    %p53 = por %p51, %p52
    %p54 = scmp.ne.s32.totalorder %s43, %s44
    %p55 = scmp.eq.s32.totalorder %s14, 0
    %p56 = por %p54, %p55
    %p57 = scmp.ne.s32.totalorder %s43, %s44
    %p58 = scmp.eq.s32.totalorder %s15, 1
    %p59 = por %p57, %p58
    %p61 = scmp.ne.s32.totalorder %s44, %s60
    %p62 = scmp.eq.s32.totalorder %s15, 0
    %p63 = por %p61, %p62
    %s65 = sadd.s32 %s64, 1
    %p68 = scmp.eq.s32.totalorder %s9, 1
    %p69 = scmp.ne.s32.totalorder %s64, %s66
    %p70 = scmp.eq.s32.totalorder %s9, 0
    %p71 = por %p69, %p70
    %p72 = scmp.ne.s32.totalorder %s64, %s66
    %p73 = scmp.eq.s32.totalorder %s14, 1
    %p74 = por %p72, %p73
    %p75 = scmp.ne.s32.totalorder %s66, %s67
    %p76 = scmp.eq.s32.totalorder %s14, 0
    %p77 = por %p75, %p76
    %p78 = scmp.ne.s32.totalorder %s66, %s67
    %p79 = scmp.eq.s32.totalorder %s15, 1
    %p80 = por %p78, %p79
    %p82 = scmp.ne.s32.totalorder %s67, %s81
    %p83 = scmp.eq.s32.totalorder %s15, 0
    %p84 = por %p82, %p83
    %s85 = ssub.s32 %s9, %s16
    %p86 = scmp.eq.s32.totalorder %s85, 0
    %s88 = sadd.s32 %s87, 1
    %s89 = scalar_select %p86, %s87, %s88
    %p92 = pneg %p86
    %p93 = scmp.eq.s32.totalorder %s9, 1
    %p94 = por %p92, %p93
    %p95 = scmp.ne.s32.totalorder %s87, %s90
    %p96 = scmp.eq.s32.totalorder %s9, 0
    %p97 = por %p95, %p96
    %p98 = scmp.ne.s32.totalorder %s87, %s90
    %p99 = scmp.eq.s32.totalorder %s14, 1
    %p100 = por %p98, %p99
    %p101 = scmp.ne.s32.totalorder %s90, %s91
    %p102 = scmp.eq.s32.totalorder %s14, 0
    %p103 = por %p101, %p102
    %p104 = scmp.ne.s32.totalorder %s90, %s91
    %p105 = scmp.eq.s32.totalorder %s15, 1
    %p106 = por %p104, %p105
    %p108 = scmp.ne.s32.totalorder %s91, %s107
    %p109 = scmp.eq.s32.totalorder %s15, 0
    %p110 = por %p108, %p109
    %p111 = scmp.le.s32.totalorder 1, %s9
    %p112 = scmp.lt.s32.totalorder %s9, 3
    %p113 = pnand %p111, %p112
    %p114 = pneg %p113
    // Predicated region
    $region9: #{attn_fpn_forward.15} parent=5 // pred_check
      _
    $region10: #{attn_fpn_forward.15} parent=5 // pred_check_branch
      %116 = sbr.rel (%p113) target = $region12
    $region11: #{attn_fpn_forward.15} parent=5 // pred_region
      %s117 = ssub.s32 %s9, 1
      // Predicated region
      $region13: #{attn_fpn_forward.15} parent=11 // pred_check
        %p118 = pneg %p30
      $region14: #{attn_fpn_forward.15} parent=11 // pred_check_branch
        %120 = sbr.rel (%p118) target = $region16
      $region15: #{attn_fpn_forward.15} parent=11 // pred_region
        _
      $region16: #{attn_fpn_forward.15} parent=11 // pred_fallthru
        _
      // Predicated region
      $region17: #{attn_fpn_forward.15} parent=11 // pred_check
        %p121 = pneg %p77
      $region18: #{attn_fpn_forward.15} parent=11 // pred_check_branch
        %123 = sbr.rel (%p121) target = $region20
      $region19: #{attn_fpn_forward.15} parent=11 // pred_region
        _
      $region20: #{attn_fpn_forward.15} parent=11 // pred_fallthru
        _
    $region12: #{attn_fpn_forward.15} parent=5 // pred_fallthru
      _
    %p124 = scmp.lt.s32.totalorder %s9, 2
    // Predicated region
    $region21: #{attn_fpn_forward.15} parent=5 // pred_check
      %p125 = pneg %p124
    $region22: #{attn_fpn_forward.15} parent=5 // pred_check_branch
      %127 = sbr.rel (%p125) target = $region24
    $region23: #{attn_fpn_forward.15} parent=5 // pred_region
      // Predicated region
      $region25: #{attn_fpn_forward.15} parent=23 // pred_check
        %p128 = pneg %p50
      $region26: #{attn_fpn_forward.15} parent=23 // pred_check_branch
        %130 = sbr.rel (%p128) target = $region28
      $region27: #{attn_fpn_forward.15} parent=23 // pred_region
        %p131 = scmp.lt.s32.totalorder %s9, 1
        %s132 = scalar_select %p131, %s9, 1
        %s133 = smul.addr %s132, 4
        %s134 = scalar_lea.vmem %s1, %s133
      $region28: #{attn_fpn_forward.15} parent=23 // pred_fallthru
        _
    $region24: #{attn_fpn_forward.15} parent=5 // pred_fallthru
      _
    %p135 = scmp.le.s32.totalorder 1, %s9
    %p136 = scmp.lt.s32.totalorder %s9, 3
    %p137 = pnand %p135, %p136
    %p138 = pneg %p137
    // Predicated region
    $region29: #{attn_fpn_forward.15} parent=5 // pred_check
      _
    $region30: #{attn_fpn_forward.15} parent=5 // pred_check_branch
      %140 = sbr.rel (%p137) target = $region32
    $region31: #{attn_fpn_forward.15} parent=5 // pred_region
      %s141 = ssub.s32 %s9, 1
      %p142 = pneg %p30
      %p143 = pneg %p27
      %p144 = scmp.lt.s32.totalorder %s14, 1
      %s145 = scalar_select %p144, %s14, 1
      %s146 = smul.addr %s145, 4
      %s147 = scalar_lea.vmem %s1, %s146
      %p148 = pneg %p56
      %p149 = pneg %p53
      %p150 = pneg %p77
      %p151 = pneg %p74
      %p152 = pneg %p103
      %p153 = pneg %p100
      %p154 = scmp.lt.s32.totalorder %s14, 1
      %s155 = scalar_select %p154, %s14, 1
      %s156 = smul.addr %s155, 8
      %s157 = smul.addr %s156, 8
      %s158 = scalar_lea.vmem %s3, %s157
      %p159 = scmp.lt.s32.totalorder %s14, 1
      %s160 = scalar_select %p159, %s14, 1
      %s161 = smul.addr %s160, 4
      %s162 = scalar_lea.vmem %s1, %s161
      %p163 = scmp.lt.s32.totalorder %s14, 1
      %s164 = scalar_select %p163, %s14, 1
      %s165 = smul.addr %s164, 8
      %s166 = smul.addr %s165, 8
      %s167 = scalar_lea.vmem %s3, %s166
      %v169 = vld [vmem:[%s0] sm:$0xf]
      %v170 = vld [vmem:[%s0 + $0x4] sm:$0xf]
      %v171 = vld [vmem:[%s0 + $0x8] sm:$0xf]
      %v172 = vld [vmem:[%s0 + $0xc] sm:$0xf]
      %v173 = vld [vmem:[%s0 + $0x10] sm:$0xf]
      %v174 = vld [vmem:[%s0 + $0x14] sm:$0xf]
      %v175 = vld [vmem:[%s0 + $0x18] sm:$0xf]
      %v176 = vld [vmem:[%s0 + $0x1c] sm:$0xf]
      %v177 = vld [vmem:[%s162] sm:$0xf]
      %v178 = vld [vmem:[%s2] sm:$0xff]
      %v179 = vld [vmem:[%s2 + $0x8] sm:$0xff]
      %v180 = vld [vmem:[%s2 + $0x10] sm:$0xff]
      %v181 = vld [vmem:[%s2 + $0x18] sm:$0xff]
      %v182 = vld [vmem:[%s2 + $0x20] sm:$0xff]
      %v183 = vld [vmem:[%s2 + $0x28] sm:$0xff]
      %v184 = vld [vmem:[%s2 + $0x30] sm:$0xff]
      %v185 = vld [vmem:[%s2 + $0x38] sm:$0xff]
      %187 = vset.pattern.permute.xlu0 0
      %188 = vperm.xlu0 %187, %v178
      %v189 = vpop.permute.xlu0 %188
      %192 = vset.pattern.permute.xlu0 0
      %193 = vperm.xlu0 %192, %v179
      %v194 = vpop.permute.xlu0 %193
      %197 = vset.pattern.permute.xlu0 0
      %198 = vperm.xlu0 %197, %v180
      %v199 = vpop.permute.xlu0 %198
      %202 = vset.pattern.permute.xlu0 0
      %203 = vperm.xlu0 %202, %v181
      %v204 = vpop.permute.xlu0 %203
      %207 = vset.pattern.permute.xlu0 0
      %208 = vperm.xlu0 %207, %v182
      %v209 = vpop.permute.xlu0 %208
      %212 = vset.pattern.permute.xlu0 0
      %213 = vperm.xlu0 %212, %v183
      %v214 = vpop.permute.xlu0 %213
      %217 = vset.pattern.permute.xlu0 0
      %218 = vperm.xlu0 %217, %v184
      %v219 = vpop.permute.xlu0 %218
      %222 = vset.pattern.permute.xlu0 0
      %223 = vperm.xlu0 %222, %v185
      %v224 = vpop.permute.xlu0 %223
      %v234 = vunpack.c.l.b16 %v169
      %v235 = vunpack.c.l.b16 %v170
      %v236 = vunpack.c.l.b16 %v171
      %v237 = vunpack.c.l.b16 %v172
      %v238 = vunpack.c.l.b16 %v173
      %v239 = vunpack.c.l.b16 %v174
      %v240 = vunpack.c.l.b16 %v175
      %v241 = vunpack.c.l.b16 %v176
      %v242 = vpack.c.b16 %v235, %v234
      %v243 = vpack.c.b16 %v237, %v236
      %v244 = vpack.c.b16 %v239, %v238
      %v245 = vpack.c.b16 %v241, %v240
      %vm246 = vcmask 64512
      %v248 = vsel %vm246, %v242, 0
      %v251 = vsel %vm246, %v243, 0
      %v254 = vsel %vm246, %v244, 0
      %v257 = vsel %vm246, %v245, 0
      %vm259 = vcmask 1043456
      %v261 = vsel %vm259, %v177, 0
      %263 = vmatprep.subr.bf16.mxu0 0
      %264 = vmatpush1.bf16.msra.mxu0 %v261
      %265 = vmatprep.subr.bf16.mxu0 0
      %266 = vmatpush1.bf16.msra.mxu0 0
      %267 = vmatprep.subr.bf16.mxu0 0
      %268 = vmatpush1.bf16.msra.mxu0 0
      %269 = vmatprep.subr.bf16.mxu0 0
      %270 = vmatpush1.bf16.msra.mxu0 0
      %271 = vmatprep.subr.bf16.mxu0 0
      %272 = vmatpush1.bf16.msra.mxu0 0
      %273 = vmatprep.subr.bf16.mxu0 0
      %274 = vmatpush1.bf16.msra.mxu0 0
      %275 = vmatprep.subr.bf16.mxu0 0
      %276 = vmatpush1.bf16.msra.mxu0 0
      %277 = vmatprep.subr.bf16.mxu0 0
      %278 = vmatpush1.bf16.msra.mxu0 0
      %279 = vmatprep.subr.bf16.mxu0 0
      %280 = vmatpush1.bf16.msra.mxu0 0
      %281 = vmatprep.subr.bf16.mxu0 0
      %282 = vmatpush1.bf16.msra.mxu0 0
      %283 = vmatprep.subr.bf16.mxu0 0
      %284 = vmatpush1.bf16.msra.mxu0 0
      %285 = vmatprep.subr.bf16.mxu0 0
      %286 = vmatpush1.bf16.msra.mxu0 0
      %287 = vmatprep.subr.bf16.mxu0 0
      %288 = vmatpush1.bf16.msra.mxu0 0
      %289 = vmatprep.subr.bf16.mxu0 0
      %290 = vmatpush1.bf16.msra.mxu0 0
      %291 = vmatprep.subr.bf16.mxu0 0
      %292 = vmatpush1.bf16.msra.mxu0 0
      %293 = vmatprep.subr.bf16.mxu0 0
      %294 = vmatpush1.bf16.msra.mxu0 0
      %295 = vmatprep.mubr.bf16.mxu0 0
      %296 = vmatmul.mubr.bf16.gmra.mrb[0].mxu0 %v248
      %v297 = vpop.f32.mrb[0].mxu0
      %v298 = vadd.f32 %v189, %v297
      %v299 = vpop.f32.mrb[0].mxu0
      %v300 = vpop.f32.mrb[0].mxu0
      %v301 = vadd.f32 %v194, %v300
      %v302 = vpop.f32.mrb[0].mxu0
      %303 = vmatprep.mubr.bf16.mxu0 0
      %304 = vmatmul.mubr.bf16.gmra.mrb[0].mxu0 %v251
      %v305 = vpop.f32.mrb[0].mxu0
      %v306 = vadd.f32 %v199, %v305
      %v307 = vpop.f32.mrb[0].mxu0
      %v308 = vpop.f32.mrb[0].mxu0
      %v309 = vadd.f32 %v204, %v308
      %v310 = vpop.f32.mrb[0].mxu0
      %311 = vmatprep.mubr.bf16.mxu0 0
      %312 = vmatmul.mubr.bf16.gmra.mrb[0].mxu0 %v254
      %v313 = vpop.f32.mrb[0].mxu0
      %v314 = vadd.f32 %v209, %v313
      %v315 = vpop.f32.mrb[0].mxu0
      %v316 = vpop.f32.mrb[0].mxu0
      %v317 = vadd.f32 %v214, %v316
      %v318 = vpop.f32.mrb[0].mxu0
      %319 = vmatprep.mubr.bf16.mxu0 0
      %320 = vmatmul.mubr.bf16.gmra.mrb[0].mxu0 %v257
      %v321 = vpop.f32.mrb[0].mxu0
      %v322 = vadd.f32 %v219, %v321
      %v323 = vpop.f32.mrb[0].mxu0
      %v324 = vpop.f32.mrb[0].mxu0
      %v325 = vadd.f32 %v224, %v324
      %v326 = vpop.f32.mrb[0].mxu0
      %327 = vdwg.mxu0
      %328 = vst.msk [vmem:[%s167] sm:$0xff] %vm246, %v298
      %329 = vst.msk [vmem:[%s167 + $0x8] sm:$0xff] %vm246, %v301
      %330 = vst.msk [vmem:[%s167 + $0x10] sm:$0xff] %vm246, %v306
      %331 = vst.msk [vmem:[%s167 + $0x18] sm:$0xff] %vm246, %v309
      %332 = vst.msk [vmem:[%s167 + $0x20] sm:$0xff] %vm246, %v314
      %333 = vst.msk [vmem:[%s167 + $0x28] sm:$0xff] %vm246, %v317
      %334 = vst.msk [vmem:[%s167 + $0x30] sm:$0xff] %vm246, %v322
      %335 = vst.msk [vmem:[%s167 + $0x38] sm:$0xff] %vm246, %v325
      %p336 = scmp.lt.s32.totalorder %s14, 1
      %s337 = scalar_select %p336, %s14, 1
      %s338 = smul.addr %s337, 8
      %s339 = smul.addr %s338, 8
      %s340 = scalar_lea.vmem %s3, %s339
      // Predicated region
      $region33: #{attn_fpn_forward.15} parent=31 // pred_check
        %p341 = pneg %p100
      $region34: #{attn_fpn_forward.15} parent=31 // pred_check_branch
        %343 = sbr.rel (%p341) target = $region36
      $region35: #{attn_fpn_forward.15} parent=31 // pred_region
        _
      $region36: #{attn_fpn_forward.15} parent=31 // pred_fallthru
        _
    $region32: #{attn_fpn_forward.15} parent=5 // pred_fallthru
      _
    %p344 = scmp.le.s32.totalorder 2, %s9
    // Predicated region
    $region37: #{attn_fpn_forward.15} parent=5 // pred_check
      %p345 = pneg %p344
    $region38: #{attn_fpn_forward.15} parent=5 // pred_check_branch
      %347 = sbr.rel (%p345) target = $region40
    $region39: #{attn_fpn_forward.15} parent=5 // pred_region
      %s348 = ssub.s32 %s9, 2
      // Predicated region
      $region41: #{attn_fpn_forward.15} parent=39 // pred_check
        %p349 = pneg %p106
      $region42: #{attn_fpn_forward.15} parent=39 // pred_check_branch
        %351 = sbr.rel (%p349) target = $region44
      $region43: #{attn_fpn_forward.15} parent=39 // pred_region
        %p352 = scmp.lt.s32.totalorder %s15, 1
        %s353 = scalar_select %p352, %s15, 1
        %s354 = smul.addr %s353, 8
        %s355 = smul.addr %s354, 8
        %s356 = scalar_lea.vmem %s3, %s355
      $region44: #{attn_fpn_forward.15} parent=39 // pred_fallthru
        _
    $region40: #{attn_fpn_forward.15} parent=5 // pred_fallthru
      _
  $region6: #{attn_fpn_forward.15} parent=0 // loop_footer
    %s13 = sadd.s32 1, %s9
  $region7: #{attn_fpn_forward.15} parent=0 // loop_footer_branch
    %8 = sbr.rel target = $region3
  $region8: #{attn_fpn_forward.15} parent=0 // loop_exit
    _

// kernel: attn_fpn_forward.16
$region0: #{attn_fpn_forward.16}
  #allocation0 [shape = 'u32[]', space=smem, size = 0x4, offset = 0x4, fixed_abs, tag = 'smem constant byte address 0x4 - core index']
  #allocation1 [shape = 'u32[144,128]{1,0:T(1,128)}', space=vmem, size = 0x12000, scoped, tag = 'internal scratch']
  %s0 = inlined_call_operand.vmem [shape: bf16[8,216], index: 0, kind: input, shape index: {}]
  %s1 = inlined_call_operand.vmem [shape: bf16[2,216,64], index: 1, kind: input, shape index: {}]
  %s2 = inlined_call_operand.vmem [shape: f32[8,1], index: 2, kind: input, shape index: {}]
  %s3 = inlined_call_operand.vmem [shape: f32[2,8,64], index: 3, kind: output, shape index: {}]
  %s4 = sld [smem:[#allocation0]]
  $region45: #{attn_fpn_forward.16} parent=0
    _
  %s6 = ssub.s32 1, %s4
  %s7 = scalar_select 0, %s6, %s4
  loop: start=0, step=1, limit=4
  $region2: #{attn_fpn_forward.16} parent=0 // loop_pre_header
    _
  $region3: #{attn_fpn_forward.16} parent=0 // loop_header
    %s9 = sphi 0, %s13
    %p10 = scmp.ge.s32.totalorder %s9, 4
    %s17 = sphi 0, %s17
    %s19 = sphi 0, %s17
    %s20 = sphi 0, %s19
    %s34 = sphi 0, %s20
    %s40 = sphi 0, %s42
    %s43 = sphi 0, %s40
    %s44 = sphi 0, %s43
    %s60 = sphi 0, %s44
    %s64 = sphi 0, %s64
    %s66 = sphi 0, %s64
    %s67 = sphi 0, %s66
    %s81 = sphi 0, %s67
    %s87 = sphi 0, %s89
    %s90 = sphi 0, %s87
    %s91 = sphi 0, %s90
    %s107 = sphi 0, %s91
  $region4: #{attn_fpn_forward.16} parent=0 // loop_header_branch
    %12 = sbr.rel (%p10) target = $region8
  $region5: #{attn_fpn_forward.16} parent=0 // loop_body
    %s14 = ssub.s32 %s9, 1
    %s15 = ssub.s32 %s9, 2
    %s16 = sadd.s32 %s9, 1
    %s18 = sadd.s32 %s17, 1
    %p21 = scmp.eq.s32.totalorder %s9, 1
    %p22 = scmp.ne.s32.totalorder %s17, %s19
    %p23 = scmp.eq.s32.totalorder %s9, 0
    %p24 = por %p22, %p23
    %p25 = scmp.ne.s32.totalorder %s17, %s19
    %p26 = scmp.eq.s32.totalorder %s14, 1
    %p27 = por %p25, %p26
    %p28 = scmp.ne.s32.totalorder %s19, %s20
    %p29 = scmp.eq.s32.totalorder %s14, 0
    %p30 = por %p28, %p29
    %p31 = scmp.ne.s32.totalorder %s19, %s20
    %p32 = scmp.eq.s32.totalorder %s15, 1
    %p33 = por %p31, %p32
    %p35 = scmp.ne.s32.totalorder %s20, %s34
    %p36 = scmp.eq.s32.totalorder %s15, 0
    %p37 = por %p35, %p36
    %s38 = ssub.s32 %s9, %s16
    %p39 = scmp.eq.s32.totalorder %s38, 0
    %s41 = sadd.s32 %s40, 1
    %s42 = scalar_select %p39, %s40, %s41
    %p45 = pneg %p39
    %p46 = scmp.eq.s32.totalorder %s9, 1
    %p47 = por %p45, %p46
    %p48 = scmp.ne.s32.totalorder %s40, %s43
    %p49 = scmp.eq.s32.totalorder %s9, 0
    %p50 = por %p48, %p49
    %p51 = scmp.ne.s32.totalorder %s40, %s43
    %p52 = scmp.eq.s32.totalorder %s14, 1
    %p53 = por %p51, %p52
    %p54 = scmp.ne.s32.totalorder %s43, %s44
    %p55 = scmp.eq.s32.totalorder %s14, 0
    %p56 = por %p54, %p55
    %p57 = scmp.ne.s32.totalorder %s43, %s44
    %p58 = scmp.eq.s32.totalorder %s15, 1
    %p59 = por %p57, %p58
    %p61 = scmp.ne.s32.totalorder %s44, %s60
    %p62 = scmp.eq.s32.totalorder %s15, 0
    %p63 = por %p61, %p62
    %s65 = sadd.s32 %s64, 1
    %p68 = scmp.eq.s32.totalorder %s9, 1
    %p69 = scmp.ne.s32.totalorder %s64, %s66
    %p70 = scmp.eq.s32.totalorder %s9, 0
    %p71 = por %p69, %p70
    %p72 = scmp.ne.s32.totalorder %s64, %s66
    %p73 = scmp.eq.s32.totalorder %s14, 1
    %p74 = por %p72, %p73
    %p75 = scmp.ne.s32.totalorder %s66, %s67
    %p76 = scmp.eq.s32.totalorder %s14, 0
    %p77 = por %p75, %p76
    %p78 = scmp.ne.s32.totalorder %s66, %s67
    %p79 = scmp.eq.s32.totalorder %s15, 1
    %p80 = por %p78, %p79
    %p82 = scmp.ne.s32.totalorder %s67, %s81
    %p83 = scmp.eq.s32.totalorder %s15, 0
    %p84 = por %p82, %p83
    %s85 = ssub.s32 %s9, %s16
    %p86 = scmp.eq.s32.totalorder %s85, 0
    %s88 = sadd.s32 %s87, 1
    %s89 = scalar_select %p86, %s87, %s88
    %p92 = pneg %p86
    %p93 = scmp.eq.s32.totalorder %s9, 1
    %p94 = por %p92, %p93
    %p95 = scmp.ne.s32.totalorder %s87, %s90
    %p96 = scmp.eq.s32.totalorder %s9, 0
    %p97 = por %p95, %p96
    %p98 = scmp.ne.s32.totalorder %s87, %s90
    %p99 = scmp.eq.s32.totalorder %s14, 1
    %p100 = por %p98, %p99
    %p101 = scmp.ne.s32.totalorder %s90, %s91
    %p102 = scmp.eq.s32.totalorder %s14, 0
    %p103 = por %p101, %p102
    %p104 = scmp.ne.s32.totalorder %s90, %s91
    %p105 = scmp.eq.s32.totalorder %s15, 1
    %p106 = por %p104, %p105
    %p108 = scmp.ne.s32.totalorder %s91, %s107
    %p109 = scmp.eq.s32.totalorder %s15, 0
    %p110 = por %p108, %p109
    %p111 = scmp.le.s32.totalorder 1, %s9
    %p112 = scmp.lt.s32.totalorder %s9, 3
    %p113 = pnand %p111, %p112
    %p114 = pneg %p113
    // Predicated region
    $region9: #{attn_fpn_forward.16} parent=5 // pred_check
      _
    $region10: #{attn_fpn_forward.16} parent=5 // pred_check_branch
      %116 = sbr.rel (%p113) target = $region12
    $region11: #{attn_fpn_forward.16} parent=5 // pred_region
      %s117 = ssub.s32 %s9, 1
      // Predicated region
      $region13: #{attn_fpn_forward.16} parent=11 // pred_check
        %p118 = pneg %p30
      $region14: #{attn_fpn_forward.16} parent=11 // pred_check_branch
        %120 = sbr.rel (%p118) target = $region16
      $region15: #{attn_fpn_forward.16} parent=11 // pred_region
        _
      $region16: #{attn_fpn_forward.16} parent=11 // pred_fallthru
        _
      // Predicated region
      $region17: #{attn_fpn_forward.16} parent=11 // pred_check
        %p121 = pneg %p77
      $region18: #{attn_fpn_forward.16} parent=11 // pred_check_branch
        %123 = sbr.rel (%p121) target = $region20
      $region19: #{attn_fpn_forward.16} parent=11 // pred_region
        _
      $region20: #{attn_fpn_forward.16} parent=11 // pred_fallthru
        _
    $region12: #{attn_fpn_forward.16} parent=5 // pred_fallthru
      _
    %p124 = scmp.lt.s32.totalorder %s9, 2
    // Predicated region
    $region21: #{attn_fpn_forward.16} parent=5 // pred_check
      %p125 = pneg %p124
    $region22: #{attn_fpn_forward.16} parent=5 // pred_check_branch
      %127 = sbr.rel (%p125) target = $region24
    $region23: #{attn_fpn_forward.16} parent=5 // pred_region
      // Predicated region
      $region25: #{attn_fpn_forward.16} parent=23 // pred_check
        %p128 = pneg %p50
      $region26: #{attn_fpn_forward.16} parent=23 // pred_check_branch
        %130 = sbr.rel (%p128) target = $region28
      $region27: #{attn_fpn_forward.16} parent=23 // pred_region
        %p131 = scmp.lt.s32.totalorder %s9, 1
        %s132 = scalar_select %p131, %s9, 1
        %s133 = smul.addr %s132, 27
        %s134 = smul.addr %s133, 4
        %s135 = scalar_lea.vmem %s1, %s134
      $region28: #{attn_fpn_forward.16} parent=23 // pred_fallthru
        _
    $region24: #{attn_fpn_forward.16} parent=5 // pred_fallthru
      _
    %p136 = scmp.le.s32.totalorder 1, %s9
    %p137 = scmp.lt.s32.totalorder %s9, 3
    %p138 = pnand %p136, %p137
    %p139 = pneg %p138
    // Predicated region
    $region29: #{attn_fpn_forward.16} parent=5 // pred_check
      _
    $region30: #{attn_fpn_forward.16} parent=5 // pred_check_branch
      %141 = sbr.rel (%p138) target = $region32
    $region31: #{attn_fpn_forward.16} parent=5 // pred_region
      %s142 = ssub.s32 %s9, 1
      %p143 = pneg %p30
      %p144 = pneg %p27
      %p145 = scmp.lt.s32.totalorder %s14, 1
      %s146 = scalar_select %p145, %s14, 1
      %s147 = smul.addr %s146, 27
      %s148 = smul.addr %s147, 4
      %s149 = scalar_lea.vmem %s1, %s148
      %p150 = pneg %p56
      %p151 = pneg %p53
      %p152 = pneg %p77
      %p153 = pneg %p74
      %p154 = pneg %p103
      %p155 = pneg %p100
      %p156 = scmp.lt.s32.totalorder %s14, 1
      %s157 = scalar_select %p156, %s14, 1
      %s158 = smul.addr %s157, 8
      %s159 = scalar_lea.vmem %s3, %s158
      %p160 = scmp.lt.s32.totalorder %s14, 1
      %s161 = scalar_select %p160, %s14, 1
      %s162 = smul.addr %s161, 27
      %s163 = smul.addr %s162, 4
      %s164 = scalar_lea.vmem %s1, %s163
      %p165 = scmp.lt.s32.totalorder %s14, 1
      %s166 = scalar_select %p165, %s14, 1
      %s167 = smul.addr %s166, 8
      %s168 = scalar_lea.vmem %s3, %s167
      %v170 = vld [vmem:[%s0] sm:$0xff]
      %v171 = vld [vmem:[%s164] sm:$0xf]
      %v172 = vld [vmem:[%s164 + $0x4] sm:$0xf]
      %v173 = vld [vmem:[%s164 + $0x8] sm:$0xf]
      %v174 = vld [vmem:[%s164 + $0xc] sm:$0xf]
      %v175 = vld [vmem:[%s164 + $0x10] sm:$0xf]
      %v176 = vld [vmem:[%s164 + $0x14] sm:$0xf]
      %v177 = vld [vmem:[%s164 + $0x18] sm:$0xf]
      %v178 = vld [vmem:[%s164 + $0x1c] sm:$0xf]
      %v179 = vld [vmem:[%s164 + $0x20] sm:$0xf]
      %v180 = vld [vmem:[%s164 + $0x24] sm:$0xf]
      %v181 = vld [vmem:[%s164 + $0x28] sm:$0xf]
      %v182 = vld [vmem:[%s164 + $0x2c] sm:$0xf]
      %v183 = vld [vmem:[%s164 + $0x30] sm:$0xf]
      %v184 = vld [vmem:[%s164 + $0x34] sm:$0xf]
      %v185 = vld [vmem:[%s164 + $0x38] sm:$0xf]
      %v186 = vld [vmem:[%s164 + $0x3c] sm:$0xf]
      %v187 = vld [vmem:[%s164 + $0x40] sm:$0xf]
      %v188 = vld [vmem:[%s164 + $0x44] sm:$0xf]
      %v189 = vld [vmem:[%s164 + $0x48] sm:$0xf]
      %v190 = vld [vmem:[%s164 + $0x4c] sm:$0xf]
      %v191 = vld [vmem:[%s164 + $0x50] sm:$0xf]
      %v192 = vld [vmem:[%s164 + $0x54] sm:$0xf]
      %v193 = vld [vmem:[%s164 + $0x58] sm:$0xf]
      %v194 = vld [vmem:[%s164 + $0x5c] sm:$0xf]
      %v195 = vld [vmem:[%s164 + $0x60] sm:$0xf]
      %v196 = vld [vmem:[%s164 + $0x64] sm:$0xf]
      %v197 = vld [vmem:[%s164 + $0x68] sm:$0xf]
      %v198 = vld [vmem:[%s2] sm:$0xff]
      %200 = vset.pattern.permute.xlu0 0
      %201 = vperm.xlu0 %200, %v198
      %v202 = vpop.permute.xlu0 %201
      %v205 = vunpack.c.l.b16 %v170
      %v206 = vunpack.c.h.b16 %v170
      %v207 = vpack.c.b16 %v205, %v205
      %v208 = vpack.c.b16 %v206, %v206
      %v237 = vunpack.c.l.b16 %v171
      %v238 = vunpack.c.l.b16 %v172
      %v239 = vunpack.c.l.b16 %v173
      %v240 = vunpack.c.l.b16 %v174
      %v241 = vunpack.c.l.b16 %v175
      %v242 = vunpack.c.l.b16 %v176
      %v243 = vunpack.c.l.b16 %v177
      %v244 = vunpack.c.l.b16 %v178
      %v245 = vunpack.c.l.b16 %v179
      %v246 = vunpack.c.l.b16 %v180
      %v247 = vunpack.c.l.b16 %v181
      %v248 = vunpack.c.l.b16 %v182
      %v249 = vunpack.c.l.b16 %v183
      %v250 = vunpack.c.l.b16 %v184
      %v251 = vunpack.c.l.b16 %v185
      %v252 = vunpack.c.l.b16 %v186
      %v253 = vunpack.c.l.b16 %v187
      %v254 = vunpack.c.l.b16 %v188
      %v255 = vunpack.c.l.b16 %v189
      %v256 = vunpack.c.l.b16 %v190
      %v257 = vunpack.c.l.b16 %v191
      %v258 = vunpack.c.l.b16 %v192
      %v259 = vunpack.c.l.b16 %v193
      %v260 = vunpack.c.l.b16 %v194
      %v261 = vunpack.c.l.b16 %v195
      %v262 = vunpack.c.l.b16 %v196
      %v263 = vunpack.c.l.b16 %v197
      %v264 = vpack.c.b16 %v238, %v237
      %v265 = vpack.c.b16 %v240, %v239
      %v266 = vpack.c.b16 %v242, %v241
      %v267 = vpack.c.b16 %v244, %v243
      %v268 = vpack.c.b16 %v246, %v245
      %v269 = vpack.c.b16 %v248, %v247
      %v270 = vpack.c.b16 %v250, %v249
      %v271 = vpack.c.b16 %v252, %v251
      %v272 = vpack.c.b16 %v254, %v253
      %v273 = vpack.c.b16 %v256, %v255
      %v274 = vpack.c.b16 %v258, %v257
      %v275 = vpack.c.b16 %v260, %v259
      %v276 = vpack.c.b16 %v262, %v261
      %v277 = vpack.c.b16 %v263, %v263
      %vm291 = vcmask 719872
      %v293 = vsel %vm291, %v208, 0
      %vm295 = vcmask 1043456
      %v297 = vsel %vm295, %v277, 0
      %299 = vmatprep.subr.bf16.mxu0 0
      %300 = vmatpush1.bf16.msra.mxu0 %v264
      %301 = vmatprep.subr.bf16.mxu0 0
      %302 = vmatpush1.bf16.msra.mxu0 %v265
      %303 = vmatprep.subr.bf16.mxu0 0
      %304 = vmatpush1.bf16.msra.mxu0 %v266
      %305 = vmatprep.subr.bf16.mxu0 0
      %306 = vmatpush1.bf16.msra.mxu0 %v267
      %307 = vmatprep.subr.bf16.mxu0 0
      %308 = vmatpush1.bf16.msra.mxu0 %v268
      %309 = vmatprep.subr.bf16.mxu0 0
      %310 = vmatpush1.bf16.msra.mxu0 %v269
      %311 = vmatprep.subr.bf16.mxu0 0
      %312 = vmatpush1.bf16.msra.mxu0 %v270
      %313 = vmatprep.subr.bf16.mxu0 0
      %314 = vmatpush1.bf16.msra.mxu0 %v271
      %315 = vmatprep.subr.bf16.mxu0 0
      %316 = vmatpush1.bf16.msra.mxu0 %v272
      %317 = vmatprep.subr.bf16.mxu0 0
      %318 = vmatpush1.bf16.msra.mxu0 %v273
      %319 = vmatprep.subr.bf16.mxu0 0
      %320 = vmatpush1.bf16.msra.mxu0 %v274
      %321 = vmatprep.subr.bf16.mxu0 0
      %322 = vmatpush1.bf16.msra.mxu0 %v275
      %323 = vmatprep.subr.bf16.mxu0 0
      %324 = vmatpush1.bf16.msra.mxu0 %v276
      %325 = vmatprep.subr.bf16.mxu0 0
      %326 = vmatpush1.bf16.msra.mxu0 %v297
      %327 = vmatprep.subr.bf16.mxu0 0
      %328 = vmatpush1.bf16.msra.mxu0 0
      %329 = vmatprep.subr.bf16.mxu0 0
      %330 = vmatpush1.bf16.msra.mxu0 0
      %331 = vmatprep.mubr.bf16.mxu0 %v293
      %332 = vmatmul.mubr.bf16.gmra.mrb[0].mxu0 %v207
      %v333 = vpop.f32.mrb[0].mxu0
      %v334 = vadd.f32 %v202, %v333
      %v335 = vpop.f32.mrb[0].mxu0
      %v336 = vpop.f32.mrb[0].mxu0
      %v337 = vpop.f32.mrb[0].mxu0
      %338 = vdwg.mxu0
      %vm339 = vcmask 523264
      %340 = vst.msk [vmem:[%s168] sm:$0xff] %vm339, %v334
      %p341 = scmp.lt.s32.totalorder %s14, 1
      %s342 = scalar_select %p341, %s14, 1
      %s343 = smul.addr %s342, 8
      %s344 = scalar_lea.vmem %s3, %s343
      // Predicated region
      $region33: #{attn_fpn_forward.16} parent=31 // pred_check
        %p345 = pneg %p100
      $region34: #{attn_fpn_forward.16} parent=31 // pred_check_branch
        %347 = sbr.rel (%p345) target = $region36
      $region35: #{attn_fpn_forward.16} parent=31 // pred_region
        _
      $region36: #{attn_fpn_forward.16} parent=31 // pred_fallthru
        _
    $region32: #{attn_fpn_forward.16} parent=5 // pred_fallthru
      _
    %p348 = scmp.le.s32.totalorder 2, %s9
    // Predicated region
    $region37: #{attn_fpn_forward.16} parent=5 // pred_check
      %p349 = pneg %p348
    $region38: #{attn_fpn_forward.16} parent=5 // pred_check_branch
      %351 = sbr.rel (%p349) target = $region40
    $region39: #{attn_fpn_forward.16} parent=5 // pred_region
      %s352 = ssub.s32 %s9, 2
      // Predicated region
      $region41: #{attn_fpn_forward.16} parent=39 // pred_check
        %p353 = pneg %p106
      $region42: #{attn_fpn_forward.16} parent=39 // pred_check_branch
        %355 = sbr.rel (%p353) target = $region44
      $region43: #{attn_fpn_forward.16} parent=39 // pred_region
        %p356 = scmp.lt.s32.totalorder %s15, 1
        %s357 = scalar_select %p356, %s15, 1
        %s358 = smul.addr %s357, 8
        %s359 = scalar_lea.vmem %s3, %s358
      $region44: #{attn_fpn_forward.16} parent=39 // pred_fallthru
        _
    $region40: #{attn_fpn_forward.16} parent=5 // pred_fallthru
      _
  $region6: #{attn_fpn_forward.16} parent=0 // loop_footer
    %s13 = sadd.s32 1, %s9
  $region7: #{attn_fpn_forward.16} parent=0 // loop_footer_branch
    %8 = sbr.rel target = $region3
  $region8: #{attn_fpn_forward.16} parent=0 // loop_exit
    _

</llo_original>
